<compile_context>
chip_gen: v5e
topology: v5e:2x2
jax: 0.10.0
libtpu: 0.0.40
codegen_flags: <defaults>
</compile_context>

<pallas_src>
import jax
import jax.numpy as jnp
import numpy as np
from jax.experimental import pallas as pl
from jax.experimental.pallas import tpu as pltpu

EPS = 1e-5


# --------------------------------- fused kernel --------------------------------- #

def _local_up_fused_kernel(x_ref, o_ref, w1_ref, b1_ref, w2_ref, b2_ref,
                           s2_ref, t2_ref, dw_ref, y_ref):
    # x_ref : (1, H, W, Cin)   high-res features (c1), NHWC
    # o_ref : (1, Ho, Wo, Ch)  low-res features (out), NHWC, H = 2*Ho, W = 2*Wo
    # w1_ref: (9*Cin, Kd)      conv1 weights with BN1 scale folded in
    # b1_ref: (1, Kd)          folded BN1 bias
    # w2_ref: (9*Kd, 9)        conv2 weights ; b2_ref: (1, 9) conv2 bias
    # s2_ref, t2_ref: (1, Ch)  folded BN2 scale / shift
    # dw_ref: (9,) in SMEM     dconv_weight
    # y_ref : (1, H, W, Ch)
    _, H, W, Ch = y_ref.shape
    Kd = w1_ref.shape[1]
    _, Ho, Wo, _ = o_ref.shape

    def pad_hw1(a):
        # zero-pad by 1 on the two spatial dims (leading H dim, sublane W dim)
        h_, w_, c_ = a.shape
        zc = jnp.zeros((h_, 1, c_), a.dtype)
        a = jnp.concatenate([zc, a, zc], axis=1)
        zr = jnp.zeros((1, w_ + 2, c_), a.dtype)
        return jnp.concatenate([zr, a, zr], axis=0)

    def im2col3x3(apad):
        # (H+2, W+2, C) -> (H*W, 9*C); column index = k*C + c with k = ky*3 + kx
        c_ = apad.shape[2]
        slabs = [apad[ky:ky + H, kx:kx + W, :].reshape(H * W, c_)
                 for ky in range(3) for kx in range(3)]
        return jnp.concatenate(slabs, axis=1)

    # ---- refine: conv3x3 (BN1 folded) + ReLU, then conv3x3 + bias -> sigmoid ----
    p1 = im2col3x3(pad_hw1(x_ref[0]))                              # (H*W, 9*Cin)
    hid = jnp.dot(p1, w1_ref[...], preferred_element_type=jnp.float32) + b1_ref[0]
    hid = jnp.maximum(hid, 0.0).reshape(H, W, Kd)

    p2 = im2col3x3(pad_hw1(hid))                                   # (H*W, 9*Kd)
    att = jax.nn.sigmoid(
        jnp.dot(p2, w2_ref[...], preferred_element_type=jnp.float32) + b2_ref[0]
    ).reshape(H, W, 9)

    # ---- F.fold(out, (H, W), 1, stride=2): zero-insertion 2x upsample, in VMEM ----
    o_lr = o_ref[0]                                                # (Ho, Wo, Ch)
    oc = o_lr.reshape(Ho, Wo, 1, Ch)
    up = jnp.concatenate([oc, jnp.zeros_like(oc)], axis=2).reshape(Ho, W, Ch)
    ur = up.reshape(Ho, 1, W, Ch)
    up = jnp.concatenate([ur, jnp.zeros_like(ur)], axis=1).reshape(H, W, Ch)
    up = pad_hw1(up)                                               # (H+2, W+2, Ch)

    # ---- aggregation: y = sum_k dconv_w[k] * att[..., k] * unfold3x3(up)[..., k] ----
    acc = jnp.zeros((H, W, Ch), jnp.float32)
    for k in range(9):
        ky, kx = divmod(k, 3)
        acc = acc + (dw_ref[k] * att[:, :, k:k + 1]) * up[ky:ky + H, kx:kx + W, :]

    # ---- folded BN2 + ReLU ----
    y = acc * s2_ref[0] + t2_ref[0]
    y_ref[0] = jnp.maximum(y, 0.0)


# ------------------------------ forward (NCHW API) ------------------------------- #

def local_up_forward(c1, out, params):
    """c1: (N, Cin, H, W) ; out: (N, Ch, Ho, Wo)  with H == 2*Ho, W == 2*Wo (NCHW)."""
    n, cin, h, w = c1.shape
    _, ch, ho, wo = out.shape
    assert h == 2 * ho and w == 2 * wo, "F.fold(kernel=1, stride=2) requires H=2*Ho, W=2*Wo"
    kd = params["w1"].shape[2]

    x = jnp.transpose(c1, (0, 2, 3, 1)).astype(jnp.float32)    # (N, H, W, Cin)
    o = jnp.transpose(out, (0, 2, 3, 1)).astype(jnp.float32)   # (N, Ho, Wo, Ch)

    # Fold BN1 into conv1 (conv1 has no bias); fold BN2 into a post-agg scale/shift.
    s1 = params["bn1_g"] * jax.lax.rsqrt(params["bn1_v"] + EPS)             # (Kd,)
    w1f = (params["w1"] * s1).reshape(9 * cin, kd)                          # (9*Cin, Kd)
    b1f = (params["bn1_b"] - params["bn1_m"] * s1).reshape(1, kd)
    w2f = params["w2"].reshape(9 * kd, 9)
    b2f = params["b2"].reshape(1, 9)
    s2 = params["bn2_g"] * jax.lax.rsqrt(params["bn2_v"] + EPS)             # (Ch,)
    t2 = (params["bn2_b"] - params["bn2_m"] * s2).reshape(1, ch)
    s2 = s2.reshape(1, ch)
    dw = params["dconv_w"].astype(jnp.float32)                              # (9,)

    y = pl.pallas_call(
        _local_up_fused_kernel,
        out_shape=jax.ShapeDtypeStruct((n, h, w, ch), jnp.float32),
        grid=(n,),
        in_specs=[
            pl.BlockSpec((1, h, w, cin), lambda i: (i, 0, 0, 0)),
            pl.BlockSpec((1, ho, wo, ch), lambda i: (i, 0, 0, 0)),
            pl.BlockSpec((9 * cin, kd), lambda i: (0, 0)),
            pl.BlockSpec((1, kd), lambda i: (0, 0)),
            pl.BlockSpec((9 * kd, 9), lambda i: (0, 0)),
            pl.BlockSpec((1, 9), lambda i: (0, 0)),
            pl.BlockSpec((1, ch), lambda i: (0, 0)),
            pl.BlockSpec((1, ch), lambda i: (0, 0)),
            pl.BlockSpec(memory_space=pltpu.MemorySpace.SMEM),   # dconv_weight (9,)
        ],
        out_specs=pl.BlockSpec((1, h, w, ch), lambda i: (i, 0, 0, 0)),
        compiler_params=pltpu.CompilerParams(dimension_semantics=("parallel",)),
    )(x, o, w1f, b1f, w2f, b2f, s2, t2, dw)
    # TODO(synk): for large H/W/C add a row-tiled spatial grid axis (manual halo DMA via
    # memory_space=pl.ANY) so the im2col working set fits VMEM on v7x/v5e and the second
    # parallel axis keeps both v7x TensorCores busy when N == 1.
    return jnp.transpose(y, (0, 3, 1, 2))


# ------------------------------ pure-JAX reference ------------------------------- #

def _reference_forward(c1, out, params):
    n, cin, h, w = c1.shape
    _, ch, ho, wo = out.shape
    x = jnp.transpose(c1, (0, 2, 3, 1)).astype(jnp.float32)
    o = jnp.transpose(out, (0, 2, 3, 1)).astype(jnp.float32)

    def conv(inp, wgt):
        kh = wgt.reshape(3, 3, wgt.shape[1], wgt.shape[2])  # HWIO, k = ky*3+kx
        return jax.lax.conv_general_dilated(
            inp, kh, (1, 1), "SAME",
            dimension_numbers=("NHWC", "HWIO", "NHWC"),
            precision=jax.lax.Precision.HIGHEST)

    def bn(xx, g, b, m, v):
        return (xx - m) / jnp.sqrt(v + EPS) * g + b

    hidden = jnp.maximum(bn(conv(x, params["w1"]), params["bn1_g"], params["bn1_b"],
                            params["bn1_m"], params["bn1_v"]), 0.0)
    att = jax.nn.sigmoid(conv(hidden, params["w2"]) + params["b2"])
    up = jnp.zeros((n, h, w, ch), jnp.float32).at[:, ::2, ::2, :].set(o)
    up_p = jnp.pad(up, ((0, 0), (1, 1), (1, 1), (0, 0)))
    acc = jnp.zeros((n, h, w, ch), jnp.float32)
    for k in range(9):
        ky, kx = k // 3, k % 3
        acc = acc + params["dconv_w"][k] * att[..., k:k + 1] * up_p[:, ky:ky + h, kx:kx + w, :]
    y = jnp.maximum(bn(acc, params["bn2_g"], params["bn2_b"],
                       params["bn2_m"], params["bn2_v"]), 0.0)
    return jnp.transpose(y, (0, 3, 1, 2))


# ------------------------------------- main -------------------------------------- #

if __name__ == "__main__":
    key = jax.random.PRNGKey(0)
    # small shapes consistent with the module: in_channels divisible by 8, H = 2*Ho
    n, cin, h, w = 2, 32, 16, 16          # c1: high-res features
    ch, ho, wo = 16, 8, 8                 # out: low-res features (out_channels=16)
    key_dim = cin // 8

    ks = jax.random.split(key, 16)
    c1 = jax.random.normal(ks[0], (n, cin, h, w), jnp.float32)
    out_lr = jax.random.normal(ks[1], (n, ch, ho, wo), jnp.float32)

    # deterministic parameter init; BN in inference mode with non-trivial statistics
    params = dict(
        w1=jax.random.normal(ks[2], (9, cin, key_dim), jnp.float32)
           * (2.0 / (9 * key_dim)) ** 0.5,
        bn1_g=1.0 + 0.1 * jax.random.normal(ks[5], (key_dim,), jnp.float32),
        bn1_b=0.1 * jax.random.normal(ks[6], (key_dim,), jnp.float32),
        bn1_m=0.1 * jax.random.normal(ks[7], (key_dim,), jnp.float32),
        bn1_v=jax.random.uniform(ks[8], (key_dim,), jnp.float32, minval=0.5, maxval=1.5),
        w2=jax.random.normal(ks[3], (9, key_dim, 9), jnp.float32)
           * (2.0 / (9 * 9)) ** 0.5,
        b2=0.1 * jax.random.normal(ks[9], (9,), jnp.float32),
        dconv_w=jax.random.normal(ks[4], (9,), jnp.float32) * (2.0 / 9.0) ** 0.5,
        bn2_g=1.0 + 0.1 * jax.random.normal(ks[10], (ch,), jnp.float32),
        bn2_b=0.1 * jax.random.normal(ks[11], (ch,), jnp.float32),
        bn2_m=0.1 * jax.random.normal(ks[12], (ch,), jnp.float32),
        bn2_v=jax.random.uniform(ks[13], (ch,), jnp.float32, minval=0.5, maxval=1.5),
    )

    y = jax.jit(local_up_forward)(c1, out_lr, params)
    y = jax.block_until_ready(y)
    assert y.shape == (n, ch, h, w)

    y_ref = jax.block_until_ready(_reference_forward(c1, out_lr, params))
    np.testing.assert_allclose(np.asarray(y), np.asarray(y_ref), rtol=1e-2, atol=1e-2)

    print("KERNEL_OK")
</pallas_src>

<mosaic_0001>
module attributes {stable_mosaic.version = 11 : i64} {
  func.func @_local_up_fused_kernel(%arg0: i32, %arg1: memref<1x16x16x32xf32, #tpu.memory_space<vmem>>, %arg2: memref<1x8x8x16xf32, #tpu.memory_space<vmem>>, %arg3: memref<288x4xf32, #tpu.memory_space<vmem>>, %arg4: memref<1x4xf32, #tpu.memory_space<vmem>>, %arg5: memref<36x9xf32, #tpu.memory_space<vmem>>, %arg6: memref<1x9xf32, #tpu.memory_space<vmem>>, %arg7: memref<1x16xf32, #tpu.memory_space<vmem>>, %arg8: memref<1x16xf32, #tpu.memory_space<vmem>>, %arg9: memref<9xf32, #tpu.memory_space<smem>>, %arg10: memref<1x16x16x16xf32, #tpu.memory_space<vmem>>) attributes {dimension_semantics = [#tpu.dimension_semantics<parallel>], iteration_bounds = array<i64: 2>, scalar_prefetch = 0 : i64, scratch_operands = 0 : i64, tpu.core_type = #tpu.core_type<tc>, window_params = [{transform_indices = @transform_0, window_bounds = array<i64: 1, 16, 16, 32>}, {transform_indices = @transform_1, window_bounds = array<i64: 1, 8, 8, 16>}, {pipeline_mode = #tpu.pipeline_mode<synchronous>, transform_indices = @transform_2, window_bounds = array<i64: 288, 4>}, {pipeline_mode = #tpu.pipeline_mode<synchronous>, transform_indices = @transform_3, window_bounds = array<i64: 1, 4>}, {pipeline_mode = #tpu.pipeline_mode<synchronous>, transform_indices = @transform_4, window_bounds = array<i64: 36, 9>}, {pipeline_mode = #tpu.pipeline_mode<synchronous>, transform_indices = @transform_5, window_bounds = array<i64: 1, 9>}, {pipeline_mode = #tpu.pipeline_mode<synchronous>, transform_indices = @transform_6, window_bounds = array<i64: 1, 16>}, {pipeline_mode = #tpu.pipeline_mode<synchronous>, transform_indices = @transform_7, window_bounds = array<i64: 1, 16>}, {transform_indices = @transform_8, window_bounds = array<i64: 9>}, {transform_indices = @transform_9, window_bounds = array<i64: 1, 16, 16, 16>}]} {
    %c0 = arith.constant 0 : index
    %c0_0 = arith.constant 0 : index
    %c0_1 = arith.constant 0 : index
    %c0_2 = arith.constant 0 : index
    %0 = vector.load %arg1[%c0, %c0_0, %c0_1, %c0_2] : memref<1x16x16x32xf32, #tpu.memory_space<vmem>>, vector<1x16x16x32xf32>
    %1 = vector.shape_cast %0 : vector<1x16x16x32xf32> to vector<16x16x32xf32>
    %cst = arith.constant 0.000000e+00 : f32
    %2 = vector.broadcast %cst : f32 to vector<16x1x32xf32>
    %3 = tpu.concatenate %2, %1, %2 in 1 : vector<16x1x32xf32>, vector<16x16x32xf32>, vector<16x1x32xf32> -> vector<16x18x32xf32>
    %cst_3 = arith.constant 0.000000e+00 : f32
    %4 = vector.broadcast %cst_3 : f32 to vector<1x18x32xf32>
    %5 = tpu.concatenate %4, %3, %4 in 0 : vector<1x18x32xf32>, vector<16x18x32xf32>, vector<1x18x32xf32> -> vector<18x18x32xf32>
    %6 = vector.extract_strided_slice %5 {offsets = [0, 0, 0], sizes = [16, 16, 32], strides = [1, 1, 1]} : vector<18x18x32xf32> to vector<16x16x32xf32>
    %7 = vector.shape_cast %6 : vector<16x16x32xf32> to vector<256x32xf32>
    %8 = vector.extract_strided_slice %5 {offsets = [0, 1, 0], sizes = [16, 16, 32], strides = [1, 1, 1]} : vector<18x18x32xf32> to vector<16x16x32xf32>
    %9 = vector.shape_cast %8 : vector<16x16x32xf32> to vector<256x32xf32>
    %10 = vector.extract_strided_slice %5 {offsets = [0, 2, 0], sizes = [16, 16, 32], strides = [1, 1, 1]} : vector<18x18x32xf32> to vector<16x16x32xf32>
    %11 = vector.shape_cast %10 : vector<16x16x32xf32> to vector<256x32xf32>
    %12 = vector.extract_strided_slice %5 {offsets = [1, 0, 0], sizes = [16, 16, 32], strides = [1, 1, 1]} : vector<18x18x32xf32> to vector<16x16x32xf32>
    %13 = vector.shape_cast %12 : vector<16x16x32xf32> to vector<256x32xf32>
    %14 = vector.extract_strided_slice %5 {offsets = [1, 1, 0], sizes = [16, 16, 32], strides = [1, 1, 1]} : vector<18x18x32xf32> to vector<16x16x32xf32>
    %15 = vector.shape_cast %14 : vector<16x16x32xf32> to vector<256x32xf32>
    %16 = vector.extract_strided_slice %5 {offsets = [1, 2, 0], sizes = [16, 16, 32], strides = [1, 1, 1]} : vector<18x18x32xf32> to vector<16x16x32xf32>
    %17 = vector.shape_cast %16 : vector<16x16x32xf32> to vector<256x32xf32>
    %18 = vector.extract_strided_slice %5 {offsets = [2, 0, 0], sizes = [16, 16, 32], strides = [1, 1, 1]} : vector<18x18x32xf32> to vector<16x16x32xf32>
    %19 = vector.shape_cast %18 : vector<16x16x32xf32> to vector<256x32xf32>
    %20 = vector.extract_strided_slice %5 {offsets = [2, 1, 0], sizes = [16, 16, 32], strides = [1, 1, 1]} : vector<18x18x32xf32> to vector<16x16x32xf32>
    %21 = vector.shape_cast %20 : vector<16x16x32xf32> to vector<256x32xf32>
    %22 = vector.extract_strided_slice %5 {offsets = [2, 2, 0], sizes = [16, 16, 32], strides = [1, 1, 1]} : vector<18x18x32xf32> to vector<16x16x32xf32>
    %23 = vector.shape_cast %22 : vector<16x16x32xf32> to vector<256x32xf32>
    %24 = tpu.concatenate %7, %9, %11, %13, %15, %17, %19, %21, %23 in 1 : vector<256x32xf32>, vector<256x32xf32>, vector<256x32xf32>, vector<256x32xf32>, vector<256x32xf32>, vector<256x32xf32>, vector<256x32xf32>, vector<256x32xf32>, vector<256x32xf32> -> vector<256x288xf32>
    %c0_4 = arith.constant 0 : index
    %c0_5 = arith.constant 0 : index
    %25 = vector.load %arg3[%c0_4, %c0_5] : memref<288x4xf32, #tpu.memory_space<vmem>>, vector<288x4xf32>
    %cst_6 = arith.constant dense<0.000000e+00> : vector<256x4xf32>
    %26 = tpu.matmul %24, %25, %cst_6 {dimension_numbers = #tpu.dot_dimension_numbers<[1], [0], [0], [1], [0, 0, 1, 1], [], []>} : vector<256x288xf32>, vector<288x4xf32>, vector<256x4xf32> -> vector<256x4xf32>
    %c0_7 = arith.constant 0 : index
    %c0_8 = arith.constant 0 : index
    %27 = vector.load %arg4[%c0_7, %c0_8] : memref<1x4xf32, #tpu.memory_space<vmem>>, vector<1x4xf32>
    %28 = vector.shape_cast %27 : vector<1x4xf32> to vector<4xf32>
    %29 = vector.shape_cast %28 : vector<4xf32> to vector<1x4xf32>
    %30 = vector.broadcast %29 : vector<1x4xf32> to vector<256x4xf32>
    %31 = arith.addf %26, %30 : vector<256x4xf32>
    %cst_9 = arith.constant 0.000000e+00 : f32
    %32 = vector.broadcast %cst_9 : f32 to vector<256x4xf32>
    %33 = arith.maximumf %31, %32 : vector<256x4xf32>
    %34 = vector.shape_cast %33 : vector<256x4xf32> to vector<16x16x4xf32>
    %cst_10 = arith.constant 0.000000e+00 : f32
    %35 = vector.broadcast %cst_10 : f32 to vector<16x1x4xf32>
    %36 = tpu.concatenate %35, %34, %35 in 1 : vector<16x1x4xf32>, vector<16x16x4xf32>, vector<16x1x4xf32> -> vector<16x18x4xf32>
    %cst_11 = arith.constant 0.000000e+00 : f32
    %37 = vector.broadcast %cst_11 : f32 to vector<1x18x4xf32>
    %38 = tpu.concatenate %37, %36, %37 in 0 : vector<1x18x4xf32>, vector<16x18x4xf32>, vector<1x18x4xf32> -> vector<18x18x4xf32>
    %39 = vector.extract_strided_slice %38 {offsets = [0, 0, 0], sizes = [16, 16, 4], strides = [1, 1, 1]} : vector<18x18x4xf32> to vector<16x16x4xf32>
    %40 = vector.shape_cast %39 : vector<16x16x4xf32> to vector<256x4xf32>
    %41 = vector.extract_strided_slice %38 {offsets = [0, 1, 0], sizes = [16, 16, 4], strides = [1, 1, 1]} : vector<18x18x4xf32> to vector<16x16x4xf32>
    %42 = vector.shape_cast %41 : vector<16x16x4xf32> to vector<256x4xf32>
    %43 = vector.extract_strided_slice %38 {offsets = [0, 2, 0], sizes = [16, 16, 4], strides = [1, 1, 1]} : vector<18x18x4xf32> to vector<16x16x4xf32>
    %44 = vector.shape_cast %43 : vector<16x16x4xf32> to vector<256x4xf32>
    %45 = vector.extract_strided_slice %38 {offsets = [1, 0, 0], sizes = [16, 16, 4], strides = [1, 1, 1]} : vector<18x18x4xf32> to vector<16x16x4xf32>
    %46 = vector.shape_cast %45 : vector<16x16x4xf32> to vector<256x4xf32>
    %47 = vector.extract_strided_slice %38 {offsets = [1, 1, 0], sizes = [16, 16, 4], strides = [1, 1, 1]} : vector<18x18x4xf32> to vector<16x16x4xf32>
    %48 = vector.shape_cast %47 : vector<16x16x4xf32> to vector<256x4xf32>
    %49 = vector.extract_strided_slice %38 {offsets = [1, 2, 0], sizes = [16, 16, 4], strides = [1, 1, 1]} : vector<18x18x4xf32> to vector<16x16x4xf32>
    %50 = vector.shape_cast %49 : vector<16x16x4xf32> to vector<256x4xf32>
    %51 = vector.extract_strided_slice %38 {offsets = [2, 0, 0], sizes = [16, 16, 4], strides = [1, 1, 1]} : vector<18x18x4xf32> to vector<16x16x4xf32>
    %52 = vector.shape_cast %51 : vector<16x16x4xf32> to vector<256x4xf32>
    %53 = vector.extract_strided_slice %38 {offsets = [2, 1, 0], sizes = [16, 16, 4], strides = [1, 1, 1]} : vector<18x18x4xf32> to vector<16x16x4xf32>
    %54 = vector.shape_cast %53 : vector<16x16x4xf32> to vector<256x4xf32>
    %55 = vector.extract_strided_slice %38 {offsets = [2, 2, 0], sizes = [16, 16, 4], strides = [1, 1, 1]} : vector<18x18x4xf32> to vector<16x16x4xf32>
    %56 = vector.shape_cast %55 : vector<16x16x4xf32> to vector<256x4xf32>
    %57 = tpu.concatenate %40, %42, %44, %46, %48, %50, %52, %54, %56 in 1 : vector<256x4xf32>, vector<256x4xf32>, vector<256x4xf32>, vector<256x4xf32>, vector<256x4xf32>, vector<256x4xf32>, vector<256x4xf32>, vector<256x4xf32>, vector<256x4xf32> -> vector<256x36xf32>
    %c0_12 = arith.constant 0 : index
    %c0_13 = arith.constant 0 : index
    %58 = vector.load %arg5[%c0_12, %c0_13] : memref<36x9xf32, #tpu.memory_space<vmem>>, vector<36x9xf32>
    %cst_14 = arith.constant dense<0.000000e+00> : vector<256x9xf32>
    %59 = tpu.matmul %57, %58, %cst_14 {dimension_numbers = #tpu.dot_dimension_numbers<[1], [0], [0], [1], [0, 0, 1, 1], [], []>} : vector<256x36xf32>, vector<36x9xf32>, vector<256x9xf32> -> vector<256x9xf32>
    %c0_15 = arith.constant 0 : index
    %c0_16 = arith.constant 0 : index
    %60 = vector.load %arg6[%c0_15, %c0_16] : memref<1x9xf32, #tpu.memory_space<vmem>>, vector<1x9xf32>
    %61 = vector.shape_cast %60 : vector<1x9xf32> to vector<9xf32>
    %62 = vector.shape_cast %61 : vector<9xf32> to vector<1x9xf32>
    %63 = vector.broadcast %62 : vector<1x9xf32> to vector<256x9xf32>
    %64 = arith.addf %59, %63 : vector<256x9xf32>
    %65 = arith.negf %64 : vector<256x9xf32>
    %66 = math.exp %65 : vector<256x9xf32>
    %cst_17 = arith.constant 1.000000e+00 : f32
    %67 = vector.broadcast %cst_17 : f32 to vector<256x9xf32>
    %68 = arith.addf %67, %66 : vector<256x9xf32>
    %69 = arith.divf %67, %68 : vector<256x9xf32>
    %70 = vector.shape_cast %69 : vector<256x9xf32> to vector<16x16x9xf32>
    %c0_18 = arith.constant 0 : index
    %c0_19 = arith.constant 0 : index
    %c0_20 = arith.constant 0 : index
    %c0_21 = arith.constant 0 : index
    %71 = vector.load %arg2[%c0_18, %c0_19, %c0_20, %c0_21] : memref<1x8x8x16xf32, #tpu.memory_space<vmem>>, vector<1x8x8x16xf32>
    %72 = vector.shape_cast %71 : vector<1x8x8x16xf32> to vector<8x8x16xf32>
    %73 = vector.shape_cast %72 : vector<8x8x16xf32> to vector<8x8x1x16xf32>
    %cst_22 = arith.constant 0.000000e+00 : f32
    %74 = vector.broadcast %cst_22 : f32 to vector<8x8x1x16xf32>
    %75 = tpu.concatenate %73, %74 in 2 : vector<8x8x1x16xf32>, vector<8x8x1x16xf32> -> vector<8x8x2x16xf32>
    %76 = vector.shape_cast %75 : vector<8x8x2x16xf32> to vector<8x16x16xf32>
    %77 = vector.shape_cast %76 : vector<8x16x16xf32> to vector<8x1x16x16xf32>
    %cst_23 = arith.constant 0.000000e+00 : f32
    %78 = vector.broadcast %cst_23 : f32 to vector<8x1x16x16xf32>
    %79 = tpu.concatenate %77, %78 in 1 : vector<8x1x16x16xf32>, vector<8x1x16x16xf32> -> vector<8x2x16x16xf32>
    %80 = vector.shape_cast %79 : vector<8x2x16x16xf32> to vector<16x16x16xf32>
    %cst_24 = arith.constant 0.000000e+00 : f32
    %81 = vector.broadcast %cst_24 : f32 to vector<16x1x16xf32>
    %82 = tpu.concatenate %81, %80, %81 in 1 : vector<16x1x16xf32>, vector<16x16x16xf32>, vector<16x1x16xf32> -> vector<16x18x16xf32>
    %cst_25 = arith.constant 0.000000e+00 : f32
    %83 = vector.broadcast %cst_25 : f32 to vector<1x18x16xf32>
    %84 = tpu.concatenate %83, %82, %83 in 0 : vector<1x18x16xf32>, vector<16x18x16xf32>, vector<1x18x16xf32> -> vector<18x18x16xf32>
    %cst_26 = arith.constant 0.000000e+00 : f32
    %85 = vector.broadcast %cst_26 : f32 to vector<16x16x16xf32>
    %c0_27 = arith.constant 0 : index
    %86 = memref.load %arg9[%c0_27] : memref<9xf32, #tpu.memory_space<smem>>
    %87 = vector.extract_strided_slice %70 {offsets = [0, 0, 0], sizes = [16, 16, 1], strides = [1, 1, 1]} : vector<16x16x9xf32> to vector<16x16x1xf32>
    %88 = vector.broadcast %86 : f32 to vector<16x16x1xf32>
    %89 = arith.mulf %88, %87 : vector<16x16x1xf32>
    %90 = vector.extract_strided_slice %84 {offsets = [0, 0, 0], sizes = [16, 16, 16], strides = [1, 1, 1]} : vector<18x18x16xf32> to vector<16x16x16xf32>
    %91 = vector.broadcast %89 : vector<16x16x1xf32> to vector<16x16x16xf32>
    %92 = arith.mulf %91, %90 : vector<16x16x16xf32>
    %93 = arith.addf %85, %92 : vector<16x16x16xf32>
    %c1 = arith.constant 1 : index
    %94 = memref.load %arg9[%c1] : memref<9xf32, #tpu.memory_space<smem>>
    %95 = vector.extract_strided_slice %70 {offsets = [0, 0, 1], sizes = [16, 16, 1], strides = [1, 1, 1]} : vector<16x16x9xf32> to vector<16x16x1xf32>
    %96 = vector.broadcast %94 : f32 to vector<16x16x1xf32>
    %97 = arith.mulf %96, %95 : vector<16x16x1xf32>
    %98 = vector.extract_strided_slice %84 {offsets = [0, 1, 0], sizes = [16, 16, 16], strides = [1, 1, 1]} : vector<18x18x16xf32> to vector<16x16x16xf32>
    %99 = vector.broadcast %97 : vector<16x16x1xf32> to vector<16x16x16xf32>
    %100 = arith.mulf %99, %98 : vector<16x16x16xf32>
    %101 = arith.addf %93, %100 : vector<16x16x16xf32>
    %c2 = arith.constant 2 : index
    %102 = memref.load %arg9[%c2] : memref<9xf32, #tpu.memory_space<smem>>
    %103 = vector.extract_strided_slice %70 {offsets = [0, 0, 2], sizes = [16, 16, 1], strides = [1, 1, 1]} : vector<16x16x9xf32> to vector<16x16x1xf32>
    %104 = vector.broadcast %102 : f32 to vector<16x16x1xf32>
    %105 = arith.mulf %104, %103 : vector<16x16x1xf32>
    %106 = vector.extract_strided_slice %84 {offsets = [0, 2, 0], sizes = [16, 16, 16], strides = [1, 1, 1]} : vector<18x18x16xf32> to vector<16x16x16xf32>
    %107 = vector.broadcast %105 : vector<16x16x1xf32> to vector<16x16x16xf32>
    %108 = arith.mulf %107, %106 : vector<16x16x16xf32>
    %109 = arith.addf %101, %108 : vector<16x16x16xf32>
    %c3 = arith.constant 3 : index
    %110 = memref.load %arg9[%c3] : memref<9xf32, #tpu.memory_space<smem>>
    %111 = vector.extract_strided_slice %70 {offsets = [0, 0, 3], sizes = [16, 16, 1], strides = [1, 1, 1]} : vector<16x16x9xf32> to vector<16x16x1xf32>
    %112 = vector.broadcast %110 : f32 to vector<16x16x1xf32>
    %113 = arith.mulf %112, %111 : vector<16x16x1xf32>
    %114 = vector.extract_strided_slice %84 {offsets = [1, 0, 0], sizes = [16, 16, 16], strides = [1, 1, 1]} : vector<18x18x16xf32> to vector<16x16x16xf32>
    %115 = vector.broadcast %113 : vector<16x16x1xf32> to vector<16x16x16xf32>
    %116 = arith.mulf %115, %114 : vector<16x16x16xf32>
    %117 = arith.addf %109, %116 : vector<16x16x16xf32>
    %c4 = arith.constant 4 : index
    %118 = memref.load %arg9[%c4] : memref<9xf32, #tpu.memory_space<smem>>
    %119 = vector.extract_strided_slice %70 {offsets = [0, 0, 4], sizes = [16, 16, 1], strides = [1, 1, 1]} : vector<16x16x9xf32> to vector<16x16x1xf32>
    %120 = vector.broadcast %118 : f32 to vector<16x16x1xf32>
    %121 = arith.mulf %120, %119 : vector<16x16x1xf32>
    %122 = vector.extract_strided_slice %84 {offsets = [1, 1, 0], sizes = [16, 16, 16], strides = [1, 1, 1]} : vector<18x18x16xf32> to vector<16x16x16xf32>
    %123 = vector.broadcast %121 : vector<16x16x1xf32> to vector<16x16x16xf32>
    %124 = arith.mulf %123, %122 : vector<16x16x16xf32>
    %125 = arith.addf %117, %124 : vector<16x16x16xf32>
    %c5 = arith.constant 5 : index
    %126 = memref.load %arg9[%c5] : memref<9xf32, #tpu.memory_space<smem>>
    %127 = vector.extract_strided_slice %70 {offsets = [0, 0, 5], sizes = [16, 16, 1], strides = [1, 1, 1]} : vector<16x16x9xf32> to vector<16x16x1xf32>
    %128 = vector.broadcast %126 : f32 to vector<16x16x1xf32>
    %129 = arith.mulf %128, %127 : vector<16x16x1xf32>
    %130 = vector.extract_strided_slice %84 {offsets = [1, 2, 0], sizes = [16, 16, 16], strides = [1, 1, 1]} : vector<18x18x16xf32> to vector<16x16x16xf32>
    %131 = vector.broadcast %129 : vector<16x16x1xf32> to vector<16x16x16xf32>
    %132 = arith.mulf %131, %130 : vector<16x16x16xf32>
    %133 = arith.addf %125, %132 : vector<16x16x16xf32>
    %c6 = arith.constant 6 : index
    %134 = memref.load %arg9[%c6] : memref<9xf32, #tpu.memory_space<smem>>
    %135 = vector.extract_strided_slice %70 {offsets = [0, 0, 6], sizes = [16, 16, 1], strides = [1, 1, 1]} : vector<16x16x9xf32> to vector<16x16x1xf32>
    %136 = vector.broadcast %134 : f32 to vector<16x16x1xf32>
    %137 = arith.mulf %136, %135 : vector<16x16x1xf32>
    %138 = vector.extract_strided_slice %84 {offsets = [2, 0, 0], sizes = [16, 16, 16], strides = [1, 1, 1]} : vector<18x18x16xf32> to vector<16x16x16xf32>
    %139 = vector.broadcast %137 : vector<16x16x1xf32> to vector<16x16x16xf32>
    %140 = arith.mulf %139, %138 : vector<16x16x16xf32>
    %141 = arith.addf %133, %140 : vector<16x16x16xf32>
    %c7 = arith.constant 7 : index
    %142 = memref.load %arg9[%c7] : memref<9xf32, #tpu.memory_space<smem>>
    %143 = vector.extract_strided_slice %70 {offsets = [0, 0, 7], sizes = [16, 16, 1], strides = [1, 1, 1]} : vector<16x16x9xf32> to vector<16x16x1xf32>
    %144 = vector.broadcast %142 : f32 to vector<16x16x1xf32>
    %145 = arith.mulf %144, %143 : vector<16x16x1xf32>
    %146 = vector.extract_strided_slice %84 {offsets = [2, 1, 0], sizes = [16, 16, 16], strides = [1, 1, 1]} : vector<18x18x16xf32> to vector<16x16x16xf32>
    %147 = vector.broadcast %145 : vector<16x16x1xf32> to vector<16x16x16xf32>
    %148 = arith.mulf %147, %146 : vector<16x16x16xf32>
    %149 = arith.addf %141, %148 : vector<16x16x16xf32>
    %c8 = arith.constant 8 : index
    %150 = memref.load %arg9[%c8] : memref<9xf32, #tpu.memory_space<smem>>
    %151 = vector.extract_strided_slice %70 {offsets = [0, 0, 8], sizes = [16, 16, 1], strides = [1, 1, 1]} : vector<16x16x9xf32> to vector<16x16x1xf32>
    %152 = vector.broadcast %150 : f32 to vector<16x16x1xf32>
    %153 = arith.mulf %152, %151 : vector<16x16x1xf32>
    %154 = vector.extract_strided_slice %84 {offsets = [2, 2, 0], sizes = [16, 16, 16], strides = [1, 1, 1]} : vector<18x18x16xf32> to vector<16x16x16xf32>
    %155 = vector.broadcast %153 : vector<16x16x1xf32> to vector<16x16x16xf32>
    %156 = arith.mulf %155, %154 : vector<16x16x16xf32>
    %157 = arith.addf %149, %156 : vector<16x16x16xf32>
    %c0_28 = arith.constant 0 : index
    %c0_29 = arith.constant 0 : index
    %158 = vector.load %arg7[%c0_28, %c0_29] : memref<1x16xf32, #tpu.memory_space<vmem>>, vector<1x16xf32>
    %159 = vector.shape_cast %158 : vector<1x16xf32> to vector<16xf32>
    %160 = vector.shape_cast %159 : vector<16xf32> to vector<1x1x16xf32>
    %161 = vector.broadcast %160 : vector<1x1x16xf32> to vector<16x16x16xf32>
    %162 = arith.mulf %157, %161 : vector<16x16x16xf32>
    %c0_30 = arith.constant 0 : index
    %c0_31 = arith.constant 0 : index
    %163 = vector.load %arg8[%c0_30, %c0_31] : memref<1x16xf32, #tpu.memory_space<vmem>>, vector<1x16xf32>
    %164 = vector.shape_cast %163 : vector<1x16xf32> to vector<16xf32>
    %165 = vector.shape_cast %164 : vector<16xf32> to vector<1x1x16xf32>
    %166 = vector.broadcast %165 : vector<1x1x16xf32> to vector<16x16x16xf32>
    %167 = arith.addf %162, %166 : vector<16x16x16xf32>
    %cst_32 = arith.constant 0.000000e+00 : f32
    %168 = vector.broadcast %cst_32 : f32 to vector<16x16x16xf32>
    %169 = arith.maximumf %167, %168 : vector<16x16x16xf32>
    %c0_33 = arith.constant 0 : index
    %c0_34 = arith.constant 0 : index
    %c0_35 = arith.constant 0 : index
    %c0_36 = arith.constant 0 : index
    %170 = vector.load %arg10[%c0_33, %c0_34, %c0_35, %c0_36] : memref<1x16x16x16xf32, #tpu.memory_space<vmem>>, vector<1x16x16x16xf32>
    %171 = vector.shape_cast %170 : vector<1x16x16x16xf32> to vector<16x16x16xf32>
    %172 = vector.shape_cast %169 : vector<16x16x16xf32> to vector<1x16x16x16xf32>
    tpu.vector_store %arg10[%c0_33, %c0_34, %c0_35, %c0_36], %172 {strides = array<i32>} : memref<1x16x16x16xf32, #tpu.memory_space<vmem>>, vector<1x16x16x16xf32>,
    return
  }
  func.func @transform_0(%arg0: i32) -> (i32, i32, i32, i32) {
    %c0_i32 = arith.constant 0 : i32
    %c0_i32_0 = arith.constant 0 : i32
    %c0_i32_1 = arith.constant 0 : i32
    %c0_i32_2 = arith.constant 0 : i32
    return %arg0, %c0_i32, %c0_i32_0, %c0_i32_1 : i32, i32, i32, i32
  }
  func.func @transform_1(%arg0: i32) -> (i32, i32, i32, i32) {
    %c0_i32 = arith.constant 0 : i32
    %c0_i32_0 = arith.constant 0 : i32
    %c0_i32_1 = arith.constant 0 : i32
    %c0_i32_2 = arith.constant 0 : i32
    return %arg0, %c0_i32, %c0_i32_0, %c0_i32_1 : i32, i32, i32, i32
  }
  func.func @transform_2(%arg0: i32) -> (i32, i32) {
    %c0_i32 = arith.constant 0 : i32
    %c0_i32_0 = arith.constant 0 : i32
    %c0_i32_1 = arith.constant 0 : i32
    return %c0_i32, %c0_i32_0 : i32, i32
  }
  func.func @transform_3(%arg0: i32) -> (i32, i32) {
    %c0_i32 = arith.constant 0 : i32
    %c0_i32_0 = arith.constant 0 : i32
    %c0_i32_1 = arith.constant 0 : i32
    return %c0_i32, %c0_i32_0 : i32, i32
  }
  func.func @transform_4(%arg0: i32) -> (i32, i32) {
    %c0_i32 = arith.constant 0 : i32
    %c0_i32_0 = arith.constant 0 : i32
    %c0_i32_1 = arith.constant 0 : i32
    return %c0_i32, %c0_i32_0 : i32, i32
  }
  func.func @transform_5(%arg0: i32) -> (i32, i32) {
    %c0_i32 = arith.constant 0 : i32
    %c0_i32_0 = arith.constant 0 : i32
    %c0_i32_1 = arith.constant 0 : i32
    return %c0_i32, %c0_i32_0 : i32, i32
  }
  func.func @transform_6(%arg0: i32) -> (i32, i32) {
    %c0_i32 = arith.constant 0 : i32
    %c0_i32_0 = arith.constant 0 : i32
    %c0_i32_1 = arith.constant 0 : i32
    return %c0_i32, %c0_i32_0 : i32, i32
  }
  func.func @transform_7(%arg0: i32) -> (i32, i32) {
    %c0_i32 = arith.constant 0 : i32
    %c0_i32_0 = arith.constant 0 : i32
    %c0_i32_1 = arith.constant 0 : i32
    return %c0_i32, %c0_i32_0 : i32, i32
  }
  func.func @transform_8(%arg0: i32) -> i32 {
    %c0_i32 = arith.constant 0 : i32
    %c0_i32_0 = arith.constant 0 : i32
    return %c0_i32 : i32
  }
  func.func @transform_9(%arg0: i32) -> (i32, i32, i32, i32) {
    %c0_i32 = arith.constant 0 : i32
    %c0_i32_0 = arith.constant 0 : i32
    %c0_i32_1 = arith.constant 0 : i32
    %c0_i32_2 = arith.constant 0 : i32
    return %arg0, %c0_i32, %c0_i32_0, %c0_i32_1 : i32, i32, i32, i32
  }
}

</mosaic_0001>

<llo_original>
// kernel: local_up_forward.1
$region0: #{local_up_forward.1}
  #allocation0 [shape = 'u32[]', space=smem, size = 0x4, offset = 0x4, fixed_abs, tag = 'smem constant byte address 0x4 - core index']
  #allocation1 [shape = 'u32[72,128]{1,0:T(1,128)}', space=vmem, size = 0x9000, scoped, tag = 'internal scratch']
  %s0 = inlined_call_operand.hbm [shape: f32[2,16,16,32], index: 0, kind: input, shape index: {}]
  %s1 = inlined_call_operand.vmem [shape: f32[2,8,8,16], index: 1, kind: input, shape index: {}]
  %s2 = inlined_call_operand.vmem [shape: f32[288,4], index: 2, kind: input, shape index: {}]
  %s3 = inlined_call_operand.vmem [shape: f32[1,4], index: 3, kind: input, shape index: {}]
  %s4 = inlined_call_operand.vmem [shape: f32[36,9], index: 4, kind: input, shape index: {}]
  %s5 = inlined_call_operand.vmem [shape: f32[1,9], index: 5, kind: input, shape index: {}]
  %s6 = inlined_call_operand.vmem [shape: f32[1,16], index: 6, kind: input, shape index: {}]
  %s7 = inlined_call_operand.vmem [shape: f32[1,16], index: 7, kind: input, shape index: {}]
  %s8 = inlined_call_operand.vmem [shape: f32[9], index: 8, kind: input, shape index: {}]
  %s9 = inlined_call_operand.vmem [shape: f32[2,16,16,16], index: 9, kind: output, shape index: {}]
  %s10 = sld [smem:[#allocation0]]
  $region77: #{local_up_forward.1} parent=0
    _
  %s12 = ssub.s32 1, %s10
  %s13 = scalar_select 0, %s12, %s10
  $region1: #{local_up_forward.1} parent=0
    #allocation2 [shape = 'u8[262144]{0}', space=vmem, size = 0x40000, scoped, tag = 'input window, operand 0']
    #allocation3 [shape = 's32[2]{0}', space=sflag, size = 0x8, scoped, tag = 'scoped memory for local_up_forward.1']
    #allocation4 [shape = 's32[2]{0}', space=sflag, size = 0x8, scoped, tag = 'scoped memory for local_up_forward.1']
    #allocation5 [shape = 'u8[512]{0}', space=smem, size = 0x200, scoped, tag = 'input window, operand 8, single buffered']
    %14 = vsyncpa [#allocation3], 0
    %s15 = scalar_lea.sflag [#allocation3], 1
    %16 = vsyncpa %s15, 0
    %17 = vsyncpa [#allocation4], 0
    loop: start=0, step=1, limit=4
    $region2: #{local_up_forward.1} parent=1 // loop_pre_header
      _
    $region3: #{local_up_forward.1} parent=1 // loop_header
      %s19 = sphi 0, %s23
      %p20 = scmp.ge.s32.totalorder %s19, 4
      %s29 = sphi 0, %s31
      %s32 = sphi 0, %s29
      %s33 = sphi 0, %s32
      %s49 = sphi 0, %s33
      %s55 = sphi 0, %s57
      %s58 = sphi 0, %s55
      %s59 = sphi 0, %s58
      %s75 = sphi 0, %s59
      %s79 = sphi 0, %s79
      %s81 = sphi 0, %s79
      %s82 = sphi 0, %s81
      %s96 = sphi 0, %s82
      %s100 = sphi 0, %s100
      %s102 = sphi 0, %s100
      %s103 = sphi 0, %s102
      %s117 = sphi 0, %s103
      %s121 = sphi 0, %s121
      %s123 = sphi 0, %s121
      %s124 = sphi 0, %s123
      %s138 = sphi 0, %s124
      %s142 = sphi 0, %s142
      %s144 = sphi 0, %s142
      %s145 = sphi 0, %s144
      %s159 = sphi 0, %s145
      %s163 = sphi 0, %s163
      %s165 = sphi 0, %s163
      %s166 = sphi 0, %s165
      %s180 = sphi 0, %s166
      %s184 = sphi 0, %s184
      %s186 = sphi 0, %s184
      %s187 = sphi 0, %s186
      %s201 = sphi 0, %s187
      %s205 = sphi 0, %s205
      %s207 = sphi 0, %s205
      %s208 = sphi 0, %s207
      %s222 = sphi 0, %s208
      %s228 = sphi 0, %s230
      %s231 = sphi 0, %s228
      %s232 = sphi 0, %s231
      %s248 = sphi 0, %s232
    $region4: #{local_up_forward.1} parent=1 // loop_header_branch
      %22 = sbr.rel (%p20) target = $region8
    $region5: #{local_up_forward.1} parent=1 // loop_body
      %s24 = ssub.s32 %s19, 1
      %s25 = ssub.s32 %s19, 2
      %s26 = sadd.s32 %s19, 1
      %s27 = ssub.s32 %s19, %s26
      %p28 = scmp.eq.s32.totalorder %s27, 0
      %s30 = sadd.s32 %s29, 1
      %s31 = scalar_select %p28, %s29, %s30
      %p34 = pneg %p28
      %p35 = scmp.eq.s32.totalorder %s19, 1
      %p36 = por %p34, %p35
      %p37 = scmp.ne.s32.totalorder %s29, %s32
      %p38 = scmp.eq.s32.totalorder %s19, 0
      %p39 = por %p37, %p38
      %p40 = scmp.ne.s32.totalorder %s29, %s32
      %p41 = scmp.eq.s32.totalorder %s24, 1
      %p42 = por %p40, %p41
      %p43 = scmp.ne.s32.totalorder %s32, %s33
      %p44 = scmp.eq.s32.totalorder %s24, 0
      %p45 = por %p43, %p44
      %p46 = scmp.ne.s32.totalorder %s32, %s33
      %p47 = scmp.eq.s32.totalorder %s25, 1
      %p48 = por %p46, %p47
      %p50 = scmp.ne.s32.totalorder %s33, %s49
      %p51 = scmp.eq.s32.totalorder %s25, 0
      %p52 = por %p50, %p51
      %s53 = ssub.s32 %s19, %s26
      %p54 = scmp.eq.s32.totalorder %s53, 0
      %s56 = sadd.s32 %s55, 1
      %s57 = scalar_select %p54, %s55, %s56
      %p60 = pneg %p54
      %p61 = scmp.eq.s32.totalorder %s19, 1
      %p62 = por %p60, %p61
      %p63 = scmp.ne.s32.totalorder %s55, %s58
      %p64 = scmp.eq.s32.totalorder %s19, 0
      %p65 = por %p63, %p64
      %p66 = scmp.ne.s32.totalorder %s55, %s58
      %p67 = scmp.eq.s32.totalorder %s24, 1
      %p68 = por %p66, %p67
      %p69 = scmp.ne.s32.totalorder %s58, %s59
      %p70 = scmp.eq.s32.totalorder %s24, 0
      %p71 = por %p69, %p70
      %p72 = scmp.ne.s32.totalorder %s58, %s59
      %p73 = scmp.eq.s32.totalorder %s25, 1
      %p74 = por %p72, %p73
      %p76 = scmp.ne.s32.totalorder %s59, %s75
      %p77 = scmp.eq.s32.totalorder %s25, 0
      %p78 = por %p76, %p77
      %s80 = sadd.s32 %s79, 1
      %p83 = scmp.eq.s32.totalorder %s19, 1
      %p84 = scmp.ne.s32.totalorder %s79, %s81
      %p85 = scmp.eq.s32.totalorder %s19, 0
      %p86 = por %p84, %p85
      %p87 = scmp.ne.s32.totalorder %s79, %s81
      %p88 = scmp.eq.s32.totalorder %s24, 1
      %p89 = por %p87, %p88
      %p90 = scmp.ne.s32.totalorder %s81, %s82
      %p91 = scmp.eq.s32.totalorder %s24, 0
      %p92 = por %p90, %p91
      %p93 = scmp.ne.s32.totalorder %s81, %s82
      %p94 = scmp.eq.s32.totalorder %s25, 1
      %p95 = por %p93, %p94
      %p97 = scmp.ne.s32.totalorder %s82, %s96
      %p98 = scmp.eq.s32.totalorder %s25, 0
      %p99 = por %p97, %p98
      %s101 = sadd.s32 %s100, 1
      %p104 = scmp.eq.s32.totalorder %s19, 1
      %p105 = scmp.ne.s32.totalorder %s100, %s102
      %p106 = scmp.eq.s32.totalorder %s19, 0
      %p107 = por %p105, %p106
      %p108 = scmp.ne.s32.totalorder %s100, %s102
      %p109 = scmp.eq.s32.totalorder %s24, 1
      %p110 = por %p108, %p109
      %p111 = scmp.ne.s32.totalorder %s102, %s103
      %p112 = scmp.eq.s32.totalorder %s24, 0
      %p113 = por %p111, %p112
      %p114 = scmp.ne.s32.totalorder %s102, %s103
      %p115 = scmp.eq.s32.totalorder %s25, 1
      %p116 = por %p114, %p115
      %p118 = scmp.ne.s32.totalorder %s103, %s117
      %p119 = scmp.eq.s32.totalorder %s25, 0
      %p120 = por %p118, %p119
      %s122 = sadd.s32 %s121, 1
      %p125 = scmp.eq.s32.totalorder %s19, 1
      %p126 = scmp.ne.s32.totalorder %s121, %s123
      %p127 = scmp.eq.s32.totalorder %s19, 0
      %p128 = por %p126, %p127
      %p129 = scmp.ne.s32.totalorder %s121, %s123
      %p130 = scmp.eq.s32.totalorder %s24, 1
      %p131 = por %p129, %p130
      %p132 = scmp.ne.s32.totalorder %s123, %s124
      %p133 = scmp.eq.s32.totalorder %s24, 0
      %p134 = por %p132, %p133
      %p135 = scmp.ne.s32.totalorder %s123, %s124
      %p136 = scmp.eq.s32.totalorder %s25, 1
      %p137 = por %p135, %p136
      %p139 = scmp.ne.s32.totalorder %s124, %s138
      %p140 = scmp.eq.s32.totalorder %s25, 0
      %p141 = por %p139, %p140
      %s143 = sadd.s32 %s142, 1
      %p146 = scmp.eq.s32.totalorder %s19, 1
      %p147 = scmp.ne.s32.totalorder %s142, %s144
      %p148 = scmp.eq.s32.totalorder %s19, 0
      %p149 = por %p147, %p148
      %p150 = scmp.ne.s32.totalorder %s142, %s144
      %p151 = scmp.eq.s32.totalorder %s24, 1
      %p152 = por %p150, %p151
      %p153 = scmp.ne.s32.totalorder %s144, %s145
      %p154 = scmp.eq.s32.totalorder %s24, 0
      %p155 = por %p153, %p154
      %p156 = scmp.ne.s32.totalorder %s144, %s145
      %p157 = scmp.eq.s32.totalorder %s25, 1
      %p158 = por %p156, %p157
      %p160 = scmp.ne.s32.totalorder %s145, %s159
      %p161 = scmp.eq.s32.totalorder %s25, 0
      %p162 = por %p160, %p161
      %s164 = sadd.s32 %s163, 1
      %p167 = scmp.eq.s32.totalorder %s19, 1
      %p168 = scmp.ne.s32.totalorder %s163, %s165
      %p169 = scmp.eq.s32.totalorder %s19, 0
      %p170 = por %p168, %p169
      %p171 = scmp.ne.s32.totalorder %s163, %s165
      %p172 = scmp.eq.s32.totalorder %s24, 1
      %p173 = por %p171, %p172
      %p174 = scmp.ne.s32.totalorder %s165, %s166
      %p175 = scmp.eq.s32.totalorder %s24, 0
      %p176 = por %p174, %p175
      %p177 = scmp.ne.s32.totalorder %s165, %s166
      %p178 = scmp.eq.s32.totalorder %s25, 1
      %p179 = por %p177, %p178
      %p181 = scmp.ne.s32.totalorder %s166, %s180
      %p182 = scmp.eq.s32.totalorder %s25, 0
      %p183 = por %p181, %p182
      %s185 = sadd.s32 %s184, 1
      %p188 = scmp.eq.s32.totalorder %s19, 1
      %p189 = scmp.ne.s32.totalorder %s184, %s186
      %p190 = scmp.eq.s32.totalorder %s19, 0
      %p191 = por %p189, %p190
      %p192 = scmp.ne.s32.totalorder %s184, %s186
      %p193 = scmp.eq.s32.totalorder %s24, 1
      %p194 = por %p192, %p193
      %p195 = scmp.ne.s32.totalorder %s186, %s187
      %p196 = scmp.eq.s32.totalorder %s24, 0
      %p197 = por %p195, %p196
      %p198 = scmp.ne.s32.totalorder %s186, %s187
      %p199 = scmp.eq.s32.totalorder %s25, 1
      %p200 = por %p198, %p199
      %p202 = scmp.ne.s32.totalorder %s187, %s201
      %p203 = scmp.eq.s32.totalorder %s25, 0
      %p204 = por %p202, %p203
      %s206 = sadd.s32 %s205, 1
      %p209 = scmp.eq.s32.totalorder %s19, 1
      %p210 = scmp.ne.s32.totalorder %s205, %s207
      %p211 = scmp.eq.s32.totalorder %s19, 0
      %p212 = por %p210, %p211
      %p213 = scmp.ne.s32.totalorder %s205, %s207
      %p214 = scmp.eq.s32.totalorder %s24, 1
      %p215 = por %p213, %p214
      %p216 = scmp.ne.s32.totalorder %s207, %s208
      %p217 = scmp.eq.s32.totalorder %s24, 0
      %p218 = por %p216, %p217
      %p219 = scmp.ne.s32.totalorder %s207, %s208
      %p220 = scmp.eq.s32.totalorder %s25, 1
      %p221 = por %p219, %p220
      %p223 = scmp.ne.s32.totalorder %s208, %s222
      %p224 = scmp.eq.s32.totalorder %s25, 0
      %p225 = por %p223, %p224
      %s226 = ssub.s32 %s19, %s26
      %p227 = scmp.eq.s32.totalorder %s226, 0
      %s229 = sadd.s32 %s228, 1
      %s230 = scalar_select %p227, %s228, %s229
      %p233 = pneg %p227
      %p234 = scmp.eq.s32.totalorder %s19, 1
      %p235 = por %p233, %p234
      %p236 = scmp.ne.s32.totalorder %s228, %s231
      %p237 = scmp.eq.s32.totalorder %s19, 0
      %p238 = por %p236, %p237
      %p239 = scmp.ne.s32.totalorder %s228, %s231
      %p240 = scmp.eq.s32.totalorder %s24, 1
      %p241 = por %p239, %p240
      %p242 = scmp.ne.s32.totalorder %s231, %s232
      %p243 = scmp.eq.s32.totalorder %s24, 0
      %p244 = por %p242, %p243
      %p245 = scmp.ne.s32.totalorder %s231, %s232
      %p246 = scmp.eq.s32.totalorder %s25, 1
      %p247 = por %p245, %p246
      %p249 = scmp.ne.s32.totalorder %s232, %s248
      %p250 = scmp.eq.s32.totalorder %s25, 0
      %p251 = por %p249, %p250
      %p252 = scmp.le.s32.totalorder 1, %s19
      %p253 = scmp.lt.s32.totalorder %s19, 3
      %p254 = pnand %p252, %p253
      %p255 = pneg %p254
      // Predicated region
      $region9: #{local_up_forward.1} parent=5 // pred_check
        _
      $region10: #{local_up_forward.1} parent=5 // pred_check_branch
        %257 = sbr.rel (%p254) target = $region12
      $region11: #{local_up_forward.1} parent=5 // pred_region
        %s258 = ssub.s32 %s19, 1
        // Predicated region
        $region13: #{local_up_forward.1} parent=11 // pred_check
          %p259 = pneg %p92
        $region14: #{local_up_forward.1} parent=11 // pred_check_branch
          %261 = sbr.rel (%p259) target = $region16
        $region15: #{local_up_forward.1} parent=11 // pred_region
          _
        $region16: #{local_up_forward.1} parent=11 // pred_fallthru
          _
        // Predicated region
        $region17: #{local_up_forward.1} parent=11 // pred_check
          %p262 = pneg %p113
        $region18: #{local_up_forward.1} parent=11 // pred_check_branch
          %264 = sbr.rel (%p262) target = $region20
        $region19: #{local_up_forward.1} parent=11 // pred_region
          _
        $region20: #{local_up_forward.1} parent=11 // pred_fallthru
          _
        // Predicated region
        $region21: #{local_up_forward.1} parent=11 // pred_check
          %p265 = pneg %p134
        $region22: #{local_up_forward.1} parent=11 // pred_check_branch
          %267 = sbr.rel (%p265) target = $region24
        $region23: #{local_up_forward.1} parent=11 // pred_region
          _
        $region24: #{local_up_forward.1} parent=11 // pred_fallthru
          _
        // Predicated region
        $region25: #{local_up_forward.1} parent=11 // pred_check
          %p268 = pneg %p155
        $region26: #{local_up_forward.1} parent=11 // pred_check_branch
          %270 = sbr.rel (%p268) target = $region28
        $region27: #{local_up_forward.1} parent=11 // pred_region
          _
        $region28: #{local_up_forward.1} parent=11 // pred_fallthru
          _
        // Predicated region
        $region29: #{local_up_forward.1} parent=11 // pred_check
          %p271 = pneg %p176
        $region30: #{local_up_forward.1} parent=11 // pred_check_branch
          %273 = sbr.rel (%p271) target = $region32
        $region31: #{local_up_forward.1} parent=11 // pred_region
          _
        $region32: #{local_up_forward.1} parent=11 // pred_fallthru
          _
        // Predicated region
        $region33: #{local_up_forward.1} parent=11 // pred_check
          %p274 = pneg %p197
        $region34: #{local_up_forward.1} parent=11 // pred_check_branch
          %276 = sbr.rel (%p274) target = $region36
        $region35: #{local_up_forward.1} parent=11 // pred_region
          _
        $region36: #{local_up_forward.1} parent=11 // pred_fallthru
          _
        // Predicated region
        $region37: #{local_up_forward.1} parent=11 // pred_check
          %p277 = pneg %p218
        $region38: #{local_up_forward.1} parent=11 // pred_check_branch
          %279 = sbr.rel (%p277) target = $region40
        $region39: #{local_up_forward.1} parent=11 // pred_region
          %281 = vsyncadd [#allocation4], 0
          %s283 = sshll.u32 %s8, 4
          %s284 = int_to_ptr.vmem [resolvable:$true] %s283
          %286 = dma.vmem_to_smem %s284, 16, [#allocation5], [#allocation4]
        $region40: #{local_up_forward.1} parent=11 // pred_fallthru
          _
      $region12: #{local_up_forward.1} parent=5 // pred_fallthru
        _
      %p287 = scmp.lt.s32.totalorder %s19, 2
      // Predicated region
      $region41: #{local_up_forward.1} parent=5 // pred_check
        %p288 = pneg %p287
      $region42: #{local_up_forward.1} parent=5 // pred_check_branch
        %290 = sbr.rel (%p288) target = $region44
      $region43: #{local_up_forward.1} parent=5 // pred_region
        // Predicated region
        $region45: #{local_up_forward.1} parent=43 // pred_check
          %p291 = pneg %p39
        $region46: #{local_up_forward.1} parent=43 // pred_check_branch
          %293 = sbr.rel (%p291) target = $region48
        $region47: #{local_up_forward.1} parent=43 // pred_region
          %s294 = sand.u32 %s29, 1
          %s295 = scalar_lea.sflag [#allocation3], %s294
          %s296 = sand.u32 %s29, 1
          %s297 = smul.addr %s296, 256
          %s298 = scalar_lea.vmem [#allocation2], %s297
          %300 = vsyncadd %s295, 0
          %s301 = smul.addr %s19, 32
          %s302 = smul.addr %s301, 8
          %s303 = scalar_lea.hbm %s0, %s302
          %s304 = sshll.u32 %s303, 4
          %s305 = int_to_ptr.hbm [resolvable:$true] %s304
          %s306 = sshll.u32 %s298, 4
          %s307 = int_to_ptr.vmem [resolvable:$true] %s306
          %312 = dma.hbm_to_vmem [thread:$0]  %s305, 4096, %s307, %s295, 128, 128, 8
        $region48: #{local_up_forward.1} parent=43 // pred_fallthru
          _
        // Predicated region
        $region49: #{local_up_forward.1} parent=43 // pred_check
          %p313 = pneg %p65
        $region50: #{local_up_forward.1} parent=43 // pred_check_branch
          %315 = sbr.rel (%p313) target = $region52
        $region51: #{local_up_forward.1} parent=43 // pred_region
          %p316 = scmp.lt.s32.totalorder %s19, 1
          %s317 = scalar_select %p316, %s19, 1
          %s318 = smul.addr %s317, 8
          %s319 = smul.addr %s318, 8
          %s320 = scalar_lea.vmem %s1, %s319
        $region52: #{local_up_forward.1} parent=43 // pred_fallthru
          _
      $region44: #{local_up_forward.1} parent=5 // pred_fallthru
        _
      %p321 = scmp.le.s32.totalorder 1, %s19
      %p322 = scmp.lt.s32.totalorder %s19, 3
      %p323 = pnand %p321, %p322
      %p324 = pneg %p323
      // Predicated region
      $region53: #{local_up_forward.1} parent=5 // pred_check
        _
      $region54: #{local_up_forward.1} parent=5 // pred_check_branch
        %326 = sbr.rel (%p323) target = $region56
      $region55: #{local_up_forward.1} parent=5 // pred_region
        %s327 = ssub.s32 %s19, 1
        %s328 = sand.u32 %s32, 1
        %s329 = scalar_lea.sflag [#allocation3], %s328
        %s330 = sand.u32 %s32, 1
        %s331 = smul.addr %s330, 256
        %s332 = scalar_lea.vmem [#allocation2], %s331
        // Predicated region
        $region57: #{local_up_forward.1} parent=55 // pred_check
          %p333 = pneg %p45
        $region58: #{local_up_forward.1} parent=55 // pred_check_branch
          %335 = sbr.rel (%p333) target = $region60
        $region59: #{local_up_forward.1} parent=55 // pred_region
          %337 = dma.done %s329, 4096
        $region60: #{local_up_forward.1} parent=55 // pred_fallthru
          _
        // Predicated region
        $region61: #{local_up_forward.1} parent=55 // pred_check
          %p338 = pneg %p218
        $region62: #{local_up_forward.1} parent=55 // pred_check_branch
          %340 = sbr.rel (%p338) target = $region64
        $region63: #{local_up_forward.1} parent=55 // pred_region
          %342 = dma.done [#allocation4], 16
        $region64: #{local_up_forward.1} parent=55 // pred_fallthru
          _
        %343 = sfence
        %s344 = sand.u32 %s32, 1
        %s345 = scalar_lea.sflag [#allocation3], %s344
        %s346 = sand.u32 %s32, 1
        %s347 = smul.addr %s346, 256
        %s348 = scalar_lea.vmem [#allocation2], %s347
        %p349 = pneg %p45
        %p350 = pneg %p42
        %p351 = scmp.lt.s32.totalorder %s24, 1
        %s352 = scalar_select %p351, %s24, 1
        %s353 = smul.addr %s352, 8
        %s354 = smul.addr %s353, 8
        %s355 = scalar_lea.vmem %s1, %s354
        %p356 = pneg %p71
        %p357 = pneg %p68
        %p358 = pneg %p92
        %p359 = pneg %p89
        %p360 = pneg %p113
        %p361 = pneg %p110
        %p362 = pneg %p134
        %p363 = pneg %p131
        %p364 = pneg %p155
        %p365 = pneg %p152
        %p366 = pneg %p176
        %p367 = pneg %p173
        %p368 = pneg %p197
        %p369 = pneg %p194
        %p370 = pneg %p218
        %p371 = pneg %p215
        %p372 = pneg %p244
        %p373 = pneg %p241
        %p374 = scmp.lt.s32.totalorder %s24, 1
        %s375 = scalar_select %p374, %s24, 1
        %s376 = smul.addr %s375, 32
        %s377 = smul.addr %s376, 8
        %s378 = scalar_lea.vmem %s9, %s377
        %p379 = scmp.lt.s32.totalorder %s24, 1
        %s380 = scalar_select %p379, %s24, 1
        %s381 = smul.addr %s380, 8
        %s382 = smul.addr %s381, 8
        %s383 = scalar_lea.vmem %s1, %s382
        %p384 = scmp.lt.s32.totalorder %s24, 1
        %s385 = scalar_select %p384, %s24, 1
        %s386 = smul.addr %s385, 32
        %s387 = smul.addr %s386, 8
        %s388 = scalar_lea.vmem %s9, %s387
        %v389 = vld [vmem:[%s332] sm:$0xff]
        %v390 = vld [vmem:[%s332 + $0x8] sm:$0xff]
        %v391 = vld [vmem:[%s332 + $0x10] sm:$0xff]
        %v392 = vld [vmem:[%s332 + $0x18] sm:$0xff]
        %v393 = vld [vmem:[%s332 + $0x20] sm:$0xff]
        %v394 = vld [vmem:[%s332 + $0x28] sm:$0xff]
        %v395 = vld [vmem:[%s332 + $0x30] sm:$0xff]
        %v396 = vld [vmem:[%s332 + $0x38] sm:$0xff]
        %v397 = vld [vmem:[%s332 + $0x40] sm:$0xff]
        %v398 = vld [vmem:[%s332 + $0x48] sm:$0xff]
        %v399 = vld [vmem:[%s332 + $0x50] sm:$0xff]
        %v400 = vld [vmem:[%s332 + $0x58] sm:$0xff]
        %v401 = vld [vmem:[%s332 + $0x60] sm:$0xff]
        %v402 = vld [vmem:[%s332 + $0x68] sm:$0xff]
        %v403 = vld [vmem:[%s332 + $0x70] sm:$0xff]
        %v404 = vld [vmem:[%s332 + $0x78] sm:$0xff]
        %v405 = vld [vmem:[%s332 + $0x80] sm:$0xff]
        %v406 = vld [vmem:[%s332 + $0x88] sm:$0xff]
        %v407 = vld [vmem:[%s332 + $0x90] sm:$0xff]
        %v408 = vld [vmem:[%s332 + $0x98] sm:$0xff]
        %v409 = vld [vmem:[%s332 + $0xa0] sm:$0xff]
        %v410 = vld [vmem:[%s332 + $0xa8] sm:$0xff]
        %v411 = vld [vmem:[%s332 + $0xb0] sm:$0xff]
        %v412 = vld [vmem:[%s332 + $0xb8] sm:$0xff]
        %v413 = vld [vmem:[%s332 + $0xc0] sm:$0xff]
        %v414 = vld [vmem:[%s332 + $0xc8] sm:$0xff]
        %v415 = vld [vmem:[%s332 + $0xd0] sm:$0xff]
        %v416 = vld [vmem:[%s332 + $0xd8] sm:$0xff]
        %v417 = vld [vmem:[%s332 + $0xe0] sm:$0xff]
        %v418 = vld [vmem:[%s332 + $0xe8] sm:$0xff]
        %v419 = vld [vmem:[%s332 + $0xf0] sm:$0xff]
        %v420 = vld [vmem:[%s332 + $0xf8] sm:$0xff]
        %vm453 = vcmask 1040384
        %v454 = vrot.slane %v389, 7
        %v455 = vrot.slane %v390, 7
        %v456 = vsel %vm453, %v454, %v455
        %v457 = vrot.slane %v391, 7
        %v458 = vrot.slane %v392, 7
        %v459 = vsel %vm453, %v457, %v458
        %v460 = vrot.slane %v393, 7
        %v461 = vrot.slane %v394, 7
        %v462 = vsel %vm453, %v460, %v461
        %v463 = vrot.slane %v395, 7
        %v464 = vrot.slane %v396, 7
        %v465 = vsel %vm453, %v463, %v464
        %v466 = vrot.slane %v397, 7
        %v467 = vrot.slane %v398, 7
        %v468 = vsel %vm453, %v466, %v467
        %v469 = vrot.slane %v399, 7
        %v470 = vrot.slane %v400, 7
        %v471 = vsel %vm453, %v469, %v470
        %v472 = vrot.slane %v401, 7
        %v473 = vrot.slane %v402, 7
        %v474 = vsel %vm453, %v472, %v473
        %v475 = vrot.slane %v403, 7
        %v476 = vrot.slane %v404, 7
        %v477 = vsel %vm453, %v475, %v476
        %v478 = vrot.slane %v405, 7
        %v479 = vrot.slane %v406, 7
        %v480 = vsel %vm453, %v478, %v479
        %v481 = vrot.slane %v407, 7
        %v482 = vrot.slane %v408, 7
        %v483 = vsel %vm453, %v481, %v482
        %v484 = vrot.slane %v409, 7
        %v485 = vrot.slane %v410, 7
        %v486 = vsel %vm453, %v484, %v485
        %v487 = vrot.slane %v411, 7
        %v488 = vrot.slane %v412, 7
        %v489 = vsel %vm453, %v487, %v488
        %v490 = vrot.slane %v413, 7
        %v491 = vrot.slane %v414, 7
        %v492 = vsel %vm453, %v490, %v491
        %v493 = vrot.slane %v415, 7
        %v494 = vrot.slane %v416, 7
        %v495 = vsel %vm453, %v493, %v494
        %v496 = vrot.slane %v417, 7
        %v497 = vrot.slane %v418, 7
        %v498 = vsel %vm453, %v496, %v497
        %v499 = vrot.slane %v419, 7
        %v500 = vrot.slane %v420, 7
        %v501 = vsel %vm453, %v499, %v500
        %v549 = vsel %vm453, 0.0, %v454
        %v550 = vsel %vm453, 0.0, %v457
        %v551 = vsel %vm453, 0.0, %v460
        %v552 = vsel %vm453, 0.0, %v463
        %v553 = vsel %vm453, 0.0, %v466
        %v554 = vsel %vm453, 0.0, %v469
        %v555 = vsel %vm453, 0.0, %v472
        %v556 = vsel %vm453, 0.0, %v475
        %v557 = vsel %vm453, 0.0, %v478
        %v558 = vsel %vm453, 0.0, %v481
        %v559 = vsel %vm453, 0.0, %v484
        %v560 = vsel %vm453, 0.0, %v487
        %v561 = vsel %vm453, 0.0, %v490
        %v562 = vsel %vm453, 0.0, %v493
        %v563 = vsel %vm453, 0.0, %v496
        %v564 = vsel %vm453, 0.0, %v499
        %v565 = vsel %vm453, %v455, 0.0
        %v566 = vsel %vm453, %v458, 0.0
        %v567 = vsel %vm453, %v461, 0.0
        %v568 = vsel %vm453, %v464, 0.0
        %v569 = vsel %vm453, %v467, 0.0
        %v570 = vsel %vm453, %v470, 0.0
        %v571 = vsel %vm453, %v473, 0.0
        %v572 = vsel %vm453, %v476, 0.0
        %v573 = vsel %vm453, %v479, 0.0
        %v574 = vsel %vm453, %v482, 0.0
        %v575 = vsel %vm453, %v485, 0.0
        %v576 = vsel %vm453, %v488, 0.0
        %v577 = vsel %vm453, %v491, 0.0
        %v578 = vsel %vm453, %v494, 0.0
        %v579 = vsel %vm453, %v497, 0.0
        %v580 = vsel %vm453, %v500, 0.0
        %vm612 = vcmask 1046528
        %v613 = vrot.slane 0.0, 1
        %v614 = vsel %vm612, %v613, %v613
        %v615 = vrot.slane %v549, 1
        %v616 = vrot.slane %v456, 1
        %v617 = vsel %vm612, %v615, %v616
        %v618 = vrot.slane %v565, 1
        %v619 = vsel %vm612, %v616, %v618
        %v620 = vrot.slane %v550, 1
        %v621 = vrot.slane %v459, 1
        %v622 = vsel %vm612, %v620, %v621
        %v623 = vrot.slane %v566, 1
        %v624 = vsel %vm612, %v621, %v623
        %v625 = vrot.slane %v551, 1
        %v626 = vrot.slane %v462, 1
        %v627 = vsel %vm612, %v625, %v626
        %v628 = vrot.slane %v567, 1
        %v629 = vsel %vm612, %v626, %v628
        %v630 = vrot.slane %v552, 1
        %v631 = vrot.slane %v465, 1
        %v632 = vsel %vm612, %v630, %v631
        %v633 = vrot.slane %v568, 1
        %v634 = vsel %vm612, %v631, %v633
        %v635 = vrot.slane %v553, 1
        %v636 = vrot.slane %v468, 1
        %v637 = vsel %vm612, %v635, %v636
        %v638 = vrot.slane %v569, 1
        %v639 = vsel %vm612, %v636, %v638
        %v640 = vrot.slane %v554, 1
        %v641 = vrot.slane %v471, 1
        %v642 = vsel %vm612, %v640, %v641
        %v643 = vrot.slane %v570, 1
        %v644 = vsel %vm612, %v641, %v643
        %v645 = vrot.slane %v555, 1
        %v646 = vrot.slane %v474, 1
        %v647 = vsel %vm612, %v645, %v646
        %v648 = vrot.slane %v571, 1
        %v649 = vsel %vm612, %v646, %v648
        %v650 = vrot.slane %v556, 1
        %v651 = vrot.slane %v477, 1
        %v652 = vsel %vm612, %v650, %v651
        %v653 = vrot.slane %v572, 1
        %v654 = vsel %vm612, %v651, %v653
        %v655 = vrot.slane %v557, 1
        %v656 = vrot.slane %v480, 1
        %v657 = vsel %vm612, %v655, %v656
        %v658 = vrot.slane %v573, 1
        %v659 = vsel %vm612, %v656, %v658
        %v660 = vrot.slane %v558, 1
        %v661 = vrot.slane %v483, 1
        %v662 = vsel %vm612, %v660, %v661
        %v663 = vrot.slane %v574, 1
        %v664 = vsel %vm612, %v661, %v663
        %v665 = vrot.slane %v559, 1
        %v666 = vrot.slane %v486, 1
        %v667 = vsel %vm612, %v665, %v666
        %v668 = vrot.slane %v575, 1
        %v669 = vsel %vm612, %v666, %v668
        %v670 = vrot.slane %v560, 1
        %v671 = vrot.slane %v489, 1
        %v672 = vsel %vm612, %v670, %v671
        %v673 = vrot.slane %v576, 1
        %v674 = vsel %vm612, %v671, %v673
        %v675 = vrot.slane %v561, 1
        %v676 = vrot.slane %v492, 1
        %v677 = vsel %vm612, %v675, %v676
        %v678 = vrot.slane %v577, 1
        %v679 = vsel %vm612, %v676, %v678
        %v680 = vrot.slane %v562, 1
        %v681 = vrot.slane %v495, 1
        %v682 = vsel %vm612, %v680, %v681
        %v683 = vrot.slane %v578, 1
        %v684 = vsel %vm612, %v681, %v683
        %v685 = vrot.slane %v563, 1
        %v686 = vrot.slane %v498, 1
        %v687 = vsel %vm612, %v685, %v686
        %v688 = vrot.slane %v579, 1
        %v689 = vsel %vm612, %v686, %v688
        %vm690 = vcmask 1045504
        %v691 = vrot.slane 0.0, 2
        %v692 = vsel %vm690, %v691, %v691
        %v693 = vrot.slane %v549, 2
        %v694 = vrot.slane %v456, 2
        %v695 = vsel %vm690, %v693, %v694
        %v696 = vrot.slane %v565, 2
        %v697 = vsel %vm690, %v694, %v696
        %v698 = vrot.slane %v550, 2
        %v699 = vrot.slane %v459, 2
        %v700 = vsel %vm690, %v698, %v699
        %v701 = vrot.slane %v566, 2
        %v702 = vsel %vm690, %v699, %v701
        %v703 = vrot.slane %v551, 2
        %v704 = vrot.slane %v462, 2
        %v705 = vsel %vm690, %v703, %v704
        %v706 = vrot.slane %v567, 2
        %v707 = vsel %vm690, %v704, %v706
        %v708 = vrot.slane %v552, 2
        %v709 = vrot.slane %v465, 2
        %v710 = vsel %vm690, %v708, %v709
        %v711 = vrot.slane %v568, 2
        %v712 = vsel %vm690, %v709, %v711
        %v713 = vrot.slane %v553, 2
        %v714 = vrot.slane %v468, 2
        %v715 = vsel %vm690, %v713, %v714
        %v716 = vrot.slane %v569, 2
        %v717 = vsel %vm690, %v714, %v716
        %v718 = vrot.slane %v554, 2
        %v719 = vrot.slane %v471, 2
        %v720 = vsel %vm690, %v718, %v719
        %v721 = vrot.slane %v570, 2
        %v722 = vsel %vm690, %v719, %v721
        %v723 = vrot.slane %v555, 2
        %v724 = vrot.slane %v474, 2
        %v725 = vsel %vm690, %v723, %v724
        %v726 = vrot.slane %v571, 2
        %v727 = vsel %vm690, %v724, %v726
        %v728 = vrot.slane %v556, 2
        %v729 = vrot.slane %v477, 2
        %v730 = vsel %vm690, %v728, %v729
        %v731 = vrot.slane %v572, 2
        %v732 = vsel %vm690, %v729, %v731
        %v733 = vrot.slane %v557, 2
        %v734 = vrot.slane %v480, 2
        %v735 = vsel %vm690, %v733, %v734
        %v736 = vrot.slane %v573, 2
        %v737 = vsel %vm690, %v734, %v736
        %v738 = vrot.slane %v558, 2
        %v739 = vrot.slane %v483, 2
        %v740 = vsel %vm690, %v738, %v739
        %v741 = vrot.slane %v574, 2
        %v742 = vsel %vm690, %v739, %v741
        %v743 = vrot.slane %v559, 2
        %v744 = vrot.slane %v486, 2
        %v745 = vsel %vm690, %v743, %v744
        %v746 = vrot.slane %v575, 2
        %v747 = vsel %vm690, %v744, %v746
        %v748 = vrot.slane %v560, 2
        %v749 = vrot.slane %v489, 2
        %v750 = vsel %vm690, %v748, %v749
        %v751 = vrot.slane %v576, 2
        %v752 = vsel %vm690, %v749, %v751
        %v753 = vrot.slane %v561, 2
        %v754 = vrot.slane %v492, 2
        %v755 = vsel %vm690, %v753, %v754
        %v756 = vrot.slane %v577, 2
        %v757 = vsel %vm690, %v754, %v756
        %v758 = vrot.slane %v562, 2
        %v759 = vrot.slane %v495, 2
        %v760 = vsel %vm690, %v758, %v759
        %v761 = vrot.slane %v578, 2
        %v762 = vsel %vm690, %v759, %v761
        %v763 = vrot.slane %v563, 2
        %v764 = vrot.slane %v498, 2
        %v765 = vsel %vm690, %v763, %v764
        %v766 = vrot.slane %v579, 2
        %v767 = vsel %vm690, %v764, %v766
        %v770 = vrot.slane %v564, 1
        %v771 = vrot.slane %v501, 1
        %v772 = vsel %vm612, %v770, %v771
        %v773 = vrot.slane %v580, 1
        %v774 = vsel %vm612, %v771, %v773
        %v807 = vrot.slane %v564, 2
        %v808 = vrot.slane %v501, 2
        %v809 = vsel %vm690, %v807, %v808
        %v810 = vrot.slane %v580, 2
        %v811 = vsel %vm690, %v808, %v810
        %812 = vrot.lane.b32.xlu0 %v614, 32
        %v813 = vpop.permute.xlu0 %812
        %814 = vrot.lane.b32.xlu0 %v617, 32
        %v815 = vpop.permute.xlu0 %814
        %816 = vrot.lane.b32.xlu0 %v619, 32
        %v817 = vpop.permute.xlu0 %816
        %818 = vrot.lane.b32.xlu0 %v622, 32
        %v819 = vpop.permute.xlu0 %818
        %820 = vrot.lane.b32.xlu0 %v624, 32
        %v821 = vpop.permute.xlu0 %820
        %822 = vrot.lane.b32.xlu0 %v627, 32
        %v823 = vpop.permute.xlu0 %822
        %824 = vrot.lane.b32.xlu0 %v629, 32
        %v825 = vpop.permute.xlu0 %824
        %826 = vrot.lane.b32.xlu0 %v632, 32
        %v827 = vpop.permute.xlu0 %826
        %828 = vrot.lane.b32.xlu0 %v634, 32
        %v829 = vpop.permute.xlu0 %828
        %830 = vrot.lane.b32.xlu0 %v637, 32
        %v831 = vpop.permute.xlu0 %830
        %832 = vrot.lane.b32.xlu0 %v639, 32
        %v833 = vpop.permute.xlu0 %832
        %834 = vrot.lane.b32.xlu0 %v642, 32
        %v835 = vpop.permute.xlu0 %834
        %836 = vrot.lane.b32.xlu0 %v644, 32
        %v837 = vpop.permute.xlu0 %836
        %838 = vrot.lane.b32.xlu0 %v647, 32
        %v839 = vpop.permute.xlu0 %838
        %840 = vrot.lane.b32.xlu0 %v649, 32
        %v841 = vpop.permute.xlu0 %840
        %842 = vrot.lane.b32.xlu0 %v652, 32
        %v843 = vpop.permute.xlu0 %842
        %844 = vrot.lane.b32.xlu0 %v654, 32
        %v845 = vpop.permute.xlu0 %844
        %846 = vrot.lane.b32.xlu0 %v657, 32
        %v847 = vpop.permute.xlu0 %846
        %848 = vrot.lane.b32.xlu0 %v659, 32
        %v849 = vpop.permute.xlu0 %848
        %850 = vrot.lane.b32.xlu0 %v662, 32
        %v851 = vpop.permute.xlu0 %850
        %852 = vrot.lane.b32.xlu0 %v664, 32
        %v853 = vpop.permute.xlu0 %852
        %854 = vrot.lane.b32.xlu0 %v667, 32
        %v855 = vpop.permute.xlu0 %854
        %856 = vrot.lane.b32.xlu0 %v669, 32
        %v857 = vpop.permute.xlu0 %856
        %858 = vrot.lane.b32.xlu0 %v672, 32
        %v859 = vpop.permute.xlu0 %858
        %860 = vrot.lane.b32.xlu0 %v674, 32
        %v861 = vpop.permute.xlu0 %860
        %862 = vrot.lane.b32.xlu0 %v677, 32
        %v863 = vpop.permute.xlu0 %862
        %864 = vrot.lane.b32.xlu0 %v679, 32
        %v865 = vpop.permute.xlu0 %864
        %866 = vrot.lane.b32.xlu0 %v682, 32
        %v867 = vpop.permute.xlu0 %866
        %868 = vrot.lane.b32.xlu0 %v684, 32
        %v869 = vpop.permute.xlu0 %868
        %870 = vrot.lane.b32.xlu0 %v687, 32
        %v871 = vpop.permute.xlu0 %870
        %872 = vrot.lane.b32.xlu0 %v689, 32
        %v873 = vpop.permute.xlu0 %872
        %905 = vrot.lane.b32.xlu0 %v692, 64
        %v906 = vpop.permute.xlu0 %905
        %907 = vrot.lane.b32.xlu0 %v695, 64
        %v908 = vpop.permute.xlu0 %907
        %909 = vrot.lane.b32.xlu0 %v697, 64
        %v910 = vpop.permute.xlu0 %909
        %911 = vrot.lane.b32.xlu0 %v700, 64
        %v912 = vpop.permute.xlu0 %911
        %913 = vrot.lane.b32.xlu0 %v702, 64
        %v914 = vpop.permute.xlu0 %913
        %915 = vrot.lane.b32.xlu0 %v705, 64
        %v916 = vpop.permute.xlu0 %915
        %917 = vrot.lane.b32.xlu0 %v707, 64
        %v918 = vpop.permute.xlu0 %917
        %919 = vrot.lane.b32.xlu0 %v710, 64
        %v920 = vpop.permute.xlu0 %919
        %921 = vrot.lane.b32.xlu0 %v712, 64
        %v922 = vpop.permute.xlu0 %921
        %923 = vrot.lane.b32.xlu0 %v715, 64
        %v924 = vpop.permute.xlu0 %923
        %925 = vrot.lane.b32.xlu0 %v717, 64
        %v926 = vpop.permute.xlu0 %925
        %927 = vrot.lane.b32.xlu0 %v720, 64
        %v928 = vpop.permute.xlu0 %927
        %929 = vrot.lane.b32.xlu0 %v722, 64
        %v930 = vpop.permute.xlu0 %929
        %931 = vrot.lane.b32.xlu0 %v725, 64
        %v932 = vpop.permute.xlu0 %931
        %933 = vrot.lane.b32.xlu0 %v727, 64
        %v934 = vpop.permute.xlu0 %933
        %935 = vrot.lane.b32.xlu0 %v730, 64
        %v936 = vpop.permute.xlu0 %935
        %937 = vrot.lane.b32.xlu0 %v732, 64
        %v938 = vpop.permute.xlu0 %937
        %939 = vrot.lane.b32.xlu0 %v735, 64
        %v940 = vpop.permute.xlu0 %939
        %941 = vrot.lane.b32.xlu0 %v737, 64
        %v942 = vpop.permute.xlu0 %941
        %943 = vrot.lane.b32.xlu0 %v740, 64
        %v944 = vpop.permute.xlu0 %943
        %945 = vrot.lane.b32.xlu0 %v742, 64
        %v946 = vpop.permute.xlu0 %945
        %947 = vrot.lane.b32.xlu0 %v745, 64
        %v948 = vpop.permute.xlu0 %947
        %949 = vrot.lane.b32.xlu0 %v747, 64
        %v950 = vpop.permute.xlu0 %949
        %951 = vrot.lane.b32.xlu0 %v750, 64
        %v952 = vpop.permute.xlu0 %951
        %953 = vrot.lane.b32.xlu0 %v752, 64
        %v954 = vpop.permute.xlu0 %953
        %955 = vrot.lane.b32.xlu0 %v755, 64
        %v956 = vpop.permute.xlu0 %955
        %957 = vrot.lane.b32.xlu0 %v757, 64
        %v958 = vpop.permute.xlu0 %957
        %959 = vrot.lane.b32.xlu0 %v760, 64
        %v960 = vpop.permute.xlu0 %959
        %961 = vrot.lane.b32.xlu0 %v762, 64
        %v962 = vpop.permute.xlu0 %961
        %963 = vrot.lane.b32.xlu0 %v765, 64
        %v964 = vpop.permute.xlu0 %963
        %965 = vrot.lane.b32.xlu0 %v767, 64
        %v966 = vpop.permute.xlu0 %965
        %998 = vrot.lane.b32.xlu0 %v549, 96
        %v999 = vpop.permute.xlu0 %998
        %1000 = vrot.lane.b32.xlu0 %v456, 96
        %v1001 = vpop.permute.xlu0 %1000
        %1002 = vrot.lane.b32.xlu0 %v550, 96
        %v1003 = vpop.permute.xlu0 %1002
        %1004 = vrot.lane.b32.xlu0 %v459, 96
        %v1005 = vpop.permute.xlu0 %1004
        %1006 = vrot.lane.b32.xlu0 %v551, 96
        %v1007 = vpop.permute.xlu0 %1006
        %1008 = vrot.lane.b32.xlu0 %v462, 96
        %v1009 = vpop.permute.xlu0 %1008
        %1010 = vrot.lane.b32.xlu0 %v552, 96
        %v1011 = vpop.permute.xlu0 %1010
        %1012 = vrot.lane.b32.xlu0 %v465, 96
        %v1013 = vpop.permute.xlu0 %1012
        %1014 = vrot.lane.b32.xlu0 %v553, 96
        %v1015 = vpop.permute.xlu0 %1014
        %1016 = vrot.lane.b32.xlu0 %v468, 96
        %v1017 = vpop.permute.xlu0 %1016
        %1018 = vrot.lane.b32.xlu0 %v554, 96
        %v1019 = vpop.permute.xlu0 %1018
        %1020 = vrot.lane.b32.xlu0 %v471, 96
        %v1021 = vpop.permute.xlu0 %1020
        %1022 = vrot.lane.b32.xlu0 %v555, 96
        %v1023 = vpop.permute.xlu0 %1022
        %1024 = vrot.lane.b32.xlu0 %v474, 96
        %v1025 = vpop.permute.xlu0 %1024
        %1026 = vrot.lane.b32.xlu0 %v556, 96
        %v1027 = vpop.permute.xlu0 %1026
        %1028 = vrot.lane.b32.xlu0 %v477, 96
        %v1029 = vpop.permute.xlu0 %1028
        %1030 = vrot.lane.b32.xlu0 %v557, 96
        %v1031 = vpop.permute.xlu0 %1030
        %1032 = vrot.lane.b32.xlu0 %v480, 96
        %v1033 = vpop.permute.xlu0 %1032
        %1034 = vrot.lane.b32.xlu0 %v558, 96
        %v1035 = vpop.permute.xlu0 %1034
        %1036 = vrot.lane.b32.xlu0 %v483, 96
        %v1037 = vpop.permute.xlu0 %1036
        %1038 = vrot.lane.b32.xlu0 %v559, 96
        %v1039 = vpop.permute.xlu0 %1038
        %1040 = vrot.lane.b32.xlu0 %v486, 96
        %v1041 = vpop.permute.xlu0 %1040
        %1042 = vrot.lane.b32.xlu0 %v560, 96
        %v1043 = vpop.permute.xlu0 %1042
        %1044 = vrot.lane.b32.xlu0 %v489, 96
        %v1045 = vpop.permute.xlu0 %1044
        %1046 = vrot.lane.b32.xlu0 %v561, 96
        %v1047 = vpop.permute.xlu0 %1046
        %1048 = vrot.lane.b32.xlu0 %v492, 96
        %v1049 = vpop.permute.xlu0 %1048
        %1050 = vrot.lane.b32.xlu0 %v562, 96
        %v1051 = vpop.permute.xlu0 %1050
        %1052 = vrot.lane.b32.xlu0 %v495, 96
        %v1053 = vpop.permute.xlu0 %1052
        %1054 = vrot.lane.b32.xlu0 %v563, 96
        %v1055 = vpop.permute.xlu0 %1054
        %1056 = vrot.lane.b32.xlu0 %v498, 96
        %v1057 = vpop.permute.xlu0 %1056
        %1058 = vrot.lane.b32.xlu0 %v564, 96
        %v1059 = vpop.permute.xlu0 %1058
        %1060 = vrot.lane.b32.xlu0 %v501, 96
        %v1061 = vpop.permute.xlu0 %1060
        %1094 = vrot.lane.b32.xlu0 %v695, 32
        %v1095 = vpop.permute.xlu0 %1094
        %1096 = vrot.lane.b32.xlu0 %v697, 32
        %v1097 = vpop.permute.xlu0 %1096
        %1098 = vrot.lane.b32.xlu0 %v700, 32
        %v1099 = vpop.permute.xlu0 %1098
        %1100 = vrot.lane.b32.xlu0 %v702, 32
        %v1101 = vpop.permute.xlu0 %1100
        %1102 = vrot.lane.b32.xlu0 %v705, 32
        %v1103 = vpop.permute.xlu0 %1102
        %1104 = vrot.lane.b32.xlu0 %v707, 32
        %v1105 = vpop.permute.xlu0 %1104
        %1106 = vrot.lane.b32.xlu0 %v710, 32
        %v1107 = vpop.permute.xlu0 %1106
        %1108 = vrot.lane.b32.xlu0 %v712, 32
        %v1109 = vpop.permute.xlu0 %1108
        %1110 = vrot.lane.b32.xlu0 %v715, 32
        %v1111 = vpop.permute.xlu0 %1110
        %1112 = vrot.lane.b32.xlu0 %v717, 32
        %v1113 = vpop.permute.xlu0 %1112
        %1114 = vrot.lane.b32.xlu0 %v720, 32
        %v1115 = vpop.permute.xlu0 %1114
        %1116 = vrot.lane.b32.xlu0 %v722, 32
        %v1117 = vpop.permute.xlu0 %1116
        %1118 = vrot.lane.b32.xlu0 %v725, 32
        %v1119 = vpop.permute.xlu0 %1118
        %1120 = vrot.lane.b32.xlu0 %v727, 32
        %v1121 = vpop.permute.xlu0 %1120
        %1122 = vrot.lane.b32.xlu0 %v730, 32
        %v1123 = vpop.permute.xlu0 %1122
        %1124 = vrot.lane.b32.xlu0 %v732, 32
        %v1125 = vpop.permute.xlu0 %1124
        %1126 = vrot.lane.b32.xlu0 %v735, 32
        %v1127 = vpop.permute.xlu0 %1126
        %1128 = vrot.lane.b32.xlu0 %v737, 32
        %v1129 = vpop.permute.xlu0 %1128
        %1130 = vrot.lane.b32.xlu0 %v740, 32
        %v1131 = vpop.permute.xlu0 %1130
        %1132 = vrot.lane.b32.xlu0 %v742, 32
        %v1133 = vpop.permute.xlu0 %1132
        %1134 = vrot.lane.b32.xlu0 %v745, 32
        %v1135 = vpop.permute.xlu0 %1134
        %1136 = vrot.lane.b32.xlu0 %v747, 32
        %v1137 = vpop.permute.xlu0 %1136
        %1138 = vrot.lane.b32.xlu0 %v750, 32
        %v1139 = vpop.permute.xlu0 %1138
        %1140 = vrot.lane.b32.xlu0 %v752, 32
        %v1141 = vpop.permute.xlu0 %1140
        %1142 = vrot.lane.b32.xlu0 %v755, 32
        %v1143 = vpop.permute.xlu0 %1142
        %1144 = vrot.lane.b32.xlu0 %v757, 32
        %v1145 = vpop.permute.xlu0 %1144
        %1146 = vrot.lane.b32.xlu0 %v760, 32
        %v1147 = vpop.permute.xlu0 %1146
        %1148 = vrot.lane.b32.xlu0 %v762, 32
        %v1149 = vpop.permute.xlu0 %1148
        %1150 = vrot.lane.b32.xlu0 %v765, 32
        %v1151 = vpop.permute.xlu0 %1150
        %1152 = vrot.lane.b32.xlu0 %v767, 32
        %v1153 = vpop.permute.xlu0 %1152
        %1154 = vrot.lane.b32.xlu0 %v809, 32
        %v1155 = vpop.permute.xlu0 %1154
        %1156 = vrot.lane.b32.xlu0 %v811, 32
        %v1157 = vpop.permute.xlu0 %1156
        %1190 = vrot.lane.b32.xlu0 %v550, 64
        %v1191 = vpop.permute.xlu0 %1190
        %1192 = vrot.lane.b32.xlu0 %v459, 64
        %v1193 = vpop.permute.xlu0 %1192
        %1194 = vrot.lane.b32.xlu0 %v551, 64
        %v1195 = vpop.permute.xlu0 %1194
        %1196 = vrot.lane.b32.xlu0 %v462, 64
        %v1197 = vpop.permute.xlu0 %1196
        %1198 = vrot.lane.b32.xlu0 %v552, 64
        %v1199 = vpop.permute.xlu0 %1198
        %1200 = vrot.lane.b32.xlu0 %v465, 64
        %v1201 = vpop.permute.xlu0 %1200
        %1202 = vrot.lane.b32.xlu0 %v553, 64
        %v1203 = vpop.permute.xlu0 %1202
        %1204 = vrot.lane.b32.xlu0 %v468, 64
        %v1205 = vpop.permute.xlu0 %1204
        %1206 = vrot.lane.b32.xlu0 %v554, 64
        %v1207 = vpop.permute.xlu0 %1206
        %1208 = vrot.lane.b32.xlu0 %v471, 64
        %v1209 = vpop.permute.xlu0 %1208
        %1210 = vrot.lane.b32.xlu0 %v555, 64
        %v1211 = vpop.permute.xlu0 %1210
        %1212 = vrot.lane.b32.xlu0 %v474, 64
        %v1213 = vpop.permute.xlu0 %1212
        %1214 = vrot.lane.b32.xlu0 %v556, 64
        %v1215 = vpop.permute.xlu0 %1214
        %1216 = vrot.lane.b32.xlu0 %v477, 64
        %v1217 = vpop.permute.xlu0 %1216
        %1218 = vrot.lane.b32.xlu0 %v557, 64
        %v1219 = vpop.permute.xlu0 %1218
        %1220 = vrot.lane.b32.xlu0 %v480, 64
        %v1221 = vpop.permute.xlu0 %1220
        %1222 = vrot.lane.b32.xlu0 %v558, 64
        %v1223 = vpop.permute.xlu0 %1222
        %1224 = vrot.lane.b32.xlu0 %v483, 64
        %v1225 = vpop.permute.xlu0 %1224
        %1226 = vrot.lane.b32.xlu0 %v559, 64
        %v1227 = vpop.permute.xlu0 %1226
        %1228 = vrot.lane.b32.xlu0 %v486, 64
        %v1229 = vpop.permute.xlu0 %1228
        %1230 = vrot.lane.b32.xlu0 %v560, 64
        %v1231 = vpop.permute.xlu0 %1230
        %1232 = vrot.lane.b32.xlu0 %v489, 64
        %v1233 = vpop.permute.xlu0 %1232
        %1234 = vrot.lane.b32.xlu0 %v561, 64
        %v1235 = vpop.permute.xlu0 %1234
        %1236 = vrot.lane.b32.xlu0 %v492, 64
        %v1237 = vpop.permute.xlu0 %1236
        %1238 = vrot.lane.b32.xlu0 %v562, 64
        %v1239 = vpop.permute.xlu0 %1238
        %1240 = vrot.lane.b32.xlu0 %v495, 64
        %v1241 = vpop.permute.xlu0 %1240
        %1242 = vrot.lane.b32.xlu0 %v563, 64
        %v1243 = vpop.permute.xlu0 %1242
        %1244 = vrot.lane.b32.xlu0 %v498, 64
        %v1245 = vpop.permute.xlu0 %1244
        %1246 = vrot.lane.b32.xlu0 %v564, 64
        %v1247 = vpop.permute.xlu0 %1246
        %1248 = vrot.lane.b32.xlu0 %v501, 64
        %v1249 = vpop.permute.xlu0 %1248
        %1250 = vrot.lane.b32.xlu0 0.0, 64
        %v1251 = vpop.permute.xlu0 %1250
        %1283 = vrot.lane.b32.xlu0 %v622, 96
        %v1284 = vpop.permute.xlu0 %1283
        %1285 = vrot.lane.b32.xlu0 %v624, 96
        %v1286 = vpop.permute.xlu0 %1285
        %1287 = vrot.lane.b32.xlu0 %v627, 96
        %v1288 = vpop.permute.xlu0 %1287
        %1289 = vrot.lane.b32.xlu0 %v629, 96
        %v1290 = vpop.permute.xlu0 %1289
        %1291 = vrot.lane.b32.xlu0 %v632, 96
        %v1292 = vpop.permute.xlu0 %1291
        %1293 = vrot.lane.b32.xlu0 %v634, 96
        %v1294 = vpop.permute.xlu0 %1293
        %1295 = vrot.lane.b32.xlu0 %v637, 96
        %v1296 = vpop.permute.xlu0 %1295
        %1297 = vrot.lane.b32.xlu0 %v639, 96
        %v1298 = vpop.permute.xlu0 %1297
        %1299 = vrot.lane.b32.xlu0 %v642, 96
        %v1300 = vpop.permute.xlu0 %1299
        %1301 = vrot.lane.b32.xlu0 %v644, 96
        %v1302 = vpop.permute.xlu0 %1301
        %1303 = vrot.lane.b32.xlu0 %v647, 96
        %v1304 = vpop.permute.xlu0 %1303
        %1305 = vrot.lane.b32.xlu0 %v649, 96
        %v1306 = vpop.permute.xlu0 %1305
        %1307 = vrot.lane.b32.xlu0 %v652, 96
        %v1308 = vpop.permute.xlu0 %1307
        %1309 = vrot.lane.b32.xlu0 %v654, 96
        %v1310 = vpop.permute.xlu0 %1309
        %1311 = vrot.lane.b32.xlu0 %v657, 96
        %v1312 = vpop.permute.xlu0 %1311
        %1313 = vrot.lane.b32.xlu0 %v659, 96
        %v1314 = vpop.permute.xlu0 %1313
        %1315 = vrot.lane.b32.xlu0 %v662, 96
        %v1316 = vpop.permute.xlu0 %1315
        %1317 = vrot.lane.b32.xlu0 %v664, 96
        %v1318 = vpop.permute.xlu0 %1317
        %1319 = vrot.lane.b32.xlu0 %v667, 96
        %v1320 = vpop.permute.xlu0 %1319
        %1321 = vrot.lane.b32.xlu0 %v669, 96
        %v1322 = vpop.permute.xlu0 %1321
        %1323 = vrot.lane.b32.xlu0 %v672, 96
        %v1324 = vpop.permute.xlu0 %1323
        %1325 = vrot.lane.b32.xlu0 %v674, 96
        %v1326 = vpop.permute.xlu0 %1325
        %1327 = vrot.lane.b32.xlu0 %v677, 96
        %v1328 = vpop.permute.xlu0 %1327
        %1329 = vrot.lane.b32.xlu0 %v679, 96
        %v1330 = vpop.permute.xlu0 %1329
        %1331 = vrot.lane.b32.xlu0 %v682, 96
        %v1332 = vpop.permute.xlu0 %1331
        %1333 = vrot.lane.b32.xlu0 %v684, 96
        %v1334 = vpop.permute.xlu0 %1333
        %1335 = vrot.lane.b32.xlu0 %v687, 96
        %v1336 = vpop.permute.xlu0 %1335
        %1337 = vrot.lane.b32.xlu0 %v689, 96
        %v1338 = vpop.permute.xlu0 %1337
        %1339 = vrot.lane.b32.xlu0 %v772, 96
        %v1340 = vpop.permute.xlu0 %1339
        %1341 = vrot.lane.b32.xlu0 %v774, 96
        %v1342 = vpop.permute.xlu0 %1341
        %1343 = vrot.lane.b32.xlu0 %v614, 96
        %v1344 = vpop.permute.xlu0 %1343
        %vm1376 = vcmask 261120
        %v1377 = vsel %vm1376, 0.0, %v813
        %v1378 = vsel %vm1376, %v549, %v815
        %v1379 = vsel %vm1376, %v456, %v817
        %v1380 = vsel %vm1376, %v550, %v819
        %v1381 = vsel %vm1376, %v459, %v821
        %v1382 = vsel %vm1376, %v551, %v823
        %v1383 = vsel %vm1376, %v462, %v825
        %v1384 = vsel %vm1376, %v552, %v827
        %v1385 = vsel %vm1376, %v465, %v829
        %v1386 = vsel %vm1376, %v553, %v831
        %v1387 = vsel %vm1376, %v468, %v833
        %v1388 = vsel %vm1376, %v554, %v835
        %v1389 = vsel %vm1376, %v471, %v837
        %v1390 = vsel %vm1376, %v555, %v839
        %v1391 = vsel %vm1376, %v474, %v841
        %v1392 = vsel %vm1376, %v556, %v843
        %v1393 = vsel %vm1376, %v477, %v845
        %v1394 = vsel %vm1376, %v557, %v847
        %v1395 = vsel %vm1376, %v480, %v849
        %v1396 = vsel %vm1376, %v558, %v851
        %v1397 = vsel %vm1376, %v483, %v853
        %v1398 = vsel %vm1376, %v559, %v855
        %v1399 = vsel %vm1376, %v486, %v857
        %v1400 = vsel %vm1376, %v560, %v859
        %v1401 = vsel %vm1376, %v489, %v861
        %v1402 = vsel %vm1376, %v561, %v863
        %v1403 = vsel %vm1376, %v492, %v865
        %v1404 = vsel %vm1376, %v562, %v867
        %v1405 = vsel %vm1376, %v495, %v869
        %v1406 = vsel %vm1376, %v563, %v871
        %v1407 = vsel %vm1376, %v498, %v873
        %vm1408 = vcmask 523264
        %v1409 = vsel %vm1408, %v1377, %v906
        %v1410 = vsel %vm1408, %v1378, %v908
        %v1411 = vsel %vm1408, %v1379, %v910
        %v1412 = vsel %vm1408, %v1380, %v912
        %v1413 = vsel %vm1408, %v1381, %v914
        %v1414 = vsel %vm1408, %v1382, %v916
        %v1415 = vsel %vm1408, %v1383, %v918
        %v1416 = vsel %vm1408, %v1384, %v920
        %v1417 = vsel %vm1408, %v1385, %v922
        %v1418 = vsel %vm1408, %v1386, %v924
        %v1419 = vsel %vm1408, %v1387, %v926
        %v1420 = vsel %vm1408, %v1388, %v928
        %v1421 = vsel %vm1408, %v1389, %v930
        %v1422 = vsel %vm1408, %v1390, %v932
        %v1423 = vsel %vm1408, %v1391, %v934
        %v1424 = vsel %vm1408, %v1392, %v936
        %v1425 = vsel %vm1408, %v1393, %v938
        %v1426 = vsel %vm1408, %v1394, %v940
        %v1427 = vsel %vm1408, %v1395, %v942
        %v1428 = vsel %vm1408, %v1396, %v944
        %v1429 = vsel %vm1408, %v1397, %v946
        %v1430 = vsel %vm1408, %v1398, %v948
        %v1431 = vsel %vm1408, %v1399, %v950
        %v1432 = vsel %vm1408, %v1400, %v952
        %v1433 = vsel %vm1408, %v1401, %v954
        %v1434 = vsel %vm1408, %v1402, %v956
        %v1435 = vsel %vm1408, %v1403, %v958
        %v1436 = vsel %vm1408, %v1404, %v960
        %v1437 = vsel %vm1408, %v1405, %v962
        %v1438 = vsel %vm1408, %v1406, %v964
        %v1439 = vsel %vm1408, %v1407, %v966
        %vm1440 = vcmask 785408
        %v1441 = vsel %vm1440, %v1409, %v999
        %v1442 = vsel %vm1440, %v1409, %v1001
        %v1443 = vsel %vm1440, %v1410, %v1003
        %v1444 = vsel %vm1440, %v1411, %v1005
        %v1445 = vsel %vm1440, %v1412, %v1007
        %v1446 = vsel %vm1440, %v1413, %v1009
        %v1447 = vsel %vm1440, %v1414, %v1011
        %v1448 = vsel %vm1440, %v1415, %v1013
        %v1449 = vsel %vm1440, %v1416, %v1015
        %v1450 = vsel %vm1440, %v1417, %v1017
        %v1451 = vsel %vm1440, %v1418, %v1019
        %v1452 = vsel %vm1440, %v1419, %v1021
        %v1453 = vsel %vm1440, %v1420, %v1023
        %v1454 = vsel %vm1440, %v1421, %v1025
        %v1455 = vsel %vm1440, %v1422, %v1027
        %v1456 = vsel %vm1440, %v1423, %v1029
        %v1457 = vsel %vm1440, %v1424, %v1031
        %v1458 = vsel %vm1440, %v1425, %v1033
        %v1459 = vsel %vm1440, %v1426, %v1035
        %v1460 = vsel %vm1440, %v1427, %v1037
        %v1461 = vsel %vm1440, %v1428, %v1039
        %v1462 = vsel %vm1440, %v1429, %v1041
        %v1463 = vsel %vm1440, %v1430, %v1043
        %v1464 = vsel %vm1440, %v1431, %v1045
        %v1465 = vsel %vm1440, %v1432, %v1047
        %v1466 = vsel %vm1440, %v1433, %v1049
        %v1467 = vsel %vm1440, %v1434, %v1051
        %v1468 = vsel %vm1440, %v1435, %v1053
        %v1469 = vsel %vm1440, %v1436, %v1055
        %v1470 = vsel %vm1440, %v1437, %v1057
        %v1471 = vsel %vm1440, %v1438, %v1059
        %v1472 = vsel %vm1440, %v1439, %v1061
        %v1473 = vsel %vm1376, %v617, %v1095
        %v1474 = vsel %vm1376, %v619, %v1097
        %v1475 = vsel %vm1376, %v622, %v1099
        %v1476 = vsel %vm1376, %v624, %v1101
        %v1477 = vsel %vm1376, %v627, %v1103
        %v1478 = vsel %vm1376, %v629, %v1105
        %v1479 = vsel %vm1376, %v632, %v1107
        %v1480 = vsel %vm1376, %v634, %v1109
        %v1481 = vsel %vm1376, %v637, %v1111
        %v1482 = vsel %vm1376, %v639, %v1113
        %v1483 = vsel %vm1376, %v642, %v1115
        %v1484 = vsel %vm1376, %v644, %v1117
        %v1485 = vsel %vm1376, %v647, %v1119
        %v1486 = vsel %vm1376, %v649, %v1121
        %v1487 = vsel %vm1376, %v652, %v1123
        %v1488 = vsel %vm1376, %v654, %v1125
        %v1489 = vsel %vm1376, %v657, %v1127
        %v1490 = vsel %vm1376, %v659, %v1129
        %v1491 = vsel %vm1376, %v662, %v1131
        %v1492 = vsel %vm1376, %v664, %v1133
        %v1493 = vsel %vm1376, %v667, %v1135
        %v1494 = vsel %vm1376, %v669, %v1137
        %v1495 = vsel %vm1376, %v672, %v1139
        %v1496 = vsel %vm1376, %v674, %v1141
        %v1497 = vsel %vm1376, %v677, %v1143
        %v1498 = vsel %vm1376, %v679, %v1145
        %v1499 = vsel %vm1376, %v682, %v1147
        %v1500 = vsel %vm1376, %v684, %v1149
        %v1501 = vsel %vm1376, %v687, %v1151
        %v1502 = vsel %vm1376, %v689, %v1153
        %v1503 = vsel %vm1376, %v772, %v1155
        %v1504 = vsel %vm1376, %v774, %v1157
        %v1505 = vsel %vm1408, %v1473, %v1191
        %v1506 = vsel %vm1408, %v1474, %v1193
        %v1507 = vsel %vm1408, %v1475, %v1195
        %v1508 = vsel %vm1408, %v1476, %v1197
        %v1509 = vsel %vm1408, %v1477, %v1199
        %v1510 = vsel %vm1408, %v1478, %v1201
        %v1511 = vsel %vm1408, %v1479, %v1203
        %v1512 = vsel %vm1408, %v1480, %v1205
        %v1513 = vsel %vm1408, %v1481, %v1207
        %v1514 = vsel %vm1408, %v1482, %v1209
        %v1515 = vsel %vm1408, %v1483, %v1211
        %v1516 = vsel %vm1408, %v1484, %v1213
        %v1517 = vsel %vm1408, %v1485, %v1215
        %v1518 = vsel %vm1408, %v1486, %v1217
        %v1519 = vsel %vm1408, %v1487, %v1219
        %v1520 = vsel %vm1408, %v1488, %v1221
        %v1521 = vsel %vm1408, %v1489, %v1223
        %v1522 = vsel %vm1408, %v1490, %v1225
        %v1523 = vsel %vm1408, %v1491, %v1227
        %v1524 = vsel %vm1408, %v1492, %v1229
        %v1525 = vsel %vm1408, %v1493, %v1231
        %v1526 = vsel %vm1408, %v1494, %v1233
        %v1527 = vsel %vm1408, %v1495, %v1235
        %v1528 = vsel %vm1408, %v1496, %v1237
        %v1529 = vsel %vm1408, %v1497, %v1239
        %v1530 = vsel %vm1408, %v1498, %v1241
        %v1531 = vsel %vm1408, %v1499, %v1243
        %v1532 = vsel %vm1408, %v1500, %v1245
        %v1533 = vsel %vm1408, %v1501, %v1247
        %v1534 = vsel %vm1408, %v1502, %v1249
        %v1535 = vsel %vm1408, %v1503, %v1251
        %v1536 = vsel %vm1408, %v1504, %v1251
        %v1537 = vsel %vm1440, %v1505, %v1284
        %v1538 = vsel %vm1440, %v1506, %v1286
        %v1539 = vsel %vm1440, %v1507, %v1288
        %v1540 = vsel %vm1440, %v1508, %v1290
        %v1541 = vsel %vm1440, %v1509, %v1292
        %v1542 = vsel %vm1440, %v1510, %v1294
        %v1543 = vsel %vm1440, %v1511, %v1296
        %v1544 = vsel %vm1440, %v1512, %v1298
        %v1545 = vsel %vm1440, %v1513, %v1300
        %v1546 = vsel %vm1440, %v1514, %v1302
        %v1547 = vsel %vm1440, %v1515, %v1304
        %v1548 = vsel %vm1440, %v1516, %v1306
        %v1549 = vsel %vm1440, %v1517, %v1308
        %v1550 = vsel %vm1440, %v1518, %v1310
        %v1551 = vsel %vm1440, %v1519, %v1312
        %v1552 = vsel %vm1440, %v1520, %v1314
        %v1553 = vsel %vm1440, %v1521, %v1316
        %v1554 = vsel %vm1440, %v1522, %v1318
        %v1555 = vsel %vm1440, %v1523, %v1320
        %v1556 = vsel %vm1440, %v1524, %v1322
        %v1557 = vsel %vm1440, %v1525, %v1324
        %v1558 = vsel %vm1440, %v1526, %v1326
        %v1559 = vsel %vm1440, %v1527, %v1328
        %v1560 = vsel %vm1440, %v1528, %v1330
        %v1561 = vsel %vm1440, %v1529, %v1332
        %v1562 = vsel %vm1440, %v1530, %v1334
        %v1563 = vsel %vm1440, %v1531, %v1336
        %v1564 = vsel %vm1440, %v1532, %v1338
        %v1565 = vsel %vm1440, %v1533, %v1340
        %v1566 = vsel %vm1440, %v1534, %v1342
        %v1567 = vsel %vm1440, %v1535, %v1344
        %v1568 = vsel %vm1440, %v1536, %v1344
        %v1569 = vld [vmem:[%s2] sm:$0xff]
        %v1570 = vld [vmem:[%s2 + $0x8] sm:$0xff]
        %v1571 = vld [vmem:[%s2 + $0x10] sm:$0xff]
        %v1572 = vld [vmem:[%s2 + $0x18] sm:$0xff]
        %v1573 = vld [vmem:[%s2 + $0x20] sm:$0xff]
        %v1574 = vld [vmem:[%s2 + $0x28] sm:$0xff]
        %v1575 = vld [vmem:[%s2 + $0x30] sm:$0xff]
        %v1576 = vld [vmem:[%s2 + $0x38] sm:$0xff]
        %v1577 = vld [vmem:[%s2 + $0x40] sm:$0xff]
        %v1578 = vld [vmem:[%s2 + $0x48] sm:$0xff]
        %v1579 = vld [vmem:[%s2 + $0x50] sm:$0xff]
        %v1580 = vld [vmem:[%s2 + $0x58] sm:$0xff]
        %v1581 = vld [vmem:[%s2 + $0x60] sm:$0xff]
        %v1582 = vld [vmem:[%s2 + $0x68] sm:$0xff]
        %v1583 = vld [vmem:[%s2 + $0x70] sm:$0xff]
        %v1584 = vld [vmem:[%s2 + $0x78] sm:$0xff]
        %v1585 = vld [vmem:[%s2 + $0x80] sm:$0xff]
        %v1586 = vld [vmem:[%s2 + $0x88] sm:$0xff]
        %v1587 = vld [vmem:[%s2 + $0x90] sm:$0xff]
        %v1588 = vld [vmem:[%s2 + $0x98] sm:$0xff]
        %v1589 = vld [vmem:[%s2 + $0xa0] sm:$0xff]
        %v1590 = vld [vmem:[%s2 + $0xa8] sm:$0xff]
        %v1591 = vld [vmem:[%s2 + $0xb0] sm:$0xff]
        %v1592 = vld [vmem:[%s2 + $0xb8] sm:$0xff]
        %v1593 = vld [vmem:[%s2 + $0xc0] sm:$0xff]
        %v1594 = vld [vmem:[%s2 + $0xc8] sm:$0xff]
        %v1595 = vld [vmem:[%s2 + $0xd0] sm:$0xff]
        %v1596 = vld [vmem:[%s2 + $0xd8] sm:$0xff]
        %v1597 = vld [vmem:[%s2 + $0xe0] sm:$0xff]
        %v1598 = vld [vmem:[%s2 + $0xe8] sm:$0xff]
        %v1599 = vld [vmem:[%s2 + $0xf0] sm:$0xff]
        %v1600 = vld [vmem:[%s2 + $0xf8] sm:$0xff]
        %v1601 = vld [vmem:[%s2 + $0x100] sm:$0xff]
        %v1602 = vld [vmem:[%s2 + $0x108] sm:$0xff]
        %v1603 = vld [vmem:[%s2 + $0x110] sm:$0xff]
        %v1604 = vld [vmem:[%s2 + $0x118] sm:$0xff]
        %v1605 = vld [vmem:[%s3] sm:$0x1]
        %v1607 = vperm.slane %v1605, 0
        %v1609 = vsel %vm1376, %v700, 0
        %v1611 = vsel %vm1376, %v702, 0
        %v1613 = vsel %vm1376, %v705, 0
        %v1615 = vsel %vm1376, %v707, 0
        %v1617 = vsel %vm1376, %v710, 0
        %v1619 = vsel %vm1376, %v712, 0
        %v1621 = vsel %vm1376, %v715, 0
        %v1623 = vsel %vm1376, %v717, 0
        %v1625 = vsel %vm1376, %v720, 0
        %v1627 = vsel %vm1376, %v722, 0
        %v1629 = vsel %vm1376, %v725, 0
        %v1631 = vsel %vm1376, %v727, 0
        %v1633 = vsel %vm1376, %v730, 0
        %v1635 = vsel %vm1376, %v732, 0
        %v1637 = vsel %vm1376, %v735, 0
        %v1639 = vsel %vm1376, %v737, 0
        %v1641 = vsel %vm1376, %v740, 0
        %v1643 = vsel %vm1376, %v742, 0
        %v1645 = vsel %vm1376, %v745, 0
        %v1647 = vsel %vm1376, %v747, 0
        %v1649 = vsel %vm1376, %v750, 0
        %v1651 = vsel %vm1376, %v752, 0
        %v1653 = vsel %vm1376, %v755, 0
        %v1655 = vsel %vm1376, %v757, 0
        %v1657 = vsel %vm1376, %v760, 0
        %v1659 = vsel %vm1376, %v762, 0
        %v1661 = vsel %vm1376, %v765, 0
        %v1663 = vsel %vm1376, %v767, 0
        %v1665 = vsel %vm1376, %v809, 0
        %v1667 = vsel %vm1376, %v811, 0
        %v1669 = vsel %vm1376, %v692, 0
        %1671 = vmatpush.msra.mxu0 %v1584
        %1672 = vmatpush.msra.mxu0 %v1583
        %1673 = vmatpush.msra.mxu0 %v1582
        %1674 = vmatpush.msra.mxu0 %v1581
        %1675 = vmatpush.msra.mxu0 %v1580
        %1676 = vmatpush.msra.mxu0 %v1579
        %1677 = vmatpush.msra.mxu0 %v1578
        %1678 = vmatpush.msra.mxu0 %v1577
        %1679 = vmatpush.msra.mxu0 %v1576
        %1680 = vmatpush.msra.mxu0 %v1575
        %1681 = vmatpush.msra.mxu0 %v1574
        %1682 = vmatpush.msra.mxu0 %v1573
        %1683 = vmatpush.msra.mxu0 %v1572
        %1684 = vmatpush.msra.mxu0 %v1571
        %1685 = vmatpush.msra.mxu0 %v1570
        %1686 = vmatpush.msra.mxu0 %v1569
        %1687 = vmatmul.f32.gmra.mxu0 %v1441
        %v1688 = vpop.f32.mrf.mxu0
        %v1689 = vadd.f32 %v1607, %v1688
        %1690 = vmatmul.f32.gmra.mxu0 %v1442
        %v1691 = vpop.f32.mrf.mxu0
        %v1692 = vadd.f32 %v1607, %v1691
        %1693 = vmatmul.f32.gmra.mxu0 %v1443
        %v1694 = vpop.f32.mrf.mxu0
        %v1695 = vadd.f32 %v1607, %v1694
        %1696 = vmatmul.f32.gmra.mxu0 %v1444
        %v1697 = vpop.f32.mrf.mxu0
        %v1698 = vadd.f32 %v1607, %v1697
        %1699 = vmatmul.f32.gmra.mxu0 %v1445
        %v1700 = vpop.f32.mrf.mxu0
        %v1701 = vadd.f32 %v1607, %v1700
        %1702 = vmatmul.f32.gmra.mxu0 %v1446
        %v1703 = vpop.f32.mrf.mxu0
        %v1704 = vadd.f32 %v1607, %v1703
        %1705 = vmatmul.f32.gmra.mxu0 %v1447
        %v1706 = vpop.f32.mrf.mxu0
        %v1707 = vadd.f32 %v1607, %v1706
        %1708 = vmatmul.f32.gmra.mxu0 %v1448
        %v1709 = vpop.f32.mrf.mxu0
        %v1710 = vadd.f32 %v1607, %v1709
        %1711 = vmatmul.f32.gmra.mxu0 %v1449
        %v1712 = vpop.f32.mrf.mxu0
        %v1713 = vadd.f32 %v1607, %v1712
        %1714 = vmatmul.f32.gmra.mxu0 %v1450
        %v1715 = vpop.f32.mrf.mxu0
        %v1716 = vadd.f32 %v1607, %v1715
        %1717 = vmatmul.f32.gmra.mxu0 %v1451
        %v1718 = vpop.f32.mrf.mxu0
        %v1719 = vadd.f32 %v1607, %v1718
        %1720 = vmatmul.f32.gmra.mxu0 %v1452
        %v1721 = vpop.f32.mrf.mxu0
        %v1722 = vadd.f32 %v1607, %v1721
        %1723 = vmatmul.f32.gmra.mxu0 %v1453
        %v1724 = vpop.f32.mrf.mxu0
        %v1725 = vadd.f32 %v1607, %v1724
        %1726 = vmatmul.f32.gmra.mxu0 %v1454
        %v1727 = vpop.f32.mrf.mxu0
        %v1728 = vadd.f32 %v1607, %v1727
        %1729 = vmatmul.f32.gmra.mxu0 %v1455
        %v1730 = vpop.f32.mrf.mxu0
        %v1731 = vadd.f32 %v1607, %v1730
        %1732 = vmatmul.f32.gmra.mxu0 %v1456
        %v1733 = vpop.f32.mrf.mxu0
        %v1734 = vadd.f32 %v1607, %v1733
        %1735 = vmatmul.f32.gmra.mxu0 %v1457
        %v1736 = vpop.f32.mrf.mxu0
        %v1737 = vadd.f32 %v1607, %v1736
        %1738 = vmatmul.f32.gmra.mxu0 %v1458
        %v1739 = vpop.f32.mrf.mxu0
        %v1740 = vadd.f32 %v1607, %v1739
        %1741 = vmatmul.f32.gmra.mxu0 %v1459
        %v1742 = vpop.f32.mrf.mxu0
        %v1743 = vadd.f32 %v1607, %v1742
        %1744 = vmatmul.f32.gmra.mxu0 %v1460
        %v1745 = vpop.f32.mrf.mxu0
        %v1746 = vadd.f32 %v1607, %v1745
        %1747 = vmatmul.f32.gmra.mxu0 %v1461
        %v1748 = vpop.f32.mrf.mxu0
        %v1749 = vadd.f32 %v1607, %v1748
        %1750 = vmatmul.f32.gmra.mxu0 %v1462
        %v1751 = vpop.f32.mrf.mxu0
        %v1752 = vadd.f32 %v1607, %v1751
        %1753 = vmatmul.f32.gmra.mxu0 %v1463
        %v1754 = vpop.f32.mrf.mxu0
        %v1755 = vadd.f32 %v1607, %v1754
        %1756 = vmatmul.f32.gmra.mxu0 %v1464
        %v1757 = vpop.f32.mrf.mxu0
        %v1758 = vadd.f32 %v1607, %v1757
        %1759 = vmatmul.f32.gmra.mxu0 %v1465
        %v1760 = vpop.f32.mrf.mxu0
        %v1761 = vadd.f32 %v1607, %v1760
        %1762 = vmatmul.f32.gmra.mxu0 %v1466
        %v1763 = vpop.f32.mrf.mxu0
        %v1764 = vadd.f32 %v1607, %v1763
        %1765 = vmatmul.f32.gmra.mxu0 %v1467
        %v1766 = vpop.f32.mrf.mxu0
        %v1767 = vadd.f32 %v1607, %v1766
        %1768 = vmatmul.f32.gmra.mxu0 %v1468
        %v1769 = vpop.f32.mrf.mxu0
        %v1770 = vadd.f32 %v1607, %v1769
        %1771 = vmatmul.f32.gmra.mxu0 %v1469
        %v1772 = vpop.f32.mrf.mxu0
        %v1773 = vadd.f32 %v1607, %v1772
        %1774 = vmatmul.f32.gmra.mxu0 %v1470
        %v1775 = vpop.f32.mrf.mxu0
        %v1776 = vadd.f32 %v1607, %v1775
        %1777 = vmatmul.f32.gmra.mxu0 %v1471
        %v1778 = vpop.f32.mrf.mxu0
        %v1779 = vadd.f32 %v1607, %v1778
        %1780 = vmatmul.f32.gmra.mxu0 %v1472
        %v1781 = vpop.f32.mrf.mxu0
        %v1782 = vadd.f32 %v1607, %v1781
        %1783 = vdwg.mxu0
        %1784 = vmatpush.msra.mxu0 %v1600
        %1785 = vmatpush.msra.mxu0 %v1599
        %1786 = vmatpush.msra.mxu0 %v1598
        %1787 = vmatpush.msra.mxu0 %v1597
        %1788 = vmatpush.msra.mxu0 %v1596
        %1789 = vmatpush.msra.mxu0 %v1595
        %1790 = vmatpush.msra.mxu0 %v1594
        %1791 = vmatpush.msra.mxu0 %v1593
        %1792 = vmatpush.msra.mxu0 %v1592
        %1793 = vmatpush.msra.mxu0 %v1591
        %1794 = vmatpush.msra.mxu0 %v1590
        %1795 = vmatpush.msra.mxu0 %v1589
        %1796 = vmatpush.msra.mxu0 %v1588
        %1797 = vmatpush.msra.mxu0 %v1587
        %1798 = vmatpush.msra.mxu0 %v1586
        %1799 = vmatpush.msra.mxu0 %v1585
        %1800 = vmatmul.f32.gmra.mxu0 %v1537
        %v1801 = vpop.f32.mrf.mxu0
        %v1802 = vadd.f32 %v1689, %v1801
        %1803 = vmatmul.f32.gmra.mxu0 %v1538
        %v1804 = vpop.f32.mrf.mxu0
        %v1805 = vadd.f32 %v1692, %v1804
        %1806 = vmatmul.f32.gmra.mxu0 %v1539
        %v1807 = vpop.f32.mrf.mxu0
        %v1808 = vadd.f32 %v1695, %v1807
        %1809 = vmatmul.f32.gmra.mxu0 %v1540
        %v1810 = vpop.f32.mrf.mxu0
        %v1811 = vadd.f32 %v1698, %v1810
        %1812 = vmatmul.f32.gmra.mxu0 %v1541
        %v1813 = vpop.f32.mrf.mxu0
        %v1814 = vadd.f32 %v1701, %v1813
        %1815 = vmatmul.f32.gmra.mxu0 %v1542
        %v1816 = vpop.f32.mrf.mxu0
        %v1817 = vadd.f32 %v1704, %v1816
        %1818 = vmatmul.f32.gmra.mxu0 %v1543
        %v1819 = vpop.f32.mrf.mxu0
        %v1820 = vadd.f32 %v1707, %v1819
        %1821 = vmatmul.f32.gmra.mxu0 %v1544
        %v1822 = vpop.f32.mrf.mxu0
        %v1823 = vadd.f32 %v1710, %v1822
        %1824 = vmatmul.f32.gmra.mxu0 %v1545
        %v1825 = vpop.f32.mrf.mxu0
        %v1826 = vadd.f32 %v1713, %v1825
        %1827 = vmatmul.f32.gmra.mxu0 %v1546
        %v1828 = vpop.f32.mrf.mxu0
        %v1829 = vadd.f32 %v1716, %v1828
        %1830 = vmatmul.f32.gmra.mxu0 %v1547
        %v1831 = vpop.f32.mrf.mxu0
        %v1832 = vadd.f32 %v1719, %v1831
        %1833 = vmatmul.f32.gmra.mxu0 %v1548
        %v1834 = vpop.f32.mrf.mxu0
        %v1835 = vadd.f32 %v1722, %v1834
        %1836 = vmatmul.f32.gmra.mxu0 %v1549
        %v1837 = vpop.f32.mrf.mxu0
        %v1838 = vadd.f32 %v1725, %v1837
        %1839 = vmatmul.f32.gmra.mxu0 %v1550
        %v1840 = vpop.f32.mrf.mxu0
        %v1841 = vadd.f32 %v1728, %v1840
        %1842 = vmatmul.f32.gmra.mxu0 %v1551
        %v1843 = vpop.f32.mrf.mxu0
        %v1844 = vadd.f32 %v1731, %v1843
        %1845 = vmatmul.f32.gmra.mxu0 %v1552
        %v1846 = vpop.f32.mrf.mxu0
        %v1847 = vadd.f32 %v1734, %v1846
        %1848 = vmatmul.f32.gmra.mxu0 %v1553
        %v1849 = vpop.f32.mrf.mxu0
        %v1850 = vadd.f32 %v1737, %v1849
        %1851 = vmatmul.f32.gmra.mxu0 %v1554
        %v1852 = vpop.f32.mrf.mxu0
        %v1853 = vadd.f32 %v1740, %v1852
        %1854 = vmatmul.f32.gmra.mxu0 %v1555
        %v1855 = vpop.f32.mrf.mxu0
        %v1856 = vadd.f32 %v1743, %v1855
        %1857 = vmatmul.f32.gmra.mxu0 %v1556
        %v1858 = vpop.f32.mrf.mxu0
        %v1859 = vadd.f32 %v1746, %v1858
        %1860 = vmatmul.f32.gmra.mxu0 %v1557
        %v1861 = vpop.f32.mrf.mxu0
        %v1862 = vadd.f32 %v1749, %v1861
        %1863 = vmatmul.f32.gmra.mxu0 %v1558
        %v1864 = vpop.f32.mrf.mxu0
        %v1865 = vadd.f32 %v1752, %v1864
        %1866 = vmatmul.f32.gmra.mxu0 %v1559
        %v1867 = vpop.f32.mrf.mxu0
        %v1868 = vadd.f32 %v1755, %v1867
        %1869 = vmatmul.f32.gmra.mxu0 %v1560
        %v1870 = vpop.f32.mrf.mxu0
        %v1871 = vadd.f32 %v1758, %v1870
        %1872 = vmatmul.f32.gmra.mxu0 %v1561
        %v1873 = vpop.f32.mrf.mxu0
        %v1874 = vadd.f32 %v1761, %v1873
        %1875 = vmatmul.f32.gmra.mxu0 %v1562
        %v1876 = vpop.f32.mrf.mxu0
        %v1877 = vadd.f32 %v1764, %v1876
        %1878 = vmatmul.f32.gmra.mxu0 %v1563
        %v1879 = vpop.f32.mrf.mxu0
        %v1880 = vadd.f32 %v1767, %v1879
        %1881 = vmatmul.f32.gmra.mxu0 %v1564
        %v1882 = vpop.f32.mrf.mxu0
        %v1883 = vadd.f32 %v1770, %v1882
        %1884 = vmatmul.f32.gmra.mxu0 %v1565
        %v1885 = vpop.f32.mrf.mxu0
        %v1886 = vadd.f32 %v1773, %v1885
        %1887 = vmatmul.f32.gmra.mxu0 %v1566
        %v1888 = vpop.f32.mrf.mxu0
        %v1889 = vadd.f32 %v1776, %v1888
        %1890 = vmatmul.f32.gmra.mxu0 %v1567
        %v1891 = vpop.f32.mrf.mxu0
        %v1892 = vadd.f32 %v1779, %v1891
        %1893 = vmatmul.f32.gmra.mxu0 %v1568
        %v1894 = vpop.f32.mrf.mxu0
        %v1895 = vadd.f32 %v1782, %v1894
        %1896 = vdwg.mxu0
        %1897 = vmatpush.msra.mxu0 0.0
        %1898 = vmatpush.msra.mxu0 0.0
        %1899 = vmatpush.msra.mxu0 0.0
        %1900 = vmatpush.msra.mxu0 0.0
        %1901 = vmatpush.msra.mxu0 0.0
        %1902 = vmatpush.msra.mxu0 0.0
        %1903 = vmatpush.msra.mxu0 0.0
        %1904 = vmatpush.msra.mxu0 0.0
        %1905 = vmatpush.msra.mxu0 0.0
        %1906 = vmatpush.msra.mxu0 0.0
        %1907 = vmatpush.msra.mxu0 0.0
        %1908 = vmatpush.msra.mxu0 0.0
        %1909 = vmatpush.msra.mxu0 %v1604
        %1910 = vmatpush.msra.mxu0 %v1603
        %1911 = vmatpush.msra.mxu0 %v1602
        %1912 = vmatpush.msra.mxu0 %v1601
        %1913 = vmatmul.f32.gmra.mxu0 %v1609
        %v1914 = vpop.f32.mrf.mxu0
        %v1915 = vadd.f32 %v1802, %v1914
        %1916 = vmatmul.f32.gmra.mxu0 %v1611
        %v1917 = vpop.f32.mrf.mxu0
        %v1918 = vadd.f32 %v1805, %v1917
        %1919 = vmatmul.f32.gmra.mxu0 %v1613
        %v1920 = vpop.f32.mrf.mxu0
        %v1921 = vadd.f32 %v1808, %v1920
        %1922 = vmatmul.f32.gmra.mxu0 %v1615
        %v1923 = vpop.f32.mrf.mxu0
        %v1924 = vadd.f32 %v1811, %v1923
        %1925 = vmatmul.f32.gmra.mxu0 %v1617
        %v1926 = vpop.f32.mrf.mxu0
        %v1927 = vadd.f32 %v1814, %v1926
        %1928 = vmatmul.f32.gmra.mxu0 %v1619
        %v1929 = vpop.f32.mrf.mxu0
        %v1930 = vadd.f32 %v1817, %v1929
        %1931 = vmatmul.f32.gmra.mxu0 %v1621
        %v1932 = vpop.f32.mrf.mxu0
        %v1933 = vadd.f32 %v1820, %v1932
        %1934 = vmatmul.f32.gmra.mxu0 %v1623
        %v1935 = vpop.f32.mrf.mxu0
        %v1936 = vadd.f32 %v1823, %v1935
        %1937 = vmatmul.f32.gmra.mxu0 %v1625
        %v1938 = vpop.f32.mrf.mxu0
        %v1939 = vadd.f32 %v1826, %v1938
        %1940 = vmatmul.f32.gmra.mxu0 %v1627
        %v1941 = vpop.f32.mrf.mxu0
        %v1942 = vadd.f32 %v1829, %v1941
        %1943 = vmatmul.f32.gmra.mxu0 %v1629
        %v1944 = vpop.f32.mrf.mxu0
        %v1945 = vadd.f32 %v1832, %v1944
        %1946 = vmatmul.f32.gmra.mxu0 %v1631
        %v1947 = vpop.f32.mrf.mxu0
        %v1948 = vadd.f32 %v1835, %v1947
        %1949 = vmatmul.f32.gmra.mxu0 %v1633
        %v1950 = vpop.f32.mrf.mxu0
        %v1951 = vadd.f32 %v1838, %v1950
        %1952 = vmatmul.f32.gmra.mxu0 %v1635
        %v1953 = vpop.f32.mrf.mxu0
        %v1954 = vadd.f32 %v1841, %v1953
        %1955 = vmatmul.f32.gmra.mxu0 %v1637
        %v1956 = vpop.f32.mrf.mxu0
        %v1957 = vadd.f32 %v1844, %v1956
        %1958 = vmatmul.f32.gmra.mxu0 %v1639
        %v1959 = vpop.f32.mrf.mxu0
        %v1960 = vadd.f32 %v1847, %v1959
        %1961 = vmatmul.f32.gmra.mxu0 %v1641
        %v1962 = vpop.f32.mrf.mxu0
        %v1963 = vadd.f32 %v1850, %v1962
        %1964 = vmatmul.f32.gmra.mxu0 %v1643
        %v1965 = vpop.f32.mrf.mxu0
        %v1966 = vadd.f32 %v1853, %v1965
        %1967 = vmatmul.f32.gmra.mxu0 %v1645
        %v1968 = vpop.f32.mrf.mxu0
        %v1969 = vadd.f32 %v1856, %v1968
        %1970 = vmatmul.f32.gmra.mxu0 %v1647
        %v1971 = vpop.f32.mrf.mxu0
        %v1972 = vadd.f32 %v1859, %v1971
        %1973 = vmatmul.f32.gmra.mxu0 %v1649
        %v1974 = vpop.f32.mrf.mxu0
        %v1975 = vadd.f32 %v1862, %v1974
        %1976 = vmatmul.f32.gmra.mxu0 %v1651
        %v1977 = vpop.f32.mrf.mxu0
        %v1978 = vadd.f32 %v1865, %v1977
        %1979 = vmatmul.f32.gmra.mxu0 %v1653
        %v1980 = vpop.f32.mrf.mxu0
        %v1981 = vadd.f32 %v1868, %v1980
        %1982 = vmatmul.f32.gmra.mxu0 %v1655
        %v1983 = vpop.f32.mrf.mxu0
        %v1984 = vadd.f32 %v1871, %v1983
        %1985 = vmatmul.f32.gmra.mxu0 %v1657
        %v1986 = vpop.f32.mrf.mxu0
        %v1987 = vadd.f32 %v1874, %v1986
        %1988 = vmatmul.f32.gmra.mxu0 %v1659
        %v1989 = vpop.f32.mrf.mxu0
        %v1990 = vadd.f32 %v1877, %v1989
        %1991 = vmatmul.f32.gmra.mxu0 %v1661
        %v1992 = vpop.f32.mrf.mxu0
        %v1993 = vadd.f32 %v1880, %v1992
        %1994 = vmatmul.f32.gmra.mxu0 %v1663
        %v1995 = vpop.f32.mrf.mxu0
        %v1996 = vadd.f32 %v1883, %v1995
        %1997 = vmatmul.f32.gmra.mxu0 %v1665
        %v1998 = vpop.f32.mrf.mxu0
        %v1999 = vadd.f32 %v1886, %v1998
        %2000 = vmatmul.f32.gmra.mxu0 %v1667
        %v2001 = vpop.f32.mrf.mxu0
        %v2002 = vadd.f32 %v1889, %v2001
        %2003 = vmatmul.f32.gmra.mxu0 %v1669
        %v2004 = vpop.f32.mrf.mxu0
        %v2005 = vadd.f32 %v1892, %v2004
        %2006 = vmatmul.f32.gmra.mxu0 %v1669
        %v2007 = vpop.f32.mrf.mxu0
        %v2008 = vadd.f32 %v1895, %v2007
        %2009 = vdwg.mxu0
        %v2010 = vmax.f32 %v1915, 0.0
        %v2011 = vmax.f32 %v1918, 0.0
        %v2012 = vmax.f32 %v1921, 0.0
        %v2013 = vmax.f32 %v1924, 0.0
        %v2014 = vmax.f32 %v1927, 0.0
        %v2015 = vmax.f32 %v1930, 0.0
        %v2016 = vmax.f32 %v1933, 0.0
        %v2017 = vmax.f32 %v1936, 0.0
        %v2018 = vmax.f32 %v1939, 0.0
        %v2019 = vmax.f32 %v1942, 0.0
        %v2020 = vmax.f32 %v1945, 0.0
        %v2021 = vmax.f32 %v1948, 0.0
        %v2022 = vmax.f32 %v1951, 0.0
        %v2023 = vmax.f32 %v1954, 0.0
        %v2024 = vmax.f32 %v1957, 0.0
        %v2025 = vmax.f32 %v1960, 0.0
        %v2026 = vmax.f32 %v1963, 0.0
        %v2027 = vmax.f32 %v1966, 0.0
        %v2028 = vmax.f32 %v1969, 0.0
        %v2029 = vmax.f32 %v1972, 0.0
        %v2030 = vmax.f32 %v1975, 0.0
        %v2031 = vmax.f32 %v1978, 0.0
        %v2032 = vmax.f32 %v1981, 0.0
        %v2033 = vmax.f32 %v1984, 0.0
        %v2034 = vmax.f32 %v1987, 0.0
        %v2035 = vmax.f32 %v1990, 0.0
        %v2036 = vmax.f32 %v1993, 0.0
        %v2037 = vmax.f32 %v1996, 0.0
        %v2038 = vmax.f32 %v1999, 0.0
        %v2039 = vmax.f32 %v2002, 0.0
        %v2040 = vmax.f32 %v2005, 0.0
        %v2041 = vmax.f32 %v2008, 0.0
        %v2074 = vrot.slane %v2010, 7
        %v2075 = vrot.slane %v2011, 7
        %v2076 = vsel %vm453, %v2074, %v2075
        %v2077 = vrot.slane %v2012, 7
        %v2078 = vrot.slane %v2013, 7
        %v2079 = vsel %vm453, %v2077, %v2078
        %v2080 = vrot.slane %v2014, 7
        %v2081 = vrot.slane %v2015, 7
        %v2082 = vsel %vm453, %v2080, %v2081
        %v2083 = vrot.slane %v2016, 7
        %v2084 = vrot.slane %v2017, 7
        %v2085 = vsel %vm453, %v2083, %v2084
        %v2086 = vrot.slane %v2018, 7
        %v2087 = vrot.slane %v2019, 7
        %v2088 = vsel %vm453, %v2086, %v2087
        %v2089 = vrot.slane %v2020, 7
        %v2090 = vrot.slane %v2021, 7
        %v2091 = vsel %vm453, %v2089, %v2090
        %v2092 = vrot.slane %v2022, 7
        %v2093 = vrot.slane %v2023, 7
        %v2094 = vsel %vm453, %v2092, %v2093
        %v2095 = vrot.slane %v2024, 7
        %v2096 = vrot.slane %v2025, 7
        %v2097 = vsel %vm453, %v2095, %v2096
        %v2098 = vrot.slane %v2026, 7
        %v2099 = vrot.slane %v2027, 7
        %v2100 = vsel %vm453, %v2098, %v2099
        %v2101 = vrot.slane %v2028, 7
        %v2102 = vrot.slane %v2029, 7
        %v2103 = vsel %vm453, %v2101, %v2102
        %v2104 = vrot.slane %v2030, 7
        %v2105 = vrot.slane %v2031, 7
        %v2106 = vsel %vm453, %v2104, %v2105
        %v2107 = vrot.slane %v2032, 7
        %v2108 = vrot.slane %v2033, 7
        %v2109 = vsel %vm453, %v2107, %v2108
        %v2110 = vrot.slane %v2034, 7
        %v2111 = vrot.slane %v2035, 7
        %v2112 = vsel %vm453, %v2110, %v2111
        %v2113 = vrot.slane %v2036, 7
        %v2114 = vrot.slane %v2037, 7
        %v2115 = vsel %vm453, %v2113, %v2114
        %v2116 = vrot.slane %v2038, 7
        %v2117 = vrot.slane %v2039, 7
        %v2118 = vsel %vm453, %v2116, %v2117
        %v2119 = vrot.slane %v2040, 7
        %v2120 = vrot.slane %v2041, 7
        %v2121 = vsel %vm453, %v2119, %v2120
        %v2169 = vsel %vm453, 0.0, %v2074
        %v2170 = vsel %vm453, 0.0, %v2077
        %v2171 = vsel %vm453, 0.0, %v2080
        %v2172 = vsel %vm453, 0.0, %v2083
        %v2173 = vsel %vm453, 0.0, %v2086
        %v2174 = vsel %vm453, 0.0, %v2089
        %v2175 = vsel %vm453, 0.0, %v2092
        %v2176 = vsel %vm453, 0.0, %v2095
        %v2177 = vsel %vm453, 0.0, %v2098
        %v2178 = vsel %vm453, 0.0, %v2101
        %v2179 = vsel %vm453, 0.0, %v2104
        %v2180 = vsel %vm453, 0.0, %v2107
        %v2181 = vsel %vm453, 0.0, %v2110
        %v2182 = vsel %vm453, 0.0, %v2113
        %v2183 = vsel %vm453, 0.0, %v2116
        %v2184 = vsel %vm453, 0.0, %v2119
        %v2185 = vsel %vm453, %v2075, 0.0
        %v2186 = vsel %vm453, %v2078, 0.0
        %v2187 = vsel %vm453, %v2081, 0.0
        %v2188 = vsel %vm453, %v2084, 0.0
        %v2189 = vsel %vm453, %v2087, 0.0
        %v2190 = vsel %vm453, %v2090, 0.0
        %v2191 = vsel %vm453, %v2093, 0.0
        %v2192 = vsel %vm453, %v2096, 0.0
        %v2193 = vsel %vm453, %v2099, 0.0
        %v2194 = vsel %vm453, %v2102, 0.0
        %v2195 = vsel %vm453, %v2105, 0.0
        %v2196 = vsel %vm453, %v2108, 0.0
        %v2197 = vsel %vm453, %v2111, 0.0
        %v2198 = vsel %vm453, %v2114, 0.0
        %v2199 = vsel %vm453, %v2117, 0.0
        %v2200 = vsel %vm453, %v2120, 0.0
        %v2231 = vrot.slane %v2169, 1
        %v2232 = vrot.slane %v2076, 1
        %v2233 = vsel %vm612, %v2231, %v2232
        %v2234 = vrot.slane %v2185, 1
        %v2235 = vsel %vm612, %v2232, %v2234
        %v2236 = vrot.slane %v2170, 1
        %v2237 = vrot.slane %v2079, 1
        %v2238 = vsel %vm612, %v2236, %v2237
        %v2239 = vrot.slane %v2186, 1
        %v2240 = vsel %vm612, %v2237, %v2239
        %v2241 = vrot.slane %v2171, 1
        %v2242 = vrot.slane %v2082, 1
        %v2243 = vsel %vm612, %v2241, %v2242
        %v2244 = vrot.slane %v2187, 1
        %v2245 = vsel %vm612, %v2242, %v2244
        %v2246 = vrot.slane %v2172, 1
        %v2247 = vrot.slane %v2085, 1
        %v2248 = vsel %vm612, %v2246, %v2247
        %v2249 = vrot.slane %v2188, 1
        %v2250 = vsel %vm612, %v2247, %v2249
        %v2251 = vrot.slane %v2173, 1
        %v2252 = vrot.slane %v2088, 1
        %v2253 = vsel %vm612, %v2251, %v2252
        %v2254 = vrot.slane %v2189, 1
        %v2255 = vsel %vm612, %v2252, %v2254
        %v2256 = vrot.slane %v2174, 1
        %v2257 = vrot.slane %v2091, 1
        %v2258 = vsel %vm612, %v2256, %v2257
        %v2259 = vrot.slane %v2190, 1
        %v2260 = vsel %vm612, %v2257, %v2259
        %v2261 = vrot.slane %v2175, 1
        %v2262 = vrot.slane %v2094, 1
        %v2263 = vsel %vm612, %v2261, %v2262
        %v2264 = vrot.slane %v2191, 1
        %v2265 = vsel %vm612, %v2262, %v2264
        %v2266 = vrot.slane %v2176, 1
        %v2267 = vrot.slane %v2097, 1
        %v2268 = vsel %vm612, %v2266, %v2267
        %v2269 = vrot.slane %v2192, 1
        %v2270 = vsel %vm612, %v2267, %v2269
        %v2271 = vrot.slane %v2177, 1
        %v2272 = vrot.slane %v2100, 1
        %v2273 = vsel %vm612, %v2271, %v2272
        %v2274 = vrot.slane %v2193, 1
        %v2275 = vsel %vm612, %v2272, %v2274
        %v2276 = vrot.slane %v2178, 1
        %v2277 = vrot.slane %v2103, 1
        %v2278 = vsel %vm612, %v2276, %v2277
        %v2279 = vrot.slane %v2194, 1
        %v2280 = vsel %vm612, %v2277, %v2279
        %v2281 = vrot.slane %v2179, 1
        %v2282 = vrot.slane %v2106, 1
        %v2283 = vsel %vm612, %v2281, %v2282
        %v2284 = vrot.slane %v2195, 1
        %v2285 = vsel %vm612, %v2282, %v2284
        %v2286 = vrot.slane %v2180, 1
        %v2287 = vrot.slane %v2109, 1
        %v2288 = vsel %vm612, %v2286, %v2287
        %v2289 = vrot.slane %v2196, 1
        %v2290 = vsel %vm612, %v2287, %v2289
        %v2291 = vrot.slane %v2181, 1
        %v2292 = vrot.slane %v2112, 1
        %v2293 = vsel %vm612, %v2291, %v2292
        %v2294 = vrot.slane %v2197, 1
        %v2295 = vsel %vm612, %v2292, %v2294
        %v2296 = vrot.slane %v2182, 1
        %v2297 = vrot.slane %v2115, 1
        %v2298 = vsel %vm612, %v2296, %v2297
        %v2299 = vrot.slane %v2198, 1
        %v2300 = vsel %vm612, %v2297, %v2299
        %v2301 = vrot.slane %v2183, 1
        %v2302 = vrot.slane %v2118, 1
        %v2303 = vsel %vm612, %v2301, %v2302
        %v2304 = vrot.slane %v2199, 1
        %v2305 = vsel %vm612, %v2302, %v2304
        %v2306 = vrot.slane %v2169, 2
        %v2307 = vrot.slane %v2076, 2
        %v2308 = vsel %vm690, %v2306, %v2307
        %v2309 = vrot.slane %v2185, 2
        %v2310 = vsel %vm690, %v2307, %v2309
        %v2311 = vrot.slane %v2170, 2
        %v2312 = vrot.slane %v2079, 2
        %v2313 = vsel %vm690, %v2311, %v2312
        %v2314 = vrot.slane %v2186, 2
        %v2315 = vsel %vm690, %v2312, %v2314
        %v2316 = vrot.slane %v2171, 2
        %v2317 = vrot.slane %v2082, 2
        %v2318 = vsel %vm690, %v2316, %v2317
        %v2319 = vrot.slane %v2187, 2
        %v2320 = vsel %vm690, %v2317, %v2319
        %v2321 = vrot.slane %v2172, 2
        %v2322 = vrot.slane %v2085, 2
        %v2323 = vsel %vm690, %v2321, %v2322
        %v2324 = vrot.slane %v2188, 2
        %v2325 = vsel %vm690, %v2322, %v2324
        %v2326 = vrot.slane %v2173, 2
        %v2327 = vrot.slane %v2088, 2
        %v2328 = vsel %vm690, %v2326, %v2327
        %v2329 = vrot.slane %v2189, 2
        %v2330 = vsel %vm690, %v2327, %v2329
        %v2331 = vrot.slane %v2174, 2
        %v2332 = vrot.slane %v2091, 2
        %v2333 = vsel %vm690, %v2331, %v2332
        %v2334 = vrot.slane %v2190, 2
        %v2335 = vsel %vm690, %v2332, %v2334
        %v2336 = vrot.slane %v2175, 2
        %v2337 = vrot.slane %v2094, 2
        %v2338 = vsel %vm690, %v2336, %v2337
        %v2339 = vrot.slane %v2191, 2
        %v2340 = vsel %vm690, %v2337, %v2339
        %v2341 = vrot.slane %v2176, 2
        %v2342 = vrot.slane %v2097, 2
        %v2343 = vsel %vm690, %v2341, %v2342
        %v2344 = vrot.slane %v2192, 2
        %v2345 = vsel %vm690, %v2342, %v2344
        %v2346 = vrot.slane %v2177, 2
        %v2347 = vrot.slane %v2100, 2
        %v2348 = vsel %vm690, %v2346, %v2347
        %v2349 = vrot.slane %v2193, 2
        %v2350 = vsel %vm690, %v2347, %v2349
        %v2351 = vrot.slane %v2178, 2
        %v2352 = vrot.slane %v2103, 2
        %v2353 = vsel %vm690, %v2351, %v2352
        %v2354 = vrot.slane %v2194, 2
        %v2355 = vsel %vm690, %v2352, %v2354
        %v2356 = vrot.slane %v2179, 2
        %v2357 = vrot.slane %v2106, 2
        %v2358 = vsel %vm690, %v2356, %v2357
        %v2359 = vrot.slane %v2195, 2
        %v2360 = vsel %vm690, %v2357, %v2359
        %v2361 = vrot.slane %v2180, 2
        %v2362 = vrot.slane %v2109, 2
        %v2363 = vsel %vm690, %v2361, %v2362
        %v2364 = vrot.slane %v2196, 2
        %v2365 = vsel %vm690, %v2362, %v2364
        %v2366 = vrot.slane %v2181, 2
        %v2367 = vrot.slane %v2112, 2
        %v2368 = vsel %vm690, %v2366, %v2367
        %v2369 = vrot.slane %v2197, 2
        %v2370 = vsel %vm690, %v2367, %v2369
        %v2371 = vrot.slane %v2182, 2
        %v2372 = vrot.slane %v2115, 2
        %v2373 = vsel %vm690, %v2371, %v2372
        %v2374 = vrot.slane %v2198, 2
        %v2375 = vsel %vm690, %v2372, %v2374
        %v2376 = vrot.slane %v2183, 2
        %v2377 = vrot.slane %v2118, 2
        %v2378 = vsel %vm690, %v2376, %v2377
        %v2379 = vrot.slane %v2199, 2
        %v2380 = vsel %vm690, %v2377, %v2379
        %v2383 = vrot.slane %v2184, 1
        %v2384 = vrot.slane %v2121, 1
        %v2385 = vsel %vm612, %v2383, %v2384
        %v2386 = vrot.slane %v2200, 1
        %v2387 = vsel %vm612, %v2384, %v2386
        %v2388 = vrot.slane %v2184, 2
        %v2389 = vrot.slane %v2121, 2
        %v2390 = vsel %vm690, %v2388, %v2389
        %v2391 = vrot.slane %v2200, 2
        %v2392 = vsel %vm690, %v2389, %v2391
        %2393 = vrot.lane.b32.xlu0 %v614, 4
        %v2394 = vpop.permute.xlu0 %2393
        %2395 = vrot.lane.b32.xlu0 %v2233, 4
        %v2396 = vpop.permute.xlu0 %2395
        %2397 = vrot.lane.b32.xlu0 %v2235, 4
        %v2398 = vpop.permute.xlu0 %2397
        %2399 = vrot.lane.b32.xlu0 %v2238, 4
        %v2400 = vpop.permute.xlu0 %2399
        %2401 = vrot.lane.b32.xlu0 %v2240, 4
        %v2402 = vpop.permute.xlu0 %2401
        %2403 = vrot.lane.b32.xlu0 %v2243, 4
        %v2404 = vpop.permute.xlu0 %2403
        %2405 = vrot.lane.b32.xlu0 %v2245, 4
        %v2406 = vpop.permute.xlu0 %2405
        %2407 = vrot.lane.b32.xlu0 %v2248, 4
        %v2408 = vpop.permute.xlu0 %2407
        %2409 = vrot.lane.b32.xlu0 %v2250, 4
        %v2410 = vpop.permute.xlu0 %2409
        %2411 = vrot.lane.b32.xlu0 %v2253, 4
        %v2412 = vpop.permute.xlu0 %2411
        %2413 = vrot.lane.b32.xlu0 %v2255, 4
        %v2414 = vpop.permute.xlu0 %2413
        %2415 = vrot.lane.b32.xlu0 %v2258, 4
        %v2416 = vpop.permute.xlu0 %2415
        %2417 = vrot.lane.b32.xlu0 %v2260, 4
        %v2418 = vpop.permute.xlu0 %2417
        %2419 = vrot.lane.b32.xlu0 %v2263, 4
        %v2420 = vpop.permute.xlu0 %2419
        %2421 = vrot.lane.b32.xlu0 %v2265, 4
        %v2422 = vpop.permute.xlu0 %2421
        %2423 = vrot.lane.b32.xlu0 %v2268, 4
        %v2424 = vpop.permute.xlu0 %2423
        %2425 = vrot.lane.b32.xlu0 %v2270, 4
        %v2426 = vpop.permute.xlu0 %2425
        %2427 = vrot.lane.b32.xlu0 %v2273, 4
        %v2428 = vpop.permute.xlu0 %2427
        %2429 = vrot.lane.b32.xlu0 %v2275, 4
        %v2430 = vpop.permute.xlu0 %2429
        %2431 = vrot.lane.b32.xlu0 %v2278, 4
        %v2432 = vpop.permute.xlu0 %2431
        %2433 = vrot.lane.b32.xlu0 %v2280, 4
        %v2434 = vpop.permute.xlu0 %2433
        %2435 = vrot.lane.b32.xlu0 %v2283, 4
        %v2436 = vpop.permute.xlu0 %2435
        %2437 = vrot.lane.b32.xlu0 %v2285, 4
        %v2438 = vpop.permute.xlu0 %2437
        %2439 = vrot.lane.b32.xlu0 %v2288, 4
        %v2440 = vpop.permute.xlu0 %2439
        %2441 = vrot.lane.b32.xlu0 %v2290, 4
        %v2442 = vpop.permute.xlu0 %2441
        %2443 = vrot.lane.b32.xlu0 %v2293, 4
        %v2444 = vpop.permute.xlu0 %2443
        %2445 = vrot.lane.b32.xlu0 %v2295, 4
        %v2446 = vpop.permute.xlu0 %2445
        %2447 = vrot.lane.b32.xlu0 %v2298, 4
        %v2448 = vpop.permute.xlu0 %2447
        %2449 = vrot.lane.b32.xlu0 %v2300, 4
        %v2450 = vpop.permute.xlu0 %2449
        %2451 = vrot.lane.b32.xlu0 %v2303, 4
        %v2452 = vpop.permute.xlu0 %2451
        %2453 = vrot.lane.b32.xlu0 %v2305, 4
        %v2454 = vpop.permute.xlu0 %2453
        %2486 = vrot.lane.b32.xlu0 %v692, 8
        %v2487 = vpop.permute.xlu0 %2486
        %2488 = vrot.lane.b32.xlu0 %v2308, 8
        %v2489 = vpop.permute.xlu0 %2488
        %2490 = vrot.lane.b32.xlu0 %v2310, 8
        %v2491 = vpop.permute.xlu0 %2490
        %2492 = vrot.lane.b32.xlu0 %v2313, 8
        %v2493 = vpop.permute.xlu0 %2492
        %2494 = vrot.lane.b32.xlu0 %v2315, 8
        %v2495 = vpop.permute.xlu0 %2494
        %2496 = vrot.lane.b32.xlu0 %v2318, 8
        %v2497 = vpop.permute.xlu0 %2496
        %2498 = vrot.lane.b32.xlu0 %v2320, 8
        %v2499 = vpop.permute.xlu0 %2498
        %2500 = vrot.lane.b32.xlu0 %v2323, 8
        %v2501 = vpop.permute.xlu0 %2500
        %2502 = vrot.lane.b32.xlu0 %v2325, 8
        %v2503 = vpop.permute.xlu0 %2502
        %2504 = vrot.lane.b32.xlu0 %v2328, 8
        %v2505 = vpop.permute.xlu0 %2504
        %2506 = vrot.lane.b32.xlu0 %v2330, 8
        %v2507 = vpop.permute.xlu0 %2506
        %2508 = vrot.lane.b32.xlu0 %v2333, 8
        %v2509 = vpop.permute.xlu0 %2508
        %2510 = vrot.lane.b32.xlu0 %v2335, 8
        %v2511 = vpop.permute.xlu0 %2510
        %2512 = vrot.lane.b32.xlu0 %v2338, 8
        %v2513 = vpop.permute.xlu0 %2512
        %2514 = vrot.lane.b32.xlu0 %v2340, 8
        %v2515 = vpop.permute.xlu0 %2514
        %2516 = vrot.lane.b32.xlu0 %v2343, 8
        %v2517 = vpop.permute.xlu0 %2516
        %2518 = vrot.lane.b32.xlu0 %v2345, 8
        %v2519 = vpop.permute.xlu0 %2518
        %2520 = vrot.lane.b32.xlu0 %v2348, 8
        %v2521 = vpop.permute.xlu0 %2520
        %2522 = vrot.lane.b32.xlu0 %v2350, 8
        %v2523 = vpop.permute.xlu0 %2522
        %2524 = vrot.lane.b32.xlu0 %v2353, 8
        %v2525 = vpop.permute.xlu0 %2524
        %2526 = vrot.lane.b32.xlu0 %v2355, 8
        %v2527 = vpop.permute.xlu0 %2526
        %2528 = vrot.lane.b32.xlu0 %v2358, 8
        %v2529 = vpop.permute.xlu0 %2528
        %2530 = vrot.lane.b32.xlu0 %v2360, 8
        %v2531 = vpop.permute.xlu0 %2530
        %2532 = vrot.lane.b32.xlu0 %v2363, 8
        %v2533 = vpop.permute.xlu0 %2532
        %2534 = vrot.lane.b32.xlu0 %v2365, 8
        %v2535 = vpop.permute.xlu0 %2534
        %2536 = vrot.lane.b32.xlu0 %v2368, 8
        %v2537 = vpop.permute.xlu0 %2536
        %2538 = vrot.lane.b32.xlu0 %v2370, 8
        %v2539 = vpop.permute.xlu0 %2538
        %2540 = vrot.lane.b32.xlu0 %v2373, 8
        %v2541 = vpop.permute.xlu0 %2540
        %2542 = vrot.lane.b32.xlu0 %v2375, 8
        %v2543 = vpop.permute.xlu0 %2542
        %2544 = vrot.lane.b32.xlu0 %v2378, 8
        %v2545 = vpop.permute.xlu0 %2544
        %2546 = vrot.lane.b32.xlu0 %v2380, 8
        %v2547 = vpop.permute.xlu0 %2546
        %2579 = vrot.lane.b32.xlu0 %v2169, 12
        %v2580 = vpop.permute.xlu0 %2579
        %2581 = vrot.lane.b32.xlu0 %v2076, 12
        %v2582 = vpop.permute.xlu0 %2581
        %2583 = vrot.lane.b32.xlu0 %v2170, 12
        %v2584 = vpop.permute.xlu0 %2583
        %2585 = vrot.lane.b32.xlu0 %v2079, 12
        %v2586 = vpop.permute.xlu0 %2585
        %2587 = vrot.lane.b32.xlu0 %v2171, 12
        %v2588 = vpop.permute.xlu0 %2587
        %2589 = vrot.lane.b32.xlu0 %v2082, 12
        %v2590 = vpop.permute.xlu0 %2589
        %2591 = vrot.lane.b32.xlu0 %v2172, 12
        %v2592 = vpop.permute.xlu0 %2591
        %2593 = vrot.lane.b32.xlu0 %v2085, 12
        %v2594 = vpop.permute.xlu0 %2593
        %2595 = vrot.lane.b32.xlu0 %v2173, 12
        %v2596 = vpop.permute.xlu0 %2595
        %2597 = vrot.lane.b32.xlu0 %v2088, 12
        %v2598 = vpop.permute.xlu0 %2597
        %2599 = vrot.lane.b32.xlu0 %v2174, 12
        %v2600 = vpop.permute.xlu0 %2599
        %2601 = vrot.lane.b32.xlu0 %v2091, 12
        %v2602 = vpop.permute.xlu0 %2601
        %2603 = vrot.lane.b32.xlu0 %v2175, 12
        %v2604 = vpop.permute.xlu0 %2603
        %2605 = vrot.lane.b32.xlu0 %v2094, 12
        %v2606 = vpop.permute.xlu0 %2605
        %2607 = vrot.lane.b32.xlu0 %v2176, 12
        %v2608 = vpop.permute.xlu0 %2607
        %2609 = vrot.lane.b32.xlu0 %v2097, 12
        %v2610 = vpop.permute.xlu0 %2609
        %2611 = vrot.lane.b32.xlu0 %v2177, 12
        %v2612 = vpop.permute.xlu0 %2611
        %2613 = vrot.lane.b32.xlu0 %v2100, 12
        %v2614 = vpop.permute.xlu0 %2613
        %2615 = vrot.lane.b32.xlu0 %v2178, 12
        %v2616 = vpop.permute.xlu0 %2615
        %2617 = vrot.lane.b32.xlu0 %v2103, 12
        %v2618 = vpop.permute.xlu0 %2617
        %2619 = vrot.lane.b32.xlu0 %v2179, 12
        %v2620 = vpop.permute.xlu0 %2619
        %2621 = vrot.lane.b32.xlu0 %v2106, 12
        %v2622 = vpop.permute.xlu0 %2621
        %2623 = vrot.lane.b32.xlu0 %v2180, 12
        %v2624 = vpop.permute.xlu0 %2623
        %2625 = vrot.lane.b32.xlu0 %v2109, 12
        %v2626 = vpop.permute.xlu0 %2625
        %2627 = vrot.lane.b32.xlu0 %v2181, 12
        %v2628 = vpop.permute.xlu0 %2627
        %2629 = vrot.lane.b32.xlu0 %v2112, 12
        %v2630 = vpop.permute.xlu0 %2629
        %2631 = vrot.lane.b32.xlu0 %v2182, 12
        %v2632 = vpop.permute.xlu0 %2631
        %2633 = vrot.lane.b32.xlu0 %v2115, 12
        %v2634 = vpop.permute.xlu0 %2633
        %2635 = vrot.lane.b32.xlu0 %v2183, 12
        %v2636 = vpop.permute.xlu0 %2635
        %2637 = vrot.lane.b32.xlu0 %v2118, 12
        %v2638 = vpop.permute.xlu0 %2637
        %2639 = vrot.lane.b32.xlu0 %v2184, 12
        %v2640 = vpop.permute.xlu0 %2639
        %2641 = vrot.lane.b32.xlu0 %v2121, 12
        %v2642 = vpop.permute.xlu0 %2641
        %2675 = vrot.lane.b32.xlu0 %v2233, 16
        %v2676 = vpop.permute.xlu0 %2675
        %2677 = vrot.lane.b32.xlu0 %v2235, 16
        %v2678 = vpop.permute.xlu0 %2677
        %2679 = vrot.lane.b32.xlu0 %v2238, 16
        %v2680 = vpop.permute.xlu0 %2679
        %2681 = vrot.lane.b32.xlu0 %v2240, 16
        %v2682 = vpop.permute.xlu0 %2681
        %2683 = vrot.lane.b32.xlu0 %v2243, 16
        %v2684 = vpop.permute.xlu0 %2683
        %2685 = vrot.lane.b32.xlu0 %v2245, 16
        %v2686 = vpop.permute.xlu0 %2685
        %2687 = vrot.lane.b32.xlu0 %v2248, 16
        %v2688 = vpop.permute.xlu0 %2687
        %2689 = vrot.lane.b32.xlu0 %v2250, 16
        %v2690 = vpop.permute.xlu0 %2689
        %2691 = vrot.lane.b32.xlu0 %v2253, 16
        %v2692 = vpop.permute.xlu0 %2691
        %2693 = vrot.lane.b32.xlu0 %v2255, 16
        %v2694 = vpop.permute.xlu0 %2693
        %2695 = vrot.lane.b32.xlu0 %v2258, 16
        %v2696 = vpop.permute.xlu0 %2695
        %2697 = vrot.lane.b32.xlu0 %v2260, 16
        %v2698 = vpop.permute.xlu0 %2697
        %2699 = vrot.lane.b32.xlu0 %v2263, 16
        %v2700 = vpop.permute.xlu0 %2699
        %2701 = vrot.lane.b32.xlu0 %v2265, 16
        %v2702 = vpop.permute.xlu0 %2701
        %2703 = vrot.lane.b32.xlu0 %v2268, 16
        %v2704 = vpop.permute.xlu0 %2703
        %2705 = vrot.lane.b32.xlu0 %v2270, 16
        %v2706 = vpop.permute.xlu0 %2705
        %2707 = vrot.lane.b32.xlu0 %v2273, 16
        %v2708 = vpop.permute.xlu0 %2707
        %2709 = vrot.lane.b32.xlu0 %v2275, 16
        %v2710 = vpop.permute.xlu0 %2709
        %2711 = vrot.lane.b32.xlu0 %v2278, 16
        %v2712 = vpop.permute.xlu0 %2711
        %2713 = vrot.lane.b32.xlu0 %v2280, 16
        %v2714 = vpop.permute.xlu0 %2713
        %2715 = vrot.lane.b32.xlu0 %v2283, 16
        %v2716 = vpop.permute.xlu0 %2715
        %2717 = vrot.lane.b32.xlu0 %v2285, 16
        %v2718 = vpop.permute.xlu0 %2717
        %2719 = vrot.lane.b32.xlu0 %v2288, 16
        %v2720 = vpop.permute.xlu0 %2719
        %2721 = vrot.lane.b32.xlu0 %v2290, 16
        %v2722 = vpop.permute.xlu0 %2721
        %2723 = vrot.lane.b32.xlu0 %v2293, 16
        %v2724 = vpop.permute.xlu0 %2723
        %2725 = vrot.lane.b32.xlu0 %v2295, 16
        %v2726 = vpop.permute.xlu0 %2725
        %2727 = vrot.lane.b32.xlu0 %v2298, 16
        %v2728 = vpop.permute.xlu0 %2727
        %2729 = vrot.lane.b32.xlu0 %v2300, 16
        %v2730 = vpop.permute.xlu0 %2729
        %2731 = vrot.lane.b32.xlu0 %v2303, 16
        %v2732 = vpop.permute.xlu0 %2731
        %2733 = vrot.lane.b32.xlu0 %v2305, 16
        %v2734 = vpop.permute.xlu0 %2733
        %2735 = vrot.lane.b32.xlu0 %v2385, 16
        %v2736 = vpop.permute.xlu0 %2735
        %2737 = vrot.lane.b32.xlu0 %v2387, 16
        %v2738 = vpop.permute.xlu0 %2737
        %2771 = vrot.lane.b32.xlu0 %v2308, 20
        %v2772 = vpop.permute.xlu0 %2771
        %2773 = vrot.lane.b32.xlu0 %v2310, 20
        %v2774 = vpop.permute.xlu0 %2773
        %2775 = vrot.lane.b32.xlu0 %v2313, 20
        %v2776 = vpop.permute.xlu0 %2775
        %2777 = vrot.lane.b32.xlu0 %v2315, 20
        %v2778 = vpop.permute.xlu0 %2777
        %2779 = vrot.lane.b32.xlu0 %v2318, 20
        %v2780 = vpop.permute.xlu0 %2779
        %2781 = vrot.lane.b32.xlu0 %v2320, 20
        %v2782 = vpop.permute.xlu0 %2781
        %2783 = vrot.lane.b32.xlu0 %v2323, 20
        %v2784 = vpop.permute.xlu0 %2783
        %2785 = vrot.lane.b32.xlu0 %v2325, 20
        %v2786 = vpop.permute.xlu0 %2785
        %2787 = vrot.lane.b32.xlu0 %v2328, 20
        %v2788 = vpop.permute.xlu0 %2787
        %2789 = vrot.lane.b32.xlu0 %v2330, 20
        %v2790 = vpop.permute.xlu0 %2789
        %2791 = vrot.lane.b32.xlu0 %v2333, 20
        %v2792 = vpop.permute.xlu0 %2791
        %2793 = vrot.lane.b32.xlu0 %v2335, 20
        %v2794 = vpop.permute.xlu0 %2793
        %2795 = vrot.lane.b32.xlu0 %v2338, 20
        %v2796 = vpop.permute.xlu0 %2795
        %2797 = vrot.lane.b32.xlu0 %v2340, 20
        %v2798 = vpop.permute.xlu0 %2797
        %2799 = vrot.lane.b32.xlu0 %v2343, 20
        %v2800 = vpop.permute.xlu0 %2799
        %2801 = vrot.lane.b32.xlu0 %v2345, 20
        %v2802 = vpop.permute.xlu0 %2801
        %2803 = vrot.lane.b32.xlu0 %v2348, 20
        %v2804 = vpop.permute.xlu0 %2803
        %2805 = vrot.lane.b32.xlu0 %v2350, 20
        %v2806 = vpop.permute.xlu0 %2805
        %2807 = vrot.lane.b32.xlu0 %v2353, 20
        %v2808 = vpop.permute.xlu0 %2807
        %2809 = vrot.lane.b32.xlu0 %v2355, 20
        %v2810 = vpop.permute.xlu0 %2809
        %2811 = vrot.lane.b32.xlu0 %v2358, 20
        %v2812 = vpop.permute.xlu0 %2811
        %2813 = vrot.lane.b32.xlu0 %v2360, 20
        %v2814 = vpop.permute.xlu0 %2813
        %2815 = vrot.lane.b32.xlu0 %v2363, 20
        %v2816 = vpop.permute.xlu0 %2815
        %2817 = vrot.lane.b32.xlu0 %v2365, 20
        %v2818 = vpop.permute.xlu0 %2817
        %2819 = vrot.lane.b32.xlu0 %v2368, 20
        %v2820 = vpop.permute.xlu0 %2819
        %2821 = vrot.lane.b32.xlu0 %v2370, 20
        %v2822 = vpop.permute.xlu0 %2821
        %2823 = vrot.lane.b32.xlu0 %v2373, 20
        %v2824 = vpop.permute.xlu0 %2823
        %2825 = vrot.lane.b32.xlu0 %v2375, 20
        %v2826 = vpop.permute.xlu0 %2825
        %2827 = vrot.lane.b32.xlu0 %v2378, 20
        %v2828 = vpop.permute.xlu0 %2827
        %2829 = vrot.lane.b32.xlu0 %v2380, 20
        %v2830 = vpop.permute.xlu0 %2829
        %2831 = vrot.lane.b32.xlu0 %v2390, 20
        %v2832 = vpop.permute.xlu0 %2831
        %2833 = vrot.lane.b32.xlu0 %v2392, 20
        %v2834 = vpop.permute.xlu0 %2833
        %2867 = vrot.lane.b32.xlu0 %v2170, 24
        %v2868 = vpop.permute.xlu0 %2867
        %2869 = vrot.lane.b32.xlu0 %v2079, 24
        %v2870 = vpop.permute.xlu0 %2869
        %2871 = vrot.lane.b32.xlu0 %v2171, 24
        %v2872 = vpop.permute.xlu0 %2871
        %2873 = vrot.lane.b32.xlu0 %v2082, 24
        %v2874 = vpop.permute.xlu0 %2873
        %2875 = vrot.lane.b32.xlu0 %v2172, 24
        %v2876 = vpop.permute.xlu0 %2875
        %2877 = vrot.lane.b32.xlu0 %v2085, 24
        %v2878 = vpop.permute.xlu0 %2877
        %2879 = vrot.lane.b32.xlu0 %v2173, 24
        %v2880 = vpop.permute.xlu0 %2879
        %2881 = vrot.lane.b32.xlu0 %v2088, 24
        %v2882 = vpop.permute.xlu0 %2881
        %2883 = vrot.lane.b32.xlu0 %v2174, 24
        %v2884 = vpop.permute.xlu0 %2883
        %2885 = vrot.lane.b32.xlu0 %v2091, 24
        %v2886 = vpop.permute.xlu0 %2885
        %2887 = vrot.lane.b32.xlu0 %v2175, 24
        %v2888 = vpop.permute.xlu0 %2887
        %2889 = vrot.lane.b32.xlu0 %v2094, 24
        %v2890 = vpop.permute.xlu0 %2889
        %2891 = vrot.lane.b32.xlu0 %v2176, 24
        %v2892 = vpop.permute.xlu0 %2891
        %2893 = vrot.lane.b32.xlu0 %v2097, 24
        %v2894 = vpop.permute.xlu0 %2893
        %2895 = vrot.lane.b32.xlu0 %v2177, 24
        %v2896 = vpop.permute.xlu0 %2895
        %2897 = vrot.lane.b32.xlu0 %v2100, 24
        %v2898 = vpop.permute.xlu0 %2897
        %2899 = vrot.lane.b32.xlu0 %v2178, 24
        %v2900 = vpop.permute.xlu0 %2899
        %2901 = vrot.lane.b32.xlu0 %v2103, 24
        %v2902 = vpop.permute.xlu0 %2901
        %2903 = vrot.lane.b32.xlu0 %v2179, 24
        %v2904 = vpop.permute.xlu0 %2903
        %2905 = vrot.lane.b32.xlu0 %v2106, 24
        %v2906 = vpop.permute.xlu0 %2905
        %2907 = vrot.lane.b32.xlu0 %v2180, 24
        %v2908 = vpop.permute.xlu0 %2907
        %2909 = vrot.lane.b32.xlu0 %v2109, 24
        %v2910 = vpop.permute.xlu0 %2909
        %2911 = vrot.lane.b32.xlu0 %v2181, 24
        %v2912 = vpop.permute.xlu0 %2911
        %2913 = vrot.lane.b32.xlu0 %v2112, 24
        %v2914 = vpop.permute.xlu0 %2913
        %2915 = vrot.lane.b32.xlu0 %v2182, 24
        %v2916 = vpop.permute.xlu0 %2915
        %2917 = vrot.lane.b32.xlu0 %v2115, 24
        %v2918 = vpop.permute.xlu0 %2917
        %2919 = vrot.lane.b32.xlu0 %v2183, 24
        %v2920 = vpop.permute.xlu0 %2919
        %2921 = vrot.lane.b32.xlu0 %v2118, 24
        %v2922 = vpop.permute.xlu0 %2921
        %2923 = vrot.lane.b32.xlu0 %v2184, 24
        %v2924 = vpop.permute.xlu0 %2923
        %2925 = vrot.lane.b32.xlu0 %v2121, 24
        %v2926 = vpop.permute.xlu0 %2925
        %2927 = vrot.lane.b32.xlu0 0.0, 24
        %v2928 = vpop.permute.xlu0 %2927
        %2960 = vrot.lane.b32.xlu0 %v2238, 28
        %v2961 = vpop.permute.xlu0 %2960
        %2962 = vrot.lane.b32.xlu0 %v2240, 28
        %v2963 = vpop.permute.xlu0 %2962
        %2964 = vrot.lane.b32.xlu0 %v2243, 28
        %v2965 = vpop.permute.xlu0 %2964
        %2966 = vrot.lane.b32.xlu0 %v2245, 28
        %v2967 = vpop.permute.xlu0 %2966
        %2968 = vrot.lane.b32.xlu0 %v2248, 28
        %v2969 = vpop.permute.xlu0 %2968
        %2970 = vrot.lane.b32.xlu0 %v2250, 28
        %v2971 = vpop.permute.xlu0 %2970
        %2972 = vrot.lane.b32.xlu0 %v2253, 28
        %v2973 = vpop.permute.xlu0 %2972
        %2974 = vrot.lane.b32.xlu0 %v2255, 28
        %v2975 = vpop.permute.xlu0 %2974
        %2976 = vrot.lane.b32.xlu0 %v2258, 28
        %v2977 = vpop.permute.xlu0 %2976
        %2978 = vrot.lane.b32.xlu0 %v2260, 28
        %v2979 = vpop.permute.xlu0 %2978
        %2980 = vrot.lane.b32.xlu0 %v2263, 28
        %v2981 = vpop.permute.xlu0 %2980
        %2982 = vrot.lane.b32.xlu0 %v2265, 28
        %v2983 = vpop.permute.xlu0 %2982
        %2984 = vrot.lane.b32.xlu0 %v2268, 28
        %v2985 = vpop.permute.xlu0 %2984
        %2986 = vrot.lane.b32.xlu0 %v2270, 28
        %v2987 = vpop.permute.xlu0 %2986
        %2988 = vrot.lane.b32.xlu0 %v2273, 28
        %v2989 = vpop.permute.xlu0 %2988
        %2990 = vrot.lane.b32.xlu0 %v2275, 28
        %v2991 = vpop.permute.xlu0 %2990
        %2992 = vrot.lane.b32.xlu0 %v2278, 28
        %v2993 = vpop.permute.xlu0 %2992
        %2994 = vrot.lane.b32.xlu0 %v2280, 28
        %v2995 = vpop.permute.xlu0 %2994
        %2996 = vrot.lane.b32.xlu0 %v2283, 28
        %v2997 = vpop.permute.xlu0 %2996
        %2998 = vrot.lane.b32.xlu0 %v2285, 28
        %v2999 = vpop.permute.xlu0 %2998
        %3000 = vrot.lane.b32.xlu0 %v2288, 28
        %v3001 = vpop.permute.xlu0 %3000
        %3002 = vrot.lane.b32.xlu0 %v2290, 28
        %v3003 = vpop.permute.xlu0 %3002
        %3004 = vrot.lane.b32.xlu0 %v2293, 28
        %v3005 = vpop.permute.xlu0 %3004
        %3006 = vrot.lane.b32.xlu0 %v2295, 28
        %v3007 = vpop.permute.xlu0 %3006
        %3008 = vrot.lane.b32.xlu0 %v2298, 28
        %v3009 = vpop.permute.xlu0 %3008
        %3010 = vrot.lane.b32.xlu0 %v2300, 28
        %v3011 = vpop.permute.xlu0 %3010
        %3012 = vrot.lane.b32.xlu0 %v2303, 28
        %v3013 = vpop.permute.xlu0 %3012
        %3014 = vrot.lane.b32.xlu0 %v2305, 28
        %v3015 = vpop.permute.xlu0 %3014
        %3016 = vrot.lane.b32.xlu0 %v2385, 28
        %v3017 = vpop.permute.xlu0 %3016
        %3018 = vrot.lane.b32.xlu0 %v2387, 28
        %v3019 = vpop.permute.xlu0 %3018
        %3020 = vrot.lane.b32.xlu0 %v614, 28
        %v3021 = vpop.permute.xlu0 %3020
        %3053 = vrot.lane.b32.xlu0 %v2313, 32
        %v3054 = vpop.permute.xlu0 %3053
        %3055 = vrot.lane.b32.xlu0 %v2315, 32
        %v3056 = vpop.permute.xlu0 %3055
        %3057 = vrot.lane.b32.xlu0 %v2318, 32
        %v3058 = vpop.permute.xlu0 %3057
        %3059 = vrot.lane.b32.xlu0 %v2320, 32
        %v3060 = vpop.permute.xlu0 %3059
        %3061 = vrot.lane.b32.xlu0 %v2323, 32
        %v3062 = vpop.permute.xlu0 %3061
        %3063 = vrot.lane.b32.xlu0 %v2325, 32
        %v3064 = vpop.permute.xlu0 %3063
        %3065 = vrot.lane.b32.xlu0 %v2328, 32
        %v3066 = vpop.permute.xlu0 %3065
        %3067 = vrot.lane.b32.xlu0 %v2330, 32
        %v3068 = vpop.permute.xlu0 %3067
        %3069 = vrot.lane.b32.xlu0 %v2333, 32
        %v3070 = vpop.permute.xlu0 %3069
        %3071 = vrot.lane.b32.xlu0 %v2335, 32
        %v3072 = vpop.permute.xlu0 %3071
        %3073 = vrot.lane.b32.xlu0 %v2338, 32
        %v3074 = vpop.permute.xlu0 %3073
        %3075 = vrot.lane.b32.xlu0 %v2340, 32
        %v3076 = vpop.permute.xlu0 %3075
        %3077 = vrot.lane.b32.xlu0 %v2343, 32
        %v3078 = vpop.permute.xlu0 %3077
        %3079 = vrot.lane.b32.xlu0 %v2345, 32
        %v3080 = vpop.permute.xlu0 %3079
        %3081 = vrot.lane.b32.xlu0 %v2348, 32
        %v3082 = vpop.permute.xlu0 %3081
        %3083 = vrot.lane.b32.xlu0 %v2350, 32
        %v3084 = vpop.permute.xlu0 %3083
        %3085 = vrot.lane.b32.xlu0 %v2353, 32
        %v3086 = vpop.permute.xlu0 %3085
        %3087 = vrot.lane.b32.xlu0 %v2355, 32
        %v3088 = vpop.permute.xlu0 %3087
        %3089 = vrot.lane.b32.xlu0 %v2358, 32
        %v3090 = vpop.permute.xlu0 %3089
        %3091 = vrot.lane.b32.xlu0 %v2360, 32
        %v3092 = vpop.permute.xlu0 %3091
        %3093 = vrot.lane.b32.xlu0 %v2363, 32
        %v3094 = vpop.permute.xlu0 %3093
        %3095 = vrot.lane.b32.xlu0 %v2365, 32
        %v3096 = vpop.permute.xlu0 %3095
        %3097 = vrot.lane.b32.xlu0 %v2368, 32
        %v3098 = vpop.permute.xlu0 %3097
        %3099 = vrot.lane.b32.xlu0 %v2370, 32
        %v3100 = vpop.permute.xlu0 %3099
        %3101 = vrot.lane.b32.xlu0 %v2373, 32
        %v3102 = vpop.permute.xlu0 %3101
        %3103 = vrot.lane.b32.xlu0 %v2375, 32
        %v3104 = vpop.permute.xlu0 %3103
        %3105 = vrot.lane.b32.xlu0 %v2378, 32
        %v3106 = vpop.permute.xlu0 %3105
        %3107 = vrot.lane.b32.xlu0 %v2380, 32
        %v3108 = vpop.permute.xlu0 %3107
        %3109 = vrot.lane.b32.xlu0 %v2390, 32
        %v3110 = vpop.permute.xlu0 %3109
        %3111 = vrot.lane.b32.xlu0 %v2392, 32
        %v3112 = vpop.permute.xlu0 %3111
        %3113 = vrot.lane.b32.xlu0 %v692, 32
        %v3114 = vpop.permute.xlu0 %3113
        %vm3146 = vcmask 31744
        %v3147 = vsel %vm3146, 0.0, %v2394
        %v3148 = vsel %vm3146, %v2169, %v2396
        %v3149 = vsel %vm3146, %v2076, %v2398
        %v3150 = vsel %vm3146, %v2170, %v2400
        %v3151 = vsel %vm3146, %v2079, %v2402
        %v3152 = vsel %vm3146, %v2171, %v2404
        %v3153 = vsel %vm3146, %v2082, %v2406
        %v3154 = vsel %vm3146, %v2172, %v2408
        %v3155 = vsel %vm3146, %v2085, %v2410
        %v3156 = vsel %vm3146, %v2173, %v2412
        %v3157 = vsel %vm3146, %v2088, %v2414
        %v3158 = vsel %vm3146, %v2174, %v2416
        %v3159 = vsel %vm3146, %v2091, %v2418
        %v3160 = vsel %vm3146, %v2175, %v2420
        %v3161 = vsel %vm3146, %v2094, %v2422
        %v3162 = vsel %vm3146, %v2176, %v2424
        %v3163 = vsel %vm3146, %v2097, %v2426
        %v3164 = vsel %vm3146, %v2177, %v2428
        %v3165 = vsel %vm3146, %v2100, %v2430
        %v3166 = vsel %vm3146, %v2178, %v2432
        %v3167 = vsel %vm3146, %v2103, %v2434
        %v3168 = vsel %vm3146, %v2179, %v2436
        %v3169 = vsel %vm3146, %v2106, %v2438
        %v3170 = vsel %vm3146, %v2180, %v2440
        %v3171 = vsel %vm3146, %v2109, %v2442
        %v3172 = vsel %vm3146, %v2181, %v2444
        %v3173 = vsel %vm3146, %v2112, %v2446
        %v3174 = vsel %vm3146, %v2182, %v2448
        %v3175 = vsel %vm3146, %v2115, %v2450
        %v3176 = vsel %vm3146, %v2183, %v2452
        %v3177 = vsel %vm3146, %v2118, %v2454
        %vm3178 = vcmask 64512
        %v3179 = vsel %vm3178, %v3147, %v2487
        %v3180 = vsel %vm3178, %v3148, %v2489
        %v3181 = vsel %vm3178, %v3149, %v2491
        %v3182 = vsel %vm3178, %v3150, %v2493
        %v3183 = vsel %vm3178, %v3151, %v2495
        %v3184 = vsel %vm3178, %v3152, %v2497
        %v3185 = vsel %vm3178, %v3153, %v2499
        %v3186 = vsel %vm3178, %v3154, %v2501
        %v3187 = vsel %vm3178, %v3155, %v2503
        %v3188 = vsel %vm3178, %v3156, %v2505
        %v3189 = vsel %vm3178, %v3157, %v2507
        %v3190 = vsel %vm3178, %v3158, %v2509
        %v3191 = vsel %vm3178, %v3159, %v2511
        %v3192 = vsel %vm3178, %v3160, %v2513
        %v3193 = vsel %vm3178, %v3161, %v2515
        %v3194 = vsel %vm3178, %v3162, %v2517
        %v3195 = vsel %vm3178, %v3163, %v2519
        %v3196 = vsel %vm3178, %v3164, %v2521
        %v3197 = vsel %vm3178, %v3165, %v2523
        %v3198 = vsel %vm3178, %v3166, %v2525
        %v3199 = vsel %vm3178, %v3167, %v2527
        %v3200 = vsel %vm3178, %v3168, %v2529
        %v3201 = vsel %vm3178, %v3169, %v2531
        %v3202 = vsel %vm3178, %v3170, %v2533
        %v3203 = vsel %vm3178, %v3171, %v2535
        %v3204 = vsel %vm3178, %v3172, %v2537
        %v3205 = vsel %vm3178, %v3173, %v2539
        %v3206 = vsel %vm3178, %v3174, %v2541
        %v3207 = vsel %vm3178, %v3175, %v2543
        %v3208 = vsel %vm3178, %v3176, %v2545
        %v3209 = vsel %vm3178, %v3177, %v2547
        %vm3210 = vcmask 97280
        %v3211 = vsel %vm3210, %v3179, %v2580
        %v3212 = vsel %vm3210, %v3179, %v2582
        %v3213 = vsel %vm3210, %v3180, %v2584
        %v3214 = vsel %vm3210, %v3181, %v2586
        %v3215 = vsel %vm3210, %v3182, %v2588
        %v3216 = vsel %vm3210, %v3183, %v2590
        %v3217 = vsel %vm3210, %v3184, %v2592
        %v3218 = vsel %vm3210, %v3185, %v2594
        %v3219 = vsel %vm3210, %v3186, %v2596
        %v3220 = vsel %vm3210, %v3187, %v2598
        %v3221 = vsel %vm3210, %v3188, %v2600
        %v3222 = vsel %vm3210, %v3189, %v2602
        %v3223 = vsel %vm3210, %v3190, %v2604
        %v3224 = vsel %vm3210, %v3191, %v2606
        %v3225 = vsel %vm3210, %v3192, %v2608
        %v3226 = vsel %vm3210, %v3193, %v2610
        %v3227 = vsel %vm3210, %v3194, %v2612
        %v3228 = vsel %vm3210, %v3195, %v2614
        %v3229 = vsel %vm3210, %v3196, %v2616
        %v3230 = vsel %vm3210, %v3197, %v2618
        %v3231 = vsel %vm3210, %v3198, %v2620
        %v3232 = vsel %vm3210, %v3199, %v2622
        %v3233 = vsel %vm3210, %v3200, %v2624
        %v3234 = vsel %vm3210, %v3201, %v2626
        %v3235 = vsel %vm3210, %v3202, %v2628
        %v3236 = vsel %vm3210, %v3203, %v2630
        %v3237 = vsel %vm3210, %v3204, %v2632
        %v3238 = vsel %vm3210, %v3205, %v2634
        %v3239 = vsel %vm3210, %v3206, %v2636
        %v3240 = vsel %vm3210, %v3207, %v2638
        %v3241 = vsel %vm3210, %v3208, %v2640
        %v3242 = vsel %vm3210, %v3209, %v2642
        %vm3243 = vcmask 130048
        %v3244 = vsel %vm3243, %v3211, %v2676
        %v3245 = vsel %vm3243, %v3212, %v2678
        %v3246 = vsel %vm3243, %v3213, %v2680
        %v3247 = vsel %vm3243, %v3214, %v2682
        %v3248 = vsel %vm3243, %v3215, %v2684
        %v3249 = vsel %vm3243, %v3216, %v2686
        %v3250 = vsel %vm3243, %v3217, %v2688
        %v3251 = vsel %vm3243, %v3218, %v2690
        %v3252 = vsel %vm3243, %v3219, %v2692
        %v3253 = vsel %vm3243, %v3220, %v2694
        %v3254 = vsel %vm3243, %v3221, %v2696
        %v3255 = vsel %vm3243, %v3222, %v2698
        %v3256 = vsel %vm3243, %v3223, %v2700
        %v3257 = vsel %vm3243, %v3224, %v2702
        %v3258 = vsel %vm3243, %v3225, %v2704
        %v3259 = vsel %vm3243, %v3226, %v2706
        %v3260 = vsel %vm3243, %v3227, %v2708
        %v3261 = vsel %vm3243, %v3228, %v2710
        %v3262 = vsel %vm3243, %v3229, %v2712
        %v3263 = vsel %vm3243, %v3230, %v2714
        %v3264 = vsel %vm3243, %v3231, %v2716
        %v3265 = vsel %vm3243, %v3232, %v2718
        %v3266 = vsel %vm3243, %v3233, %v2720
        %v3267 = vsel %vm3243, %v3234, %v2722
        %v3268 = vsel %vm3243, %v3235, %v2724
        %v3269 = vsel %vm3243, %v3236, %v2726
        %v3270 = vsel %vm3243, %v3237, %v2728
        %v3271 = vsel %vm3243, %v3238, %v2730
        %v3272 = vsel %vm3243, %v3239, %v2732
        %v3273 = vsel %vm3243, %v3240, %v2734
        %v3274 = vsel %vm3243, %v3241, %v2736
        %v3275 = vsel %vm3243, %v3242, %v2738
        %vm3276 = vcmask 162816
        %v3277 = vsel %vm3276, %v3244, %v2772
        %v3278 = vsel %vm3276, %v3245, %v2774
        %v3279 = vsel %vm3276, %v3246, %v2776
        %v3280 = vsel %vm3276, %v3247, %v2778
        %v3281 = vsel %vm3276, %v3248, %v2780
        %v3282 = vsel %vm3276, %v3249, %v2782
        %v3283 = vsel %vm3276, %v3250, %v2784
        %v3284 = vsel %vm3276, %v3251, %v2786
        %v3285 = vsel %vm3276, %v3252, %v2788
        %v3286 = vsel %vm3276, %v3253, %v2790
        %v3287 = vsel %vm3276, %v3254, %v2792
        %v3288 = vsel %vm3276, %v3255, %v2794
        %v3289 = vsel %vm3276, %v3256, %v2796
        %v3290 = vsel %vm3276, %v3257, %v2798
        %v3291 = vsel %vm3276, %v3258, %v2800
        %v3292 = vsel %vm3276, %v3259, %v2802
        %v3293 = vsel %vm3276, %v3260, %v2804
        %v3294 = vsel %vm3276, %v3261, %v2806
        %v3295 = vsel %vm3276, %v3262, %v2808
        %v3296 = vsel %vm3276, %v3263, %v2810
        %v3297 = vsel %vm3276, %v3264, %v2812
        %v3298 = vsel %vm3276, %v3265, %v2814
        %v3299 = vsel %vm3276, %v3266, %v2816
        %v3300 = vsel %vm3276, %v3267, %v2818
        %v3301 = vsel %vm3276, %v3268, %v2820
        %v3302 = vsel %vm3276, %v3269, %v2822
        %v3303 = vsel %vm3276, %v3270, %v2824
        %v3304 = vsel %vm3276, %v3271, %v2826
        %v3305 = vsel %vm3276, %v3272, %v2828
        %v3306 = vsel %vm3276, %v3273, %v2830
        %v3307 = vsel %vm3276, %v3274, %v2832
        %v3308 = vsel %vm3276, %v3275, %v2834
        %vm3309 = vcmask 195584
        %v3310 = vsel %vm3309, %v3277, %v2868
        %v3311 = vsel %vm3309, %v3278, %v2870
        %v3312 = vsel %vm3309, %v3279, %v2872
        %v3313 = vsel %vm3309, %v3280, %v2874
        %v3314 = vsel %vm3309, %v3281, %v2876
        %v3315 = vsel %vm3309, %v3282, %v2878
        %v3316 = vsel %vm3309, %v3283, %v2880
        %v3317 = vsel %vm3309, %v3284, %v2882
        %v3318 = vsel %vm3309, %v3285, %v2884
        %v3319 = vsel %vm3309, %v3286, %v2886
        %v3320 = vsel %vm3309, %v3287, %v2888
        %v3321 = vsel %vm3309, %v3288, %v2890
        %v3322 = vsel %vm3309, %v3289, %v2892
        %v3323 = vsel %vm3309, %v3290, %v2894
        %v3324 = vsel %vm3309, %v3291, %v2896
        %v3325 = vsel %vm3309, %v3292, %v2898
        %v3326 = vsel %vm3309, %v3293, %v2900
        %v3327 = vsel %vm3309, %v3294, %v2902
        %v3328 = vsel %vm3309, %v3295, %v2904
        %v3329 = vsel %vm3309, %v3296, %v2906
        %v3330 = vsel %vm3309, %v3297, %v2908
        %v3331 = vsel %vm3309, %v3298, %v2910
        %v3332 = vsel %vm3309, %v3299, %v2912
        %v3333 = vsel %vm3309, %v3300, %v2914
        %v3334 = vsel %vm3309, %v3301, %v2916
        %v3335 = vsel %vm3309, %v3302, %v2918
        %v3336 = vsel %vm3309, %v3303, %v2920
        %v3337 = vsel %vm3309, %v3304, %v2922
        %v3338 = vsel %vm3309, %v3305, %v2924
        %v3339 = vsel %vm3309, %v3306, %v2926
        %v3340 = vsel %vm3309, %v3307, %v2928
        %v3341 = vsel %vm3309, %v3308, %v2928
        %vm3342 = vcmask 228352
        %v3343 = vsel %vm3342, %v3310, %v2961
        %v3344 = vsel %vm3342, %v3311, %v2963
        %v3345 = vsel %vm3342, %v3312, %v2965
        %v3346 = vsel %vm3342, %v3313, %v2967
        %v3347 = vsel %vm3342, %v3314, %v2969
        %v3348 = vsel %vm3342, %v3315, %v2971
        %v3349 = vsel %vm3342, %v3316, %v2973
        %v3350 = vsel %vm3342, %v3317, %v2975
        %v3351 = vsel %vm3342, %v3318, %v2977
        %v3352 = vsel %vm3342, %v3319, %v2979
        %v3353 = vsel %vm3342, %v3320, %v2981
        %v3354 = vsel %vm3342, %v3321, %v2983
        %v3355 = vsel %vm3342, %v3322, %v2985
        %v3356 = vsel %vm3342, %v3323, %v2987
        %v3357 = vsel %vm3342, %v3324, %v2989
        %v3358 = vsel %vm3342, %v3325, %v2991
        %v3359 = vsel %vm3342, %v3326, %v2993
        %v3360 = vsel %vm3342, %v3327, %v2995
        %v3361 = vsel %vm3342, %v3328, %v2997
        %v3362 = vsel %vm3342, %v3329, %v2999
        %v3363 = vsel %vm3342, %v3330, %v3001
        %v3364 = vsel %vm3342, %v3331, %v3003
        %v3365 = vsel %vm3342, %v3332, %v3005
        %v3366 = vsel %vm3342, %v3333, %v3007
        %v3367 = vsel %vm3342, %v3334, %v3009
        %v3368 = vsel %vm3342, %v3335, %v3011
        %v3369 = vsel %vm3342, %v3336, %v3013
        %v3370 = vsel %vm3342, %v3337, %v3015
        %v3371 = vsel %vm3342, %v3338, %v3017
        %v3372 = vsel %vm3342, %v3339, %v3019
        %v3373 = vsel %vm3342, %v3340, %v3021
        %v3374 = vsel %vm3342, %v3341, %v3021
        %v3375 = vsel %vm1376, %v3343, %v3054
        %v3376 = vsel %vm1376, %v3344, %v3056
        %v3377 = vsel %vm1376, %v3345, %v3058
        %v3378 = vsel %vm1376, %v3346, %v3060
        %v3379 = vsel %vm1376, %v3347, %v3062
        %v3380 = vsel %vm1376, %v3348, %v3064
        %v3381 = vsel %vm1376, %v3349, %v3066
        %v3382 = vsel %vm1376, %v3350, %v3068
        %v3383 = vsel %vm1376, %v3351, %v3070
        %v3384 = vsel %vm1376, %v3352, %v3072
        %v3385 = vsel %vm1376, %v3353, %v3074
        %v3386 = vsel %vm1376, %v3354, %v3076
        %v3387 = vsel %vm1376, %v3355, %v3078
        %v3388 = vsel %vm1376, %v3356, %v3080
        %v3389 = vsel %vm1376, %v3357, %v3082
        %v3390 = vsel %vm1376, %v3358, %v3084
        %v3391 = vsel %vm1376, %v3359, %v3086
        %v3392 = vsel %vm1376, %v3360, %v3088
        %v3393 = vsel %vm1376, %v3361, %v3090
        %v3394 = vsel %vm1376, %v3362, %v3092
        %v3395 = vsel %vm1376, %v3363, %v3094
        %v3396 = vsel %vm1376, %v3364, %v3096
        %v3397 = vsel %vm1376, %v3365, %v3098
        %v3398 = vsel %vm1376, %v3366, %v3100
        %v3399 = vsel %vm1376, %v3367, %v3102
        %v3400 = vsel %vm1376, %v3368, %v3104
        %v3401 = vsel %vm1376, %v3369, %v3106
        %v3402 = vsel %vm1376, %v3370, %v3108
        %v3403 = vsel %vm1376, %v3371, %v3110
        %v3404 = vsel %vm1376, %v3372, %v3112
        %v3405 = vsel %vm1376, %v3373, %v3114
        %v3406 = vsel %vm1376, %v3374, %v3114
        %v3407 = vld [vmem:[%s4] sm:$0xff]
        %v3408 = vld [vmem:[%s4 + $0x8] sm:$0xff]
        %v3409 = vld [vmem:[%s4 + $0x10] sm:$0xff]
        %v3410 = vld [vmem:[%s4 + $0x18] sm:$0xff]
        %v3411 = vld [vmem:[%s4 + $0x20] sm:$0xf]
        %v3412 = vld [vmem:[%s5] sm:$0x1]
        %v3414 = vperm.slane %v3412, 0
        %vm3416 = vcmask 293888
        %v3418 = vsel %vm3416, %v3375, 0
        %v3421 = vsel %vm3416, %v3376, 0
        %v3424 = vsel %vm3416, %v3377, 0
        %v3427 = vsel %vm3416, %v3378, 0
        %v3430 = vsel %vm3416, %v3379, 0
        %v3433 = vsel %vm3416, %v3380, 0
        %v3436 = vsel %vm3416, %v3381, 0
        %v3439 = vsel %vm3416, %v3382, 0
        %v3442 = vsel %vm3416, %v3383, 0
        %v3445 = vsel %vm3416, %v3384, 0
        %v3448 = vsel %vm3416, %v3385, 0
        %v3451 = vsel %vm3416, %v3386, 0
        %v3454 = vsel %vm3416, %v3387, 0
        %v3457 = vsel %vm3416, %v3388, 0
        %v3460 = vsel %vm3416, %v3389, 0
        %v3463 = vsel %vm3416, %v3390, 0
        %v3466 = vsel %vm3416, %v3391, 0
        %v3469 = vsel %vm3416, %v3392, 0
        %v3472 = vsel %vm3416, %v3393, 0
        %v3475 = vsel %vm3416, %v3394, 0
        %v3478 = vsel %vm3416, %v3395, 0
        %v3481 = vsel %vm3416, %v3396, 0
        %v3484 = vsel %vm3416, %v3397, 0
        %v3487 = vsel %vm3416, %v3398, 0
        %v3490 = vsel %vm3416, %v3399, 0
        %v3493 = vsel %vm3416, %v3400, 0
        %v3496 = vsel %vm3416, %v3401, 0
        %v3499 = vsel %vm3416, %v3402, 0
        %v3502 = vsel %vm3416, %v3403, 0
        %v3505 = vsel %vm3416, %v3404, 0
        %v3508 = vsel %vm3416, %v3405, 0
        %v3511 = vsel %vm3416, %v3406, 0
        %vm3513 = vcmask 1043456
        %v3515 = vsel %vm3513, %v3411, 0
        %3517 = vmatpush.msra.mxu0 0.0
        %3518 = vmatpush.msra.mxu0 0.0
        %3519 = vmatpush.msra.mxu0 0.0
        %3520 = vmatpush.msra.mxu0 0.0
        %3521 = vmatpush.msra.mxu0 0.0
        %3522 = vmatpush.msra.mxu0 0.0
        %3523 = vmatpush.msra.mxu0 0.0
        %3524 = vmatpush.msra.mxu0 0.0
        %3525 = vmatpush.msra.mxu0 0.0
        %3526 = vmatpush.msra.mxu0 0.0
        %3527 = vmatpush.msra.mxu0 0.0
        %3528 = vmatpush.msra.mxu0 %v3515
        %3529 = vmatpush.msra.mxu0 %v3410
        %3530 = vmatpush.msra.mxu0 %v3409
        %3531 = vmatpush.msra.mxu0 %v3408
        %3532 = vmatpush.msra.mxu0 %v3407
        %3533 = vmatmul.f32.gmra.mxu0 %v3418
        %v3534 = vpop.f32.mrf.mxu0
        %v3535 = vadd.f32 %v3414, %v3534
        %3536 = vmatmul.f32.gmra.mxu0 %v3421
        %v3537 = vpop.f32.mrf.mxu0
        %v3538 = vadd.f32 %v3414, %v3537
        %3539 = vmatmul.f32.gmra.mxu0 %v3424
        %v3540 = vpop.f32.mrf.mxu0
        %v3541 = vadd.f32 %v3414, %v3540
        %3542 = vmatmul.f32.gmra.mxu0 %v3427
        %v3543 = vpop.f32.mrf.mxu0
        %v3544 = vadd.f32 %v3414, %v3543
        %3545 = vmatmul.f32.gmra.mxu0 %v3430
        %v3546 = vpop.f32.mrf.mxu0
        %v3547 = vadd.f32 %v3414, %v3546
        %3548 = vmatmul.f32.gmra.mxu0 %v3433
        %v3549 = vpop.f32.mrf.mxu0
        %v3550 = vadd.f32 %v3414, %v3549
        %3551 = vmatmul.f32.gmra.mxu0 %v3436
        %v3552 = vpop.f32.mrf.mxu0
        %v3553 = vadd.f32 %v3414, %v3552
        %3554 = vmatmul.f32.gmra.mxu0 %v3439
        %v3555 = vpop.f32.mrf.mxu0
        %v3556 = vadd.f32 %v3414, %v3555
        %3557 = vmatmul.f32.gmra.mxu0 %v3442
        %v3558 = vpop.f32.mrf.mxu0
        %v3559 = vadd.f32 %v3414, %v3558
        %3560 = vmatmul.f32.gmra.mxu0 %v3445
        %v3561 = vpop.f32.mrf.mxu0
        %v3562 = vadd.f32 %v3414, %v3561
        %3563 = vmatmul.f32.gmra.mxu0 %v3448
        %v3564 = vpop.f32.mrf.mxu0
        %v3565 = vadd.f32 %v3414, %v3564
        %3566 = vmatmul.f32.gmra.mxu0 %v3451
        %v3567 = vpop.f32.mrf.mxu0
        %v3568 = vadd.f32 %v3414, %v3567
        %3569 = vmatmul.f32.gmra.mxu0 %v3454
        %v3570 = vpop.f32.mrf.mxu0
        %v3571 = vadd.f32 %v3414, %v3570
        %3572 = vmatmul.f32.gmra.mxu0 %v3457
        %v3573 = vpop.f32.mrf.mxu0
        %v3574 = vadd.f32 %v3414, %v3573
        %3575 = vmatmul.f32.gmra.mxu0 %v3460
        %v3576 = vpop.f32.mrf.mxu0
        %v3577 = vadd.f32 %v3414, %v3576
        %3578 = vmatmul.f32.gmra.mxu0 %v3463
        %v3579 = vpop.f32.mrf.mxu0
        %v3580 = vadd.f32 %v3414, %v3579
        %3581 = vmatmul.f32.gmra.mxu0 %v3466
        %v3582 = vpop.f32.mrf.mxu0
        %v3583 = vadd.f32 %v3414, %v3582
        %3584 = vmatmul.f32.gmra.mxu0 %v3469
        %v3585 = vpop.f32.mrf.mxu0
        %v3586 = vadd.f32 %v3414, %v3585
        %3587 = vmatmul.f32.gmra.mxu0 %v3472
        %v3588 = vpop.f32.mrf.mxu0
        %v3589 = vadd.f32 %v3414, %v3588
        %3590 = vmatmul.f32.gmra.mxu0 %v3475
        %v3591 = vpop.f32.mrf.mxu0
        %v3592 = vadd.f32 %v3414, %v3591
        %3593 = vmatmul.f32.gmra.mxu0 %v3478
        %v3594 = vpop.f32.mrf.mxu0
        %v3595 = vadd.f32 %v3414, %v3594
        %3596 = vmatmul.f32.gmra.mxu0 %v3481
        %v3597 = vpop.f32.mrf.mxu0
        %v3598 = vadd.f32 %v3414, %v3597
        %3599 = vmatmul.f32.gmra.mxu0 %v3484
        %v3600 = vpop.f32.mrf.mxu0
        %v3601 = vadd.f32 %v3414, %v3600
        %3602 = vmatmul.f32.gmra.mxu0 %v3487
        %v3603 = vpop.f32.mrf.mxu0
        %v3604 = vadd.f32 %v3414, %v3603
        %3605 = vmatmul.f32.gmra.mxu0 %v3490
        %v3606 = vpop.f32.mrf.mxu0
        %v3607 = vadd.f32 %v3414, %v3606
        %3608 = vmatmul.f32.gmra.mxu0 %v3493
        %v3609 = vpop.f32.mrf.mxu0
        %v3610 = vadd.f32 %v3414, %v3609
        %3611 = vmatmul.f32.gmra.mxu0 %v3496
        %v3612 = vpop.f32.mrf.mxu0
        %v3613 = vadd.f32 %v3414, %v3612
        %3614 = vmatmul.f32.gmra.mxu0 %v3499
        %v3615 = vpop.f32.mrf.mxu0
        %v3616 = vadd.f32 %v3414, %v3615
        %3617 = vmatmul.f32.gmra.mxu0 %v3502
        %v3618 = vpop.f32.mrf.mxu0
        %v3619 = vadd.f32 %v3414, %v3618
        %3620 = vmatmul.f32.gmra.mxu0 %v3505
        %v3621 = vpop.f32.mrf.mxu0
        %v3622 = vadd.f32 %v3414, %v3621
        %3623 = vmatmul.f32.gmra.mxu0 %v3508
        %v3624 = vpop.f32.mrf.mxu0
        %v3625 = vadd.f32 %v3414, %v3624
        %3626 = vmatmul.f32.gmra.mxu0 %v3511
        %v3627 = vpop.f32.mrf.mxu0
        %v3628 = vadd.f32 %v3414, %v3627
        %3629 = vdwg.mxu0
        %v3630 = vxor.u32 %v3535, 2147483648
        %v3631 = vxor.u32 %v3538, 2147483648
        %v3632 = vxor.u32 %v3541, 2147483648
        %v3633 = vxor.u32 %v3544, 2147483648
        %v3634 = vxor.u32 %v3547, 2147483648
        %v3635 = vxor.u32 %v3550, 2147483648
        %v3636 = vxor.u32 %v3553, 2147483648
        %v3637 = vxor.u32 %v3556, 2147483648
        %v3638 = vxor.u32 %v3559, 2147483648
        %v3639 = vxor.u32 %v3562, 2147483648
        %v3640 = vxor.u32 %v3565, 2147483648
        %v3641 = vxor.u32 %v3568, 2147483648
        %v3642 = vxor.u32 %v3571, 2147483648
        %v3643 = vxor.u32 %v3574, 2147483648
        %v3644 = vxor.u32 %v3577, 2147483648
        %v3645 = vxor.u32 %v3580, 2147483648
        %v3646 = vxor.u32 %v3583, 2147483648
        %v3647 = vxor.u32 %v3586, 2147483648
        %v3648 = vxor.u32 %v3589, 2147483648
        %v3649 = vxor.u32 %v3592, 2147483648
        %v3650 = vxor.u32 %v3595, 2147483648
        %v3651 = vxor.u32 %v3598, 2147483648
        %v3652 = vxor.u32 %v3601, 2147483648
        %v3653 = vxor.u32 %v3604, 2147483648
        %v3654 = vxor.u32 %v3607, 2147483648
        %v3655 = vxor.u32 %v3610, 2147483648
        %v3656 = vxor.u32 %v3613, 2147483648
        %v3657 = vxor.u32 %v3616, 2147483648
        %v3658 = vxor.u32 %v3619, 2147483648
        %v3659 = vxor.u32 %v3622, 2147483648
        %v3660 = vxor.u32 %v3625, 2147483648
        %v3661 = vxor.u32 %v3628, 2147483648
        %v3662 = vmul.f32 %v3630, 1.442695
        %v3663 = vpow.pop %v3662
        %v3664 = vmul.f32 %v3631, 1.442695
        %v3665 = vpow.pop %v3664
        %v3666 = vmul.f32 %v3632, 1.442695
        %v3667 = vpow.pop %v3666
        %v3668 = vmul.f32 %v3633, 1.442695
        %v3669 = vpow.pop %v3668
        %v3670 = vmul.f32 %v3634, 1.442695
        %v3671 = vpow.pop %v3670
        %v3672 = vmul.f32 %v3635, 1.442695
        %v3673 = vpow.pop %v3672
        %v3674 = vmul.f32 %v3636, 1.442695
        %v3675 = vpow.pop %v3674
        %v3676 = vmul.f32 %v3637, 1.442695
        %v3677 = vpow.pop %v3676
        %v3678 = vmul.f32 %v3638, 1.442695
        %v3679 = vpow.pop %v3678
        %v3680 = vmul.f32 %v3639, 1.442695
        %v3681 = vpow.pop %v3680
        %v3682 = vmul.f32 %v3640, 1.442695
        %v3683 = vpow.pop %v3682
        %v3684 = vmul.f32 %v3641, 1.442695
        %v3685 = vpow.pop %v3684
        %v3686 = vmul.f32 %v3642, 1.442695
        %v3687 = vpow.pop %v3686
        %v3688 = vmul.f32 %v3643, 1.442695
        %v3689 = vpow.pop %v3688
        %v3690 = vmul.f32 %v3644, 1.442695
        %v3691 = vpow.pop %v3690
        %v3692 = vmul.f32 %v3645, 1.442695
        %v3693 = vpow.pop %v3692
        %v3694 = vmul.f32 %v3646, 1.442695
        %v3695 = vpow.pop %v3694
        %v3696 = vmul.f32 %v3647, 1.442695
        %v3697 = vpow.pop %v3696
        %v3698 = vmul.f32 %v3648, 1.442695
        %v3699 = vpow.pop %v3698
        %v3700 = vmul.f32 %v3649, 1.442695
        %v3701 = vpow.pop %v3700
        %v3702 = vmul.f32 %v3650, 1.442695
        %v3703 = vpow.pop %v3702
        %v3704 = vmul.f32 %v3651, 1.442695
        %v3705 = vpow.pop %v3704
        %v3706 = vmul.f32 %v3652, 1.442695
        %v3707 = vpow.pop %v3706
        %v3708 = vmul.f32 %v3653, 1.442695
        %v3709 = vpow.pop %v3708
        %v3710 = vmul.f32 %v3654, 1.442695
        %v3711 = vpow.pop %v3710
        %v3712 = vmul.f32 %v3655, 1.442695
        %v3713 = vpow.pop %v3712
        %v3714 = vmul.f32 %v3656, 1.442695
        %v3715 = vpow.pop %v3714
        %v3716 = vmul.f32 %v3657, 1.442695
        %v3717 = vpow.pop %v3716
        %v3718 = vmul.f32 %v3658, 1.442695
        %v3719 = vpow.pop %v3718
        %v3720 = vmul.f32 %v3659, 1.442695
        %v3721 = vpow.pop %v3720
        %v3722 = vmul.f32 %v3660, 1.442695
        %v3723 = vpow.pop %v3722
        %v3724 = vmul.f32 %v3661, 1.442695
        %v3725 = vpow.pop %v3724
        %v3726 = vadd.f32 %v3663, 1.0
        %v3727 = vadd.f32 %v3665, 1.0
        %v3728 = vadd.f32 %v3667, 1.0
        %v3729 = vadd.f32 %v3669, 1.0
        %v3730 = vadd.f32 %v3671, 1.0
        %v3731 = vadd.f32 %v3673, 1.0
        %v3732 = vadd.f32 %v3675, 1.0
        %v3733 = vadd.f32 %v3677, 1.0
        %v3734 = vadd.f32 %v3679, 1.0
        %v3735 = vadd.f32 %v3681, 1.0
        %v3736 = vadd.f32 %v3683, 1.0
        %v3737 = vadd.f32 %v3685, 1.0
        %v3738 = vadd.f32 %v3687, 1.0
        %v3739 = vadd.f32 %v3689, 1.0
        %v3740 = vadd.f32 %v3691, 1.0
        %v3741 = vadd.f32 %v3693, 1.0
        %v3742 = vadd.f32 %v3695, 1.0
        %v3743 = vadd.f32 %v3697, 1.0
        %v3744 = vadd.f32 %v3699, 1.0
        %v3745 = vadd.f32 %v3701, 1.0
        %v3746 = vadd.f32 %v3703, 1.0
        %v3747 = vadd.f32 %v3705, 1.0
        %v3748 = vadd.f32 %v3707, 1.0
        %v3749 = vadd.f32 %v3709, 1.0
        %v3750 = vadd.f32 %v3711, 1.0
        %v3751 = vadd.f32 %v3713, 1.0
        %v3752 = vadd.f32 %v3715, 1.0
        %v3753 = vadd.f32 %v3717, 1.0
        %v3754 = vadd.f32 %v3719, 1.0
        %v3755 = vadd.f32 %v3721, 1.0
        %v3756 = vadd.f32 %v3723, 1.0
        %v3757 = vadd.f32 %v3725, 1.0
        %v3758 = vrcp.pop %v3726
        %v3759 = vmul.f32 %v3726, %v3758
        %v3760 = vsub.f32 1.0, %v3759
        %v3761 = vmul.f32 %v3758, %v3760
        %v3762 = vadd.f32 %v3758, %v3761
        %vm3763 = vweird.f32 %v3726
        %vm3764 = vweird.f32 %v3758
        %vm3765 = vmor %vm3763, %vm3764
        %v3766 = vsel %vm3765, %v3758, %v3762
        %v3767 = vand.u32 2147483647, %v3726
        %vm3768 = vcmp.eq.f32.partialorder %v3767, 8.507059e+37
        %v3769 = vand.u32 %v3726, 2147483648
        %v3770 = vor.u32 1.1754944e-38, %v3769
        %v3771 = vsel %vm3768, %v3770, %v3766
        %v3772 = vmul.f32 1.0, %v3771
        %v3773 = vrcp.pop %v3727
        %v3774 = vmul.f32 %v3727, %v3773
        %v3775 = vsub.f32 1.0, %v3774
        %v3776 = vmul.f32 %v3773, %v3775
        %v3777 = vadd.f32 %v3773, %v3776
        %vm3778 = vweird.f32 %v3727
        %vm3779 = vweird.f32 %v3773
        %vm3780 = vmor %vm3778, %vm3779
        %v3781 = vsel %vm3780, %v3773, %v3777
        %v3782 = vand.u32 2147483647, %v3727
        %vm3783 = vcmp.eq.f32.partialorder %v3782, 8.507059e+37
        %v3784 = vand.u32 %v3727, 2147483648
        %v3785 = vor.u32 1.1754944e-38, %v3784
        %v3786 = vsel %vm3783, %v3785, %v3781
        %v3787 = vmul.f32 1.0, %v3786
        %v3788 = vrcp.pop %v3728
        %v3789 = vmul.f32 %v3728, %v3788
        %v3790 = vsub.f32 1.0, %v3789
        %v3791 = vmul.f32 %v3788, %v3790
        %v3792 = vadd.f32 %v3788, %v3791
        %vm3793 = vweird.f32 %v3728
        %vm3794 = vweird.f32 %v3788
        %vm3795 = vmor %vm3793, %vm3794
        %v3796 = vsel %vm3795, %v3788, %v3792
        %v3797 = vand.u32 2147483647, %v3728
        %vm3798 = vcmp.eq.f32.partialorder %v3797, 8.507059e+37
        %v3799 = vand.u32 %v3728, 2147483648
        %v3800 = vor.u32 1.1754944e-38, %v3799
        %v3801 = vsel %vm3798, %v3800, %v3796
        %v3802 = vmul.f32 1.0, %v3801
        %v3803 = vrcp.pop %v3729
        %v3804 = vmul.f32 %v3729, %v3803
        %v3805 = vsub.f32 1.0, %v3804
        %v3806 = vmul.f32 %v3803, %v3805
        %v3807 = vadd.f32 %v3803, %v3806
        %vm3808 = vweird.f32 %v3729
        %vm3809 = vweird.f32 %v3803
        %vm3810 = vmor %vm3808, %vm3809
        %v3811 = vsel %vm3810, %v3803, %v3807
        %v3812 = vand.u32 2147483647, %v3729
        %vm3813 = vcmp.eq.f32.partialorder %v3812, 8.507059e+37
        %v3814 = vand.u32 %v3729, 2147483648
        %v3815 = vor.u32 1.1754944e-38, %v3814
        %v3816 = vsel %vm3813, %v3815, %v3811
        %v3817 = vmul.f32 1.0, %v3816
        %v3818 = vrcp.pop %v3730
        %v3819 = vmul.f32 %v3730, %v3818
        %v3820 = vsub.f32 1.0, %v3819
        %v3821 = vmul.f32 %v3818, %v3820
        %v3822 = vadd.f32 %v3818, %v3821
        %vm3823 = vweird.f32 %v3730
        %vm3824 = vweird.f32 %v3818
        %vm3825 = vmor %vm3823, %vm3824
        %v3826 = vsel %vm3825, %v3818, %v3822
        %v3827 = vand.u32 2147483647, %v3730
        %vm3828 = vcmp.eq.f32.partialorder %v3827, 8.507059e+37
        %v3829 = vand.u32 %v3730, 2147483648
        %v3830 = vor.u32 1.1754944e-38, %v3829
        %v3831 = vsel %vm3828, %v3830, %v3826
        %v3832 = vmul.f32 1.0, %v3831
        %v3833 = vrcp.pop %v3731
        %v3834 = vmul.f32 %v3731, %v3833
        %v3835 = vsub.f32 1.0, %v3834
        %v3836 = vmul.f32 %v3833, %v3835
        %v3837 = vadd.f32 %v3833, %v3836
        %vm3838 = vweird.f32 %v3731
        %vm3839 = vweird.f32 %v3833
        %vm3840 = vmor %vm3838, %vm3839
        %v3841 = vsel %vm3840, %v3833, %v3837
        %v3842 = vand.u32 2147483647, %v3731
        %vm3843 = vcmp.eq.f32.partialorder %v3842, 8.507059e+37
        %v3844 = vand.u32 %v3731, 2147483648
        %v3845 = vor.u32 1.1754944e-38, %v3844
        %v3846 = vsel %vm3843, %v3845, %v3841
        %v3847 = vmul.f32 1.0, %v3846
        %v3848 = vrcp.pop %v3732
        %v3849 = vmul.f32 %v3732, %v3848
        %v3850 = vsub.f32 1.0, %v3849
        %v3851 = vmul.f32 %v3848, %v3850
        %v3852 = vadd.f32 %v3848, %v3851
        %vm3853 = vweird.f32 %v3732
        %vm3854 = vweird.f32 %v3848
        %vm3855 = vmor %vm3853, %vm3854
        %v3856 = vsel %vm3855, %v3848, %v3852
        %v3857 = vand.u32 2147483647, %v3732
        %vm3858 = vcmp.eq.f32.partialorder %v3857, 8.507059e+37
        %v3859 = vand.u32 %v3732, 2147483648
        %v3860 = vor.u32 1.1754944e-38, %v3859
        %v3861 = vsel %vm3858, %v3860, %v3856
        %v3862 = vmul.f32 1.0, %v3861
        %v3863 = vrcp.pop %v3733
        %v3864 = vmul.f32 %v3733, %v3863
        %v3865 = vsub.f32 1.0, %v3864
        %v3866 = vmul.f32 %v3863, %v3865
        %v3867 = vadd.f32 %v3863, %v3866
        %vm3868 = vweird.f32 %v3733
        %vm3869 = vweird.f32 %v3863
        %vm3870 = vmor %vm3868, %vm3869
        %v3871 = vsel %vm3870, %v3863, %v3867
        %v3872 = vand.u32 2147483647, %v3733
        %vm3873 = vcmp.eq.f32.partialorder %v3872, 8.507059e+37
        %v3874 = vand.u32 %v3733, 2147483648
        %v3875 = vor.u32 1.1754944e-38, %v3874
        %v3876 = vsel %vm3873, %v3875, %v3871
        %v3877 = vmul.f32 1.0, %v3876
        %v3878 = vrcp.pop %v3734
        %v3879 = vmul.f32 %v3734, %v3878
        %v3880 = vsub.f32 1.0, %v3879
        %v3881 = vmul.f32 %v3878, %v3880
        %v3882 = vadd.f32 %v3878, %v3881
        %vm3883 = vweird.f32 %v3734
        %vm3884 = vweird.f32 %v3878
        %vm3885 = vmor %vm3883, %vm3884
        %v3886 = vsel %vm3885, %v3878, %v3882
        %v3887 = vand.u32 2147483647, %v3734
        %vm3888 = vcmp.eq.f32.partialorder %v3887, 8.507059e+37
        %v3889 = vand.u32 %v3734, 2147483648
        %v3890 = vor.u32 1.1754944e-38, %v3889
        %v3891 = vsel %vm3888, %v3890, %v3886
        %v3892 = vmul.f32 1.0, %v3891
        %v3893 = vrcp.pop %v3735
        %v3894 = vmul.f32 %v3735, %v3893
        %v3895 = vsub.f32 1.0, %v3894
        %v3896 = vmul.f32 %v3893, %v3895
        %v3897 = vadd.f32 %v3893, %v3896
        %vm3898 = vweird.f32 %v3735
        %vm3899 = vweird.f32 %v3893
        %vm3900 = vmor %vm3898, %vm3899
        %v3901 = vsel %vm3900, %v3893, %v3897
        %v3902 = vand.u32 2147483647, %v3735
        %vm3903 = vcmp.eq.f32.partialorder %v3902, 8.507059e+37
        %v3904 = vand.u32 %v3735, 2147483648
        %v3905 = vor.u32 1.1754944e-38, %v3904
        %v3906 = vsel %vm3903, %v3905, %v3901
        %v3907 = vmul.f32 1.0, %v3906
        %v3908 = vrcp.pop %v3736
        %v3909 = vmul.f32 %v3736, %v3908
        %v3910 = vsub.f32 1.0, %v3909
        %v3911 = vmul.f32 %v3908, %v3910
        %v3912 = vadd.f32 %v3908, %v3911
        %vm3913 = vweird.f32 %v3736
        %vm3914 = vweird.f32 %v3908
        %vm3915 = vmor %vm3913, %vm3914
        %v3916 = vsel %vm3915, %v3908, %v3912
        %v3917 = vand.u32 2147483647, %v3736
        %vm3918 = vcmp.eq.f32.partialorder %v3917, 8.507059e+37
        %v3919 = vand.u32 %v3736, 2147483648
        %v3920 = vor.u32 1.1754944e-38, %v3919
        %v3921 = vsel %vm3918, %v3920, %v3916
        %v3922 = vmul.f32 1.0, %v3921
        %v3923 = vrcp.pop %v3737
        %v3924 = vmul.f32 %v3737, %v3923
        %v3925 = vsub.f32 1.0, %v3924
        %v3926 = vmul.f32 %v3923, %v3925
        %v3927 = vadd.f32 %v3923, %v3926
        %vm3928 = vweird.f32 %v3737
        %vm3929 = vweird.f32 %v3923
        %vm3930 = vmor %vm3928, %vm3929
        %v3931 = vsel %vm3930, %v3923, %v3927
        %v3932 = vand.u32 2147483647, %v3737
        %vm3933 = vcmp.eq.f32.partialorder %v3932, 8.507059e+37
        %v3934 = vand.u32 %v3737, 2147483648
        %v3935 = vor.u32 1.1754944e-38, %v3934
        %v3936 = vsel %vm3933, %v3935, %v3931
        %v3937 = vmul.f32 1.0, %v3936
        %v3938 = vrcp.pop %v3738
        %v3939 = vmul.f32 %v3738, %v3938
        %v3940 = vsub.f32 1.0, %v3939
        %v3941 = vmul.f32 %v3938, %v3940
        %v3942 = vadd.f32 %v3938, %v3941
        %vm3943 = vweird.f32 %v3738
        %vm3944 = vweird.f32 %v3938
        %vm3945 = vmor %vm3943, %vm3944
        %v3946 = vsel %vm3945, %v3938, %v3942
        %v3947 = vand.u32 2147483647, %v3738
        %vm3948 = vcmp.eq.f32.partialorder %v3947, 8.507059e+37
        %v3949 = vand.u32 %v3738, 2147483648
        %v3950 = vor.u32 1.1754944e-38, %v3949
        %v3951 = vsel %vm3948, %v3950, %v3946
        %v3952 = vmul.f32 1.0, %v3951
        %v3953 = vrcp.pop %v3739
        %v3954 = vmul.f32 %v3739, %v3953
        %v3955 = vsub.f32 1.0, %v3954
        %v3956 = vmul.f32 %v3953, %v3955
        %v3957 = vadd.f32 %v3953, %v3956
        %vm3958 = vweird.f32 %v3739
        %vm3959 = vweird.f32 %v3953
        %vm3960 = vmor %vm3958, %vm3959
        %v3961 = vsel %vm3960, %v3953, %v3957
        %v3962 = vand.u32 2147483647, %v3739
        %vm3963 = vcmp.eq.f32.partialorder %v3962, 8.507059e+37
        %v3964 = vand.u32 %v3739, 2147483648
        %v3965 = vor.u32 1.1754944e-38, %v3964
        %v3966 = vsel %vm3963, %v3965, %v3961
        %v3967 = vmul.f32 1.0, %v3966
        %v3968 = vrcp.pop %v3740
        %v3969 = vmul.f32 %v3740, %v3968
        %v3970 = vsub.f32 1.0, %v3969
        %v3971 = vmul.f32 %v3968, %v3970
        %v3972 = vadd.f32 %v3968, %v3971
        %vm3973 = vweird.f32 %v3740
        %vm3974 = vweird.f32 %v3968
        %vm3975 = vmor %vm3973, %vm3974
        %v3976 = vsel %vm3975, %v3968, %v3972
        %v3977 = vand.u32 2147483647, %v3740
        %vm3978 = vcmp.eq.f32.partialorder %v3977, 8.507059e+37
        %v3979 = vand.u32 %v3740, 2147483648
        %v3980 = vor.u32 1.1754944e-38, %v3979
        %v3981 = vsel %vm3978, %v3980, %v3976
        %v3982 = vmul.f32 1.0, %v3981
        %v3983 = vrcp.pop %v3741
        %v3984 = vmul.f32 %v3741, %v3983
        %v3985 = vsub.f32 1.0, %v3984
        %v3986 = vmul.f32 %v3983, %v3985
        %v3987 = vadd.f32 %v3983, %v3986
        %vm3988 = vweird.f32 %v3741
        %vm3989 = vweird.f32 %v3983
        %vm3990 = vmor %vm3988, %vm3989
        %v3991 = vsel %vm3990, %v3983, %v3987
        %v3992 = vand.u32 2147483647, %v3741
        %vm3993 = vcmp.eq.f32.partialorder %v3992, 8.507059e+37
        %v3994 = vand.u32 %v3741, 2147483648
        %v3995 = vor.u32 1.1754944e-38, %v3994
        %v3996 = vsel %vm3993, %v3995, %v3991
        %v3997 = vmul.f32 1.0, %v3996
        %v3998 = vrcp.pop %v3742
        %v3999 = vmul.f32 %v3742, %v3998
        %v4000 = vsub.f32 1.0, %v3999
        %v4001 = vmul.f32 %v3998, %v4000
        %v4002 = vadd.f32 %v3998, %v4001
        %vm4003 = vweird.f32 %v3742
        %vm4004 = vweird.f32 %v3998
        %vm4005 = vmor %vm4003, %vm4004
        %v4006 = vsel %vm4005, %v3998, %v4002
        %v4007 = vand.u32 2147483647, %v3742
        %vm4008 = vcmp.eq.f32.partialorder %v4007, 8.507059e+37
        %v4009 = vand.u32 %v3742, 2147483648
        %v4010 = vor.u32 1.1754944e-38, %v4009
        %v4011 = vsel %vm4008, %v4010, %v4006
        %v4012 = vmul.f32 1.0, %v4011
        %v4013 = vrcp.pop %v3743
        %v4014 = vmul.f32 %v3743, %v4013
        %v4015 = vsub.f32 1.0, %v4014
        %v4016 = vmul.f32 %v4013, %v4015
        %v4017 = vadd.f32 %v4013, %v4016
        %vm4018 = vweird.f32 %v3743
        %vm4019 = vweird.f32 %v4013
        %vm4020 = vmor %vm4018, %vm4019
        %v4021 = vsel %vm4020, %v4013, %v4017
        %v4022 = vand.u32 2147483647, %v3743
        %vm4023 = vcmp.eq.f32.partialorder %v4022, 8.507059e+37
        %v4024 = vand.u32 %v3743, 2147483648
        %v4025 = vor.u32 1.1754944e-38, %v4024
        %v4026 = vsel %vm4023, %v4025, %v4021
        %v4027 = vmul.f32 1.0, %v4026
        %v4028 = vrcp.pop %v3744
        %v4029 = vmul.f32 %v3744, %v4028
        %v4030 = vsub.f32 1.0, %v4029
        %v4031 = vmul.f32 %v4028, %v4030
        %v4032 = vadd.f32 %v4028, %v4031
        %vm4033 = vweird.f32 %v3744
        %vm4034 = vweird.f32 %v4028
        %vm4035 = vmor %vm4033, %vm4034
        %v4036 = vsel %vm4035, %v4028, %v4032
        %v4037 = vand.u32 2147483647, %v3744
        %vm4038 = vcmp.eq.f32.partialorder %v4037, 8.507059e+37
        %v4039 = vand.u32 %v3744, 2147483648
        %v4040 = vor.u32 1.1754944e-38, %v4039
        %v4041 = vsel %vm4038, %v4040, %v4036
        %v4042 = vmul.f32 1.0, %v4041
        %v4043 = vrcp.pop %v3745
        %v4044 = vmul.f32 %v3745, %v4043
        %v4045 = vsub.f32 1.0, %v4044
        %v4046 = vmul.f32 %v4043, %v4045
        %v4047 = vadd.f32 %v4043, %v4046
        %vm4048 = vweird.f32 %v3745
        %vm4049 = vweird.f32 %v4043
        %vm4050 = vmor %vm4048, %vm4049
        %v4051 = vsel %vm4050, %v4043, %v4047
        %v4052 = vand.u32 2147483647, %v3745
        %vm4053 = vcmp.eq.f32.partialorder %v4052, 8.507059e+37
        %v4054 = vand.u32 %v3745, 2147483648
        %v4055 = vor.u32 1.1754944e-38, %v4054
        %v4056 = vsel %vm4053, %v4055, %v4051
        %v4057 = vmul.f32 1.0, %v4056
        %v4058 = vrcp.pop %v3746
        %v4059 = vmul.f32 %v3746, %v4058
        %v4060 = vsub.f32 1.0, %v4059
        %v4061 = vmul.f32 %v4058, %v4060
        %v4062 = vadd.f32 %v4058, %v4061
        %vm4063 = vweird.f32 %v3746
        %vm4064 = vweird.f32 %v4058
        %vm4065 = vmor %vm4063, %vm4064
        %v4066 = vsel %vm4065, %v4058, %v4062
        %v4067 = vand.u32 2147483647, %v3746
        %vm4068 = vcmp.eq.f32.partialorder %v4067, 8.507059e+37
        %v4069 = vand.u32 %v3746, 2147483648
        %v4070 = vor.u32 1.1754944e-38, %v4069
        %v4071 = vsel %vm4068, %v4070, %v4066
        %v4072 = vmul.f32 1.0, %v4071
        %v4073 = vrcp.pop %v3747
        %v4074 = vmul.f32 %v3747, %v4073
        %v4075 = vsub.f32 1.0, %v4074
        %v4076 = vmul.f32 %v4073, %v4075
        %v4077 = vadd.f32 %v4073, %v4076
        %vm4078 = vweird.f32 %v3747
        %vm4079 = vweird.f32 %v4073
        %vm4080 = vmor %vm4078, %vm4079
        %v4081 = vsel %vm4080, %v4073, %v4077
        %v4082 = vand.u32 2147483647, %v3747
        %vm4083 = vcmp.eq.f32.partialorder %v4082, 8.507059e+37
        %v4084 = vand.u32 %v3747, 2147483648
        %v4085 = vor.u32 1.1754944e-38, %v4084
        %v4086 = vsel %vm4083, %v4085, %v4081
        %v4087 = vmul.f32 1.0, %v4086
        %v4088 = vrcp.pop %v3748
        %v4089 = vmul.f32 %v3748, %v4088
        %v4090 = vsub.f32 1.0, %v4089
        %v4091 = vmul.f32 %v4088, %v4090
        %v4092 = vadd.f32 %v4088, %v4091
        %vm4093 = vweird.f32 %v3748
        %vm4094 = vweird.f32 %v4088
        %vm4095 = vmor %vm4093, %vm4094
        %v4096 = vsel %vm4095, %v4088, %v4092
        %v4097 = vand.u32 2147483647, %v3748
        %vm4098 = vcmp.eq.f32.partialorder %v4097, 8.507059e+37
        %v4099 = vand.u32 %v3748, 2147483648
        %v4100 = vor.u32 1.1754944e-38, %v4099
        %v4101 = vsel %vm4098, %v4100, %v4096
        %v4102 = vmul.f32 1.0, %v4101
        %v4103 = vrcp.pop %v3749
        %v4104 = vmul.f32 %v3749, %v4103
        %v4105 = vsub.f32 1.0, %v4104
        %v4106 = vmul.f32 %v4103, %v4105
        %v4107 = vadd.f32 %v4103, %v4106
        %vm4108 = vweird.f32 %v3749
        %vm4109 = vweird.f32 %v4103
        %vm4110 = vmor %vm4108, %vm4109
        %v4111 = vsel %vm4110, %v4103, %v4107
        %v4112 = vand.u32 2147483647, %v3749
        %vm4113 = vcmp.eq.f32.partialorder %v4112, 8.507059e+37
        %v4114 = vand.u32 %v3749, 2147483648
        %v4115 = vor.u32 1.1754944e-38, %v4114
        %v4116 = vsel %vm4113, %v4115, %v4111
        %v4117 = vmul.f32 1.0, %v4116
        %v4118 = vrcp.pop %v3750
        %v4119 = vmul.f32 %v3750, %v4118
        %v4120 = vsub.f32 1.0, %v4119
        %v4121 = vmul.f32 %v4118, %v4120
        %v4122 = vadd.f32 %v4118, %v4121
        %vm4123 = vweird.f32 %v3750
        %vm4124 = vweird.f32 %v4118
        %vm4125 = vmor %vm4123, %vm4124
        %v4126 = vsel %vm4125, %v4118, %v4122
        %v4127 = vand.u32 2147483647, %v3750
        %vm4128 = vcmp.eq.f32.partialorder %v4127, 8.507059e+37
        %v4129 = vand.u32 %v3750, 2147483648
        %v4130 = vor.u32 1.1754944e-38, %v4129
        %v4131 = vsel %vm4128, %v4130, %v4126
        %v4132 = vmul.f32 1.0, %v4131
        %v4133 = vrcp.pop %v3751
        %v4134 = vmul.f32 %v3751, %v4133
        %v4135 = vsub.f32 1.0, %v4134
        %v4136 = vmul.f32 %v4133, %v4135
        %v4137 = vadd.f32 %v4133, %v4136
        %vm4138 = vweird.f32 %v3751
        %vm4139 = vweird.f32 %v4133
        %vm4140 = vmor %vm4138, %vm4139
        %v4141 = vsel %vm4140, %v4133, %v4137
        %v4142 = vand.u32 2147483647, %v3751
        %vm4143 = vcmp.eq.f32.partialorder %v4142, 8.507059e+37
        %v4144 = vand.u32 %v3751, 2147483648
        %v4145 = vor.u32 1.1754944e-38, %v4144
        %v4146 = vsel %vm4143, %v4145, %v4141
        %v4147 = vmul.f32 1.0, %v4146
        %v4148 = vrcp.pop %v3752
        %v4149 = vmul.f32 %v3752, %v4148
        %v4150 = vsub.f32 1.0, %v4149
        %v4151 = vmul.f32 %v4148, %v4150
        %v4152 = vadd.f32 %v4148, %v4151
        %vm4153 = vweird.f32 %v3752
        %vm4154 = vweird.f32 %v4148
        %vm4155 = vmor %vm4153, %vm4154
        %v4156 = vsel %vm4155, %v4148, %v4152
        %v4157 = vand.u32 2147483647, %v3752
        %vm4158 = vcmp.eq.f32.partialorder %v4157, 8.507059e+37
        %v4159 = vand.u32 %v3752, 2147483648
        %v4160 = vor.u32 1.1754944e-38, %v4159
        %v4161 = vsel %vm4158, %v4160, %v4156
        %v4162 = vmul.f32 1.0, %v4161
        %v4163 = vrcp.pop %v3753
        %v4164 = vmul.f32 %v3753, %v4163
        %v4165 = vsub.f32 1.0, %v4164
        %v4166 = vmul.f32 %v4163, %v4165
        %v4167 = vadd.f32 %v4163, %v4166
        %vm4168 = vweird.f32 %v3753
        %vm4169 = vweird.f32 %v4163
        %vm4170 = vmor %vm4168, %vm4169
        %v4171 = vsel %vm4170, %v4163, %v4167
        %v4172 = vand.u32 2147483647, %v3753
        %vm4173 = vcmp.eq.f32.partialorder %v4172, 8.507059e+37
        %v4174 = vand.u32 %v3753, 2147483648
        %v4175 = vor.u32 1.1754944e-38, %v4174
        %v4176 = vsel %vm4173, %v4175, %v4171
        %v4177 = vmul.f32 1.0, %v4176
        %v4178 = vrcp.pop %v3754
        %v4179 = vmul.f32 %v3754, %v4178
        %v4180 = vsub.f32 1.0, %v4179
        %v4181 = vmul.f32 %v4178, %v4180
        %v4182 = vadd.f32 %v4178, %v4181
        %vm4183 = vweird.f32 %v3754
        %vm4184 = vweird.f32 %v4178
        %vm4185 = vmor %vm4183, %vm4184
        %v4186 = vsel %vm4185, %v4178, %v4182
        %v4187 = vand.u32 2147483647, %v3754
        %vm4188 = vcmp.eq.f32.partialorder %v4187, 8.507059e+37
        %v4189 = vand.u32 %v3754, 2147483648
        %v4190 = vor.u32 1.1754944e-38, %v4189
        %v4191 = vsel %vm4188, %v4190, %v4186
        %v4192 = vmul.f32 1.0, %v4191
        %v4193 = vrcp.pop %v3755
        %v4194 = vmul.f32 %v3755, %v4193
        %v4195 = vsub.f32 1.0, %v4194
        %v4196 = vmul.f32 %v4193, %v4195
        %v4197 = vadd.f32 %v4193, %v4196
        %vm4198 = vweird.f32 %v3755
        %vm4199 = vweird.f32 %v4193
        %vm4200 = vmor %vm4198, %vm4199
        %v4201 = vsel %vm4200, %v4193, %v4197
        %v4202 = vand.u32 2147483647, %v3755
        %vm4203 = vcmp.eq.f32.partialorder %v4202, 8.507059e+37
        %v4204 = vand.u32 %v3755, 2147483648
        %v4205 = vor.u32 1.1754944e-38, %v4204
        %v4206 = vsel %vm4203, %v4205, %v4201
        %v4207 = vmul.f32 1.0, %v4206
        %v4208 = vrcp.pop %v3756
        %v4209 = vmul.f32 %v3756, %v4208
        %v4210 = vsub.f32 1.0, %v4209
        %v4211 = vmul.f32 %v4208, %v4210
        %v4212 = vadd.f32 %v4208, %v4211
        %vm4213 = vweird.f32 %v3756
        %vm4214 = vweird.f32 %v4208
        %vm4215 = vmor %vm4213, %vm4214
        %v4216 = vsel %vm4215, %v4208, %v4212
        %v4217 = vand.u32 2147483647, %v3756
        %vm4218 = vcmp.eq.f32.partialorder %v4217, 8.507059e+37
        %v4219 = vand.u32 %v3756, 2147483648
        %v4220 = vor.u32 1.1754944e-38, %v4219
        %v4221 = vsel %vm4218, %v4220, %v4216
        %v4222 = vmul.f32 1.0, %v4221
        %v4223 = vrcp.pop %v3757
        %v4224 = vmul.f32 %v3757, %v4223
        %v4225 = vsub.f32 1.0, %v4224
        %v4226 = vmul.f32 %v4223, %v4225
        %v4227 = vadd.f32 %v4223, %v4226
        %vm4228 = vweird.f32 %v3757
        %vm4229 = vweird.f32 %v4223
        %vm4230 = vmor %vm4228, %vm4229
        %v4231 = vsel %vm4230, %v4223, %v4227
        %v4232 = vand.u32 2147483647, %v3757
        %vm4233 = vcmp.eq.f32.partialorder %v4232, 8.507059e+37
        %v4234 = vand.u32 %v3757, 2147483648
        %v4235 = vor.u32 1.1754944e-38, %v4234
        %v4236 = vsel %vm4233, %v4235, %v4231
        %v4237 = vmul.f32 1.0, %v4236
        %v4238 = vld [vmem:[%s383] sm:$0xff]
        %v4239 = vld [vmem:[%s383 + $0x8] sm:$0xff]
        %v4240 = vld [vmem:[%s383 + $0x10] sm:$0xff]
        %v4241 = vld [vmem:[%s383 + $0x18] sm:$0xff]
        %v4242 = vld [vmem:[%s383 + $0x20] sm:$0xff]
        %v4243 = vld [vmem:[%s383 + $0x28] sm:$0xff]
        %v4244 = vld [vmem:[%s383 + $0x30] sm:$0xff]
        %v4245 = vld [vmem:[%s383 + $0x38] sm:$0xff]
        %v4254 = vrot.slane %v4238, 1
        %v4255 = vrot.slane %v4238, 2
        %v4256 = vrot.slane %v4238, 3
        %v4257 = vrot.slane %v4238, 4
        %v4258 = vrot.slane %v4238, 5
        %v4259 = vrot.slane %v4238, 6
        %v4260 = vrot.slane %v4238, 7
        %v4261 = vrot.slane %v4239, 1
        %v4262 = vrot.slane %v4239, 2
        %v4263 = vrot.slane %v4239, 3
        %v4264 = vrot.slane %v4239, 4
        %v4265 = vrot.slane %v4239, 5
        %v4266 = vrot.slane %v4239, 6
        %v4267 = vrot.slane %v4239, 7
        %v4268 = vrot.slane %v4240, 1
        %v4269 = vrot.slane %v4240, 2
        %v4270 = vrot.slane %v4240, 3
        %v4271 = vrot.slane %v4240, 4
        %v4272 = vrot.slane %v4240, 5
        %v4273 = vrot.slane %v4240, 6
        %v4274 = vrot.slane %v4240, 7
        %v4275 = vrot.slane %v4241, 1
        %v4276 = vrot.slane %v4241, 2
        %v4277 = vrot.slane %v4241, 3
        %v4278 = vrot.slane %v4241, 4
        %v4279 = vrot.slane %v4241, 5
        %v4280 = vrot.slane %v4241, 6
        %v4281 = vrot.slane %v4241, 7
        %v4282 = vrot.slane %v4242, 1
        %v4283 = vrot.slane %v4242, 2
        %v4284 = vrot.slane %v4242, 3
        %v4285 = vrot.slane %v4242, 4
        %v4286 = vrot.slane %v4242, 5
        %v4287 = vrot.slane %v4242, 6
        %v4288 = vrot.slane %v4242, 7
        %v4289 = vrot.slane %v4243, 1
        %v4290 = vrot.slane %v4243, 2
        %v4291 = vrot.slane %v4243, 3
        %v4292 = vrot.slane %v4243, 4
        %v4293 = vrot.slane %v4243, 5
        %v4294 = vrot.slane %v4243, 6
        %v4295 = vrot.slane %v4243, 7
        %v4296 = vrot.slane %v4244, 1
        %v4297 = vrot.slane %v4244, 2
        %v4298 = vrot.slane %v4244, 3
        %v4299 = vrot.slane %v4244, 4
        %v4300 = vrot.slane %v4244, 5
        %v4301 = vrot.slane %v4244, 6
        %v4302 = vrot.slane %v4244, 7
        %v4303 = vrot.slane %v4245, 1
        %v4304 = vrot.slane %v4245, 2
        %v4305 = vrot.slane %v4245, 3
        %v4306 = vrot.slane %v4245, 4
        %v4307 = vrot.slane %v4245, 5
        %v4308 = vrot.slane %v4245, 6
        %v4309 = vrot.slane %v4245, 7
        %v4366 = vsel %vm453, %v4238, 0.0
        %v4367 = vsel %vm453, %v4254, 0.0
        %v4368 = vsel %vm453, %v4255, 0.0
        %v4369 = vsel %vm453, %v4256, 0.0
        %v4370 = vsel %vm453, %v4257, 0.0
        %v4371 = vsel %vm453, %v4258, 0.0
        %v4372 = vsel %vm453, %v4259, 0.0
        %v4373 = vsel %vm453, %v4260, 0.0
        %v4374 = vsel %vm453, %v4239, 0.0
        %v4375 = vsel %vm453, %v4261, 0.0
        %v4376 = vsel %vm453, %v4262, 0.0
        %v4377 = vsel %vm453, %v4263, 0.0
        %v4378 = vsel %vm453, %v4264, 0.0
        %v4379 = vsel %vm453, %v4265, 0.0
        %v4380 = vsel %vm453, %v4266, 0.0
        %v4381 = vsel %vm453, %v4267, 0.0
        %v4382 = vsel %vm453, %v4240, 0.0
        %v4383 = vsel %vm453, %v4268, 0.0
        %v4384 = vsel %vm453, %v4269, 0.0
        %v4385 = vsel %vm453, %v4270, 0.0
        %v4386 = vsel %vm453, %v4271, 0.0
        %v4387 = vsel %vm453, %v4272, 0.0
        %v4388 = vsel %vm453, %v4273, 0.0
        %v4389 = vsel %vm453, %v4274, 0.0
        %v4390 = vsel %vm453, %v4241, 0.0
        %v4391 = vsel %vm453, %v4275, 0.0
        %v4392 = vsel %vm453, %v4276, 0.0
        %v4393 = vsel %vm453, %v4277, 0.0
        %v4394 = vsel %vm453, %v4278, 0.0
        %v4395 = vsel %vm453, %v4279, 0.0
        %v4396 = vsel %vm453, %v4280, 0.0
        %v4397 = vsel %vm453, %v4281, 0.0
        %v4398 = vsel %vm453, %v4242, 0.0
        %v4399 = vsel %vm453, %v4282, 0.0
        %v4400 = vsel %vm453, %v4283, 0.0
        %v4401 = vsel %vm453, %v4284, 0.0
        %v4402 = vsel %vm453, %v4285, 0.0
        %v4403 = vsel %vm453, %v4286, 0.0
        %v4404 = vsel %vm453, %v4287, 0.0
        %v4405 = vsel %vm453, %v4288, 0.0
        %v4406 = vsel %vm453, %v4243, 0.0
        %v4407 = vsel %vm453, %v4289, 0.0
        %v4408 = vsel %vm453, %v4290, 0.0
        %v4409 = vsel %vm453, %v4291, 0.0
        %v4410 = vsel %vm453, %v4292, 0.0
        %v4411 = vsel %vm453, %v4293, 0.0
        %v4412 = vsel %vm453, %v4294, 0.0
        %v4413 = vsel %vm453, %v4295, 0.0
        %v4414 = vsel %vm453, %v4244, 0.0
        %v4415 = vsel %vm453, %v4296, 0.0
        %v4416 = vsel %vm453, %v4297, 0.0
        %v4417 = vsel %vm453, %v4298, 0.0
        %v4418 = vsel %vm453, %v4299, 0.0
        %v4419 = vsel %vm453, %v4300, 0.0
        %v4420 = vsel %vm453, %v4301, 0.0
        %v4421 = vsel %vm453, %v4302, 0.0
        %v4422 = vsel %vm453, %v4245, 0.0
        %v4423 = vsel %vm453, %v4303, 0.0
        %v4424 = vsel %vm453, %v4304, 0.0
        %v4425 = vsel %vm453, %v4305, 0.0
        %v4426 = vsel %vm453, %v4306, 0.0
        %v4427 = vsel %vm453, %v4307, 0.0
        %v4428 = vsel %vm453, %v4308, 0.0
        %v4429 = vsel %vm453, %v4309, 0.0
        %4494 = vst [vmem:[#allocation1] ss:$4 sm:$0xff] %v4366
        %s4495 = scalar_lea.vmem [#allocation1], 1
        %4496 = vst [vmem:[%s4495] ss:$4 sm:$0xff] %v4367
        %s4497 = scalar_lea.vmem [#allocation1], 2
        %4498 = vst [vmem:[%s4497] ss:$4 sm:$0xff] %v4368
        %s4499 = scalar_lea.vmem [#allocation1], 3
        %4500 = vst [vmem:[%s4499] ss:$4 sm:$0xff] %v4369
        %s4501 = scalar_lea.vmem [#allocation1], 32
        %4502 = vst [vmem:[%s4501] ss:$4 sm:$0xff] %v4370
        %s4503 = scalar_lea.vmem [#allocation1], 33
        %4504 = vst [vmem:[%s4503] ss:$4 sm:$0xff] %v4371
        %s4505 = scalar_lea.vmem [#allocation1], 34
        %4506 = vst [vmem:[%s4505] ss:$4 sm:$0xff] %v4372
        %s4507 = scalar_lea.vmem [#allocation1], 35
        %4508 = vst [vmem:[%s4507] ss:$4 sm:$0xff] %v4373
        %v4509 = vld.sshfl [vmem:[#allocation1] sm:$0xff pattern:$0x73625140]
        %v4510 = vld.sshfl [vmem:[#allocation1 + $0x20] sm:$0xff pattern:$0x73625140]
        %4511 = vst [vmem:[#allocation1] ss:$4 sm:$0xff] 0.0
        %4512 = vst [vmem:[%s4495] ss:$4 sm:$0xff] 0.0
        %4513 = vst [vmem:[%s4497] ss:$4 sm:$0xff] 0.0
        %4514 = vst [vmem:[%s4499] ss:$4 sm:$0xff] 0.0
        %4515 = vst [vmem:[%s4501] ss:$4 sm:$0xff] 0.0
        %4516 = vst [vmem:[%s4503] ss:$4 sm:$0xff] 0.0
        %4517 = vst [vmem:[%s4505] ss:$4 sm:$0xff] 0.0
        %4518 = vst [vmem:[%s4507] ss:$4 sm:$0xff] 0.0
        %v4519 = vld.sshfl [vmem:[#allocation1] sm:$0xff pattern:$0x73625140]
        %v4520 = vld.sshfl [vmem:[#allocation1 + $0x20] sm:$0xff pattern:$0x73625140]
        %4521 = vst [vmem:[#allocation1] ss:$4 sm:$0xff] %v4374
        %4522 = vst [vmem:[%s4495] ss:$4 sm:$0xff] %v4375
        %4523 = vst [vmem:[%s4497] ss:$4 sm:$0xff] %v4376
        %4524 = vst [vmem:[%s4499] ss:$4 sm:$0xff] %v4377
        %4525 = vst [vmem:[%s4501] ss:$4 sm:$0xff] %v4378
        %4526 = vst [vmem:[%s4503] ss:$4 sm:$0xff] %v4379
        %4527 = vst [vmem:[%s4505] ss:$4 sm:$0xff] %v4380
        %4528 = vst [vmem:[%s4507] ss:$4 sm:$0xff] %v4381
        %v4529 = vld.sshfl [vmem:[#allocation1] sm:$0xff pattern:$0x73625140]
        %v4530 = vld.sshfl [vmem:[#allocation1 + $0x20] sm:$0xff pattern:$0x73625140]
        %4531 = vst [vmem:[#allocation1] ss:$4 sm:$0xff] 0.0
        %4532 = vst [vmem:[%s4495] ss:$4 sm:$0xff] 0.0
        %4533 = vst [vmem:[%s4497] ss:$4 sm:$0xff] 0.0
        %4534 = vst [vmem:[%s4499] ss:$4 sm:$0xff] 0.0
        %4535 = vst [vmem:[%s4501] ss:$4 sm:$0xff] 0.0
        %4536 = vst [vmem:[%s4503] ss:$4 sm:$0xff] 0.0
        %4537 = vst [vmem:[%s4505] ss:$4 sm:$0xff] 0.0
        %4538 = vst [vmem:[%s4507] ss:$4 sm:$0xff] 0.0
        %v4539 = vld.sshfl [vmem:[#allocation1] sm:$0xff pattern:$0x73625140]
        %v4540 = vld.sshfl [vmem:[#allocation1 + $0x20] sm:$0xff pattern:$0x73625140]
        %4541 = vst [vmem:[#allocation1] ss:$4 sm:$0xff] %v4382
        %4542 = vst [vmem:[%s4495] ss:$4 sm:$0xff] %v4383
        %4543 = vst [vmem:[%s4497] ss:$4 sm:$0xff] %v4384
        %4544 = vst [vmem:[%s4499] ss:$4 sm:$0xff] %v4385
        %4545 = vst [vmem:[%s4501] ss:$4 sm:$0xff] %v4386
        %4546 = vst [vmem:[%s4503] ss:$4 sm:$0xff] %v4387
        %4547 = vst [vmem:[%s4505] ss:$4 sm:$0xff] %v4388
        %4548 = vst [vmem:[%s4507] ss:$4 sm:$0xff] %v4389
        %v4549 = vld.sshfl [vmem:[#allocation1] sm:$0xff pattern:$0x73625140]
        %v4550 = vld.sshfl [vmem:[#allocation1 + $0x20] sm:$0xff pattern:$0x73625140]
        %4551 = vst [vmem:[#allocation1] ss:$4 sm:$0xff] 0.0
        %4552 = vst [vmem:[%s4495] ss:$4 sm:$0xff] 0.0
        %4553 = vst [vmem:[%s4497] ss:$4 sm:$0xff] 0.0
        %4554 = vst [vmem:[%s4499] ss:$4 sm:$0xff] 0.0
        %4555 = vst [vmem:[%s4501] ss:$4 sm:$0xff] 0.0
        %4556 = vst [vmem:[%s4503] ss:$4 sm:$0xff] 0.0
        %4557 = vst [vmem:[%s4505] ss:$4 sm:$0xff] 0.0
        %4558 = vst [vmem:[%s4507] ss:$4 sm:$0xff] 0.0
        %v4559 = vld.sshfl [vmem:[#allocation1] sm:$0xff pattern:$0x73625140]
        %v4560 = vld.sshfl [vmem:[#allocation1 + $0x20] sm:$0xff pattern:$0x73625140]
        %4561 = vst [vmem:[#allocation1] ss:$4 sm:$0xff] %v4390
        %4562 = vst [vmem:[%s4495] ss:$4 sm:$0xff] %v4391
        %4563 = vst [vmem:[%s4497] ss:$4 sm:$0xff] %v4392
        %4564 = vst [vmem:[%s4499] ss:$4 sm:$0xff] %v4393
        %4565 = vst [vmem:[%s4501] ss:$4 sm:$0xff] %v4394
        %4566 = vst [vmem:[%s4503] ss:$4 sm:$0xff] %v4395
        %4567 = vst [vmem:[%s4505] ss:$4 sm:$0xff] %v4396
        %4568 = vst [vmem:[%s4507] ss:$4 sm:$0xff] %v4397
        %v4569 = vld.sshfl [vmem:[#allocation1] sm:$0xff pattern:$0x73625140]
        %v4570 = vld.sshfl [vmem:[#allocation1 + $0x20] sm:$0xff pattern:$0x73625140]
        %4571 = vst [vmem:[#allocation1] ss:$4 sm:$0xff] 0.0
        %4572 = vst [vmem:[%s4495] ss:$4 sm:$0xff] 0.0
        %4573 = vst [vmem:[%s4497] ss:$4 sm:$0xff] 0.0
        %4574 = vst [vmem:[%s4499] ss:$4 sm:$0xff] 0.0
        %4575 = vst [vmem:[%s4501] ss:$4 sm:$0xff] 0.0
        %4576 = vst [vmem:[%s4503] ss:$4 sm:$0xff] 0.0
        %4577 = vst [vmem:[%s4505] ss:$4 sm:$0xff] 0.0
        %4578 = vst [vmem:[%s4507] ss:$4 sm:$0xff] 0.0
        %v4579 = vld.sshfl [vmem:[#allocation1] sm:$0xff pattern:$0x73625140]
        %v4580 = vld.sshfl [vmem:[#allocation1 + $0x20] sm:$0xff pattern:$0x73625140]
        %4581 = vst [vmem:[#allocation1] ss:$4 sm:$0xff] %v4398
        %4582 = vst [vmem:[%s4495] ss:$4 sm:$0xff] %v4399
        %4583 = vst [vmem:[%s4497] ss:$4 sm:$0xff] %v4400
        %4584 = vst [vmem:[%s4499] ss:$4 sm:$0xff] %v4401
        %4585 = vst [vmem:[%s4501] ss:$4 sm:$0xff] %v4402
        %4586 = vst [vmem:[%s4503] ss:$4 sm:$0xff] %v4403
        %4587 = vst [vmem:[%s4505] ss:$4 sm:$0xff] %v4404
        %4588 = vst [vmem:[%s4507] ss:$4 sm:$0xff] %v4405
        %v4589 = vld.sshfl [vmem:[#allocation1] sm:$0xff pattern:$0x73625140]
        %v4590 = vld.sshfl [vmem:[#allocation1 + $0x20] sm:$0xff pattern:$0x73625140]
        %4591 = vst [vmem:[#allocation1] ss:$4 sm:$0xff] 0.0
        %4592 = vst [vmem:[%s4495] ss:$4 sm:$0xff] 0.0
        %4593 = vst [vmem:[%s4497] ss:$4 sm:$0xff] 0.0
        %4594 = vst [vmem:[%s4499] ss:$4 sm:$0xff] 0.0
        %4595 = vst [vmem:[%s4501] ss:$4 sm:$0xff] 0.0
        %4596 = vst [vmem:[%s4503] ss:$4 sm:$0xff] 0.0
        %4597 = vst [vmem:[%s4505] ss:$4 sm:$0xff] 0.0
        %4598 = vst [vmem:[%s4507] ss:$4 sm:$0xff] 0.0
        %v4599 = vld.sshfl [vmem:[#allocation1] sm:$0xff pattern:$0x73625140]
        %v4600 = vld.sshfl [vmem:[#allocation1 + $0x20] sm:$0xff pattern:$0x73625140]
        %4601 = vst [vmem:[#allocation1] ss:$4 sm:$0xff] %v4406
        %4602 = vst [vmem:[%s4495] ss:$4 sm:$0xff] %v4407
        %4603 = vst [vmem:[%s4497] ss:$4 sm:$0xff] %v4408
        %4604 = vst [vmem:[%s4499] ss:$4 sm:$0xff] %v4409
        %4605 = vst [vmem:[%s4501] ss:$4 sm:$0xff] %v4410
        %4606 = vst [vmem:[%s4503] ss:$4 sm:$0xff] %v4411
        %4607 = vst [vmem:[%s4505] ss:$4 sm:$0xff] %v4412
        %4608 = vst [vmem:[%s4507] ss:$4 sm:$0xff] %v4413
        %v4609 = vld.sshfl [vmem:[#allocation1] sm:$0xff pattern:$0x73625140]
        %v4610 = vld.sshfl [vmem:[#allocation1 + $0x20] sm:$0xff pattern:$0x73625140]
        %4611 = vst [vmem:[#allocation1] ss:$4 sm:$0xff] 0.0
        %4612 = vst [vmem:[%s4495] ss:$4 sm:$0xff] 0.0
        %4613 = vst [vmem:[%s4497] ss:$4 sm:$0xff] 0.0
        %4614 = vst [vmem:[%s4499] ss:$4 sm:$0xff] 0.0
        %4615 = vst [vmem:[%s4501] ss:$4 sm:$0xff] 0.0
        %4616 = vst [vmem:[%s4503] ss:$4 sm:$0xff] 0.0
        %4617 = vst [vmem:[%s4505] ss:$4 sm:$0xff] 0.0
        %4618 = vst [vmem:[%s4507] ss:$4 sm:$0xff] 0.0
        %v4619 = vld.sshfl [vmem:[#allocation1] sm:$0xff pattern:$0x73625140]
        %v4620 = vld.sshfl [vmem:[#allocation1 + $0x20] sm:$0xff pattern:$0x73625140]
        %4621 = vst [vmem:[#allocation1] ss:$4 sm:$0xff] %v4414
        %4622 = vst [vmem:[%s4495] ss:$4 sm:$0xff] %v4415
        %4623 = vst [vmem:[%s4497] ss:$4 sm:$0xff] %v4416
        %4624 = vst [vmem:[%s4499] ss:$4 sm:$0xff] %v4417
        %4625 = vst [vmem:[%s4501] ss:$4 sm:$0xff] %v4418
        %4626 = vst [vmem:[%s4503] ss:$4 sm:$0xff] %v4419
        %4627 = vst [vmem:[%s4505] ss:$4 sm:$0xff] %v4420
        %4628 = vst [vmem:[%s4507] ss:$4 sm:$0xff] %v4421
        %v4629 = vld.sshfl [vmem:[#allocation1] sm:$0xff pattern:$0x73625140]
        %v4630 = vld.sshfl [vmem:[#allocation1 + $0x20] sm:$0xff pattern:$0x73625140]
        %4631 = vst [vmem:[#allocation1] ss:$4 sm:$0xff] 0.0
        %4632 = vst [vmem:[%s4495] ss:$4 sm:$0xff] 0.0
        %4633 = vst [vmem:[%s4497] ss:$4 sm:$0xff] 0.0
        %4634 = vst [vmem:[%s4499] ss:$4 sm:$0xff] 0.0
        %4635 = vst [vmem:[%s4501] ss:$4 sm:$0xff] 0.0
        %4636 = vst [vmem:[%s4503] ss:$4 sm:$0xff] 0.0
        %4637 = vst [vmem:[%s4505] ss:$4 sm:$0xff] 0.0
        %4638 = vst [vmem:[%s4507] ss:$4 sm:$0xff] 0.0
        %v4639 = vld.sshfl [vmem:[#allocation1] sm:$0xff pattern:$0x73625140]
        %v4640 = vld.sshfl [vmem:[#allocation1 + $0x20] sm:$0xff pattern:$0x73625140]
        %4641 = vst [vmem:[#allocation1] ss:$4 sm:$0xff] %v4422
        %4642 = vst [vmem:[%s4495] ss:$4 sm:$0xff] %v4423
        %4643 = vst [vmem:[%s4497] ss:$4 sm:$0xff] %v4424
        %4644 = vst [vmem:[%s4499] ss:$4 sm:$0xff] %v4425
        %4645 = vst [vmem:[%s4501] ss:$4 sm:$0xff] %v4426
        %4646 = vst [vmem:[%s4503] ss:$4 sm:$0xff] %v4427
        %4647 = vst [vmem:[%s4505] ss:$4 sm:$0xff] %v4428
        %4648 = vst [vmem:[%s4507] ss:$4 sm:$0xff] %v4429
        %v4649 = vld.sshfl [vmem:[#allocation1] sm:$0xff pattern:$0x73625140]
        %v4650 = vld.sshfl [vmem:[#allocation1 + $0x20] sm:$0xff pattern:$0x73625140]
        %4651 = vst [vmem:[#allocation1] ss:$4 sm:$0xff] 0.0
        %4652 = vst [vmem:[%s4495] ss:$4 sm:$0xff] 0.0
        %4653 = vst [vmem:[%s4497] ss:$4 sm:$0xff] 0.0
        %4654 = vst [vmem:[%s4499] ss:$4 sm:$0xff] 0.0
        %4655 = vst [vmem:[%s4501] ss:$4 sm:$0xff] 0.0
        %4656 = vst [vmem:[%s4503] ss:$4 sm:$0xff] 0.0
        %4657 = vst [vmem:[%s4505] ss:$4 sm:$0xff] 0.0
        %4658 = vst [vmem:[%s4507] ss:$4 sm:$0xff] 0.0
        %v4659 = vld.sshfl [vmem:[#allocation1] sm:$0xff pattern:$0x73625140]
        %v4660 = vld.sshfl [vmem:[#allocation1 + $0x20] sm:$0xff pattern:$0x73625140]
        %v4661 = vrot.slane %v4509, 7
        %v4662 = vrot.slane %v4510, 7
        %v4663 = vsel %vm453, %v4661, %v4662
        %v4664 = vrot.slane %v4519, 7
        %v4665 = vrot.slane %v4520, 7
        %v4666 = vsel %vm453, %v4664, %v4665
        %v4667 = vrot.slane %v4529, 7
        %v4668 = vrot.slane %v4530, 7
        %v4669 = vsel %vm453, %v4667, %v4668
        %v4670 = vrot.slane %v4539, 7
        %v4671 = vrot.slane %v4540, 7
        %v4672 = vsel %vm453, %v4670, %v4671
        %v4673 = vrot.slane %v4549, 7
        %v4674 = vrot.slane %v4550, 7
        %v4675 = vsel %vm453, %v4673, %v4674
        %v4676 = vrot.slane %v4559, 7
        %v4677 = vrot.slane %v4560, 7
        %v4678 = vsel %vm453, %v4676, %v4677
        %v4679 = vrot.slane %v4569, 7
        %v4680 = vrot.slane %v4570, 7
        %v4681 = vsel %vm453, %v4679, %v4680
        %v4682 = vrot.slane %v4579, 7
        %v4683 = vrot.slane %v4580, 7
        %v4684 = vsel %vm453, %v4682, %v4683
        %v4685 = vrot.slane %v4589, 7
        %v4686 = vrot.slane %v4590, 7
        %v4687 = vsel %vm453, %v4685, %v4686
        %v4688 = vrot.slane %v4599, 7
        %v4689 = vrot.slane %v4600, 7
        %v4690 = vsel %vm453, %v4688, %v4689
        %v4691 = vrot.slane %v4609, 7
        %v4692 = vrot.slane %v4610, 7
        %v4693 = vsel %vm453, %v4691, %v4692
        %v4694 = vrot.slane %v4619, 7
        %v4695 = vrot.slane %v4620, 7
        %v4696 = vsel %vm453, %v4694, %v4695
        %v4697 = vrot.slane %v4629, 7
        %v4698 = vrot.slane %v4630, 7
        %v4699 = vsel %vm453, %v4697, %v4698
        %v4700 = vrot.slane %v4639, 7
        %v4701 = vrot.slane %v4640, 7
        %v4702 = vsel %vm453, %v4700, %v4701
        %v4703 = vrot.slane %v4649, 7
        %v4704 = vrot.slane %v4650, 7
        %v4705 = vsel %vm453, %v4703, %v4704
        %v4706 = vrot.slane %v4659, 7
        %v4707 = vrot.slane %v4660, 7
        %v4708 = vsel %vm453, %v4706, %v4707
        %v4757 = vsel %vm453, 0.0, %v4661
        %v4758 = vsel %vm453, 0.0, %v4664
        %v4759 = vsel %vm453, 0.0, %v4667
        %v4760 = vsel %vm453, 0.0, %v4670
        %v4761 = vsel %vm453, 0.0, %v4673
        %v4762 = vsel %vm453, 0.0, %v4676
        %v4763 = vsel %vm453, 0.0, %v4679
        %v4764 = vsel %vm453, 0.0, %v4682
        %v4765 = vsel %vm453, 0.0, %v4685
        %v4766 = vsel %vm453, 0.0, %v4688
        %v4767 = vsel %vm453, 0.0, %v4691
        %v4768 = vsel %vm453, 0.0, %v4694
        %v4769 = vsel %vm453, 0.0, %v4697
        %v4770 = vsel %vm453, 0.0, %v4700
        %v4771 = vsel %vm453, 0.0, %v4703
        %v4772 = vsel %vm453, 0.0, %v4706
        %v4773 = vsel %vm453, %v4662, 0.0
        %v4774 = vsel %vm453, %v4665, 0.0
        %v4775 = vsel %vm453, %v4668, 0.0
        %v4776 = vsel %vm453, %v4671, 0.0
        %v4777 = vsel %vm453, %v4674, 0.0
        %v4778 = vsel %vm453, %v4677, 0.0
        %v4779 = vsel %vm453, %v4680, 0.0
        %v4780 = vsel %vm453, %v4683, 0.0
        %v4781 = vsel %vm453, %v4686, 0.0
        %v4782 = vsel %vm453, %v4689, 0.0
        %v4783 = vsel %vm453, %v4692, 0.0
        %v4784 = vsel %vm453, %v4695, 0.0
        %v4785 = vsel %vm453, %v4698, 0.0
        %v4786 = vsel %vm453, %v4701, 0.0
        %v4787 = vsel %vm453, %v4704, 0.0
        %v4788 = vsel %vm453, %v4707, 0.0
        %s4789 = sld [smem:[#allocation5]]
        %v4790 = vstv %s4789
        %v4791 = vmul.f32 %v4790, %v3772
        %v4792 = vmul.f32 %v4790, %v3787
        %v4793 = vmul.f32 %v4790, %v3802
        %v4794 = vmul.f32 %v4790, %v3817
        %v4795 = vmul.f32 %v4790, %v3832
        %v4796 = vmul.f32 %v4790, %v3847
        %v4797 = vmul.f32 %v4790, %v3862
        %v4798 = vmul.f32 %v4790, %v3877
        %v4799 = vmul.f32 %v4790, %v3892
        %v4800 = vmul.f32 %v4790, %v3907
        %v4801 = vmul.f32 %v4790, %v3922
        %v4802 = vmul.f32 %v4790, %v3937
        %v4803 = vmul.f32 %v4790, %v3952
        %v4804 = vmul.f32 %v4790, %v3967
        %v4805 = vmul.f32 %v4790, %v3982
        %v4806 = vmul.f32 %v4790, %v3997
        %v4807 = vmul.f32 %v4790, %v4012
        %v4808 = vmul.f32 %v4790, %v4027
        %v4809 = vmul.f32 %v4790, %v4042
        %v4810 = vmul.f32 %v4790, %v4057
        %v4811 = vmul.f32 %v4790, %v4072
        %v4812 = vmul.f32 %v4790, %v4087
        %v4813 = vmul.f32 %v4790, %v4102
        %v4814 = vmul.f32 %v4790, %v4117
        %v4815 = vmul.f32 %v4790, %v4132
        %v4816 = vmul.f32 %v4790, %v4147
        %v4817 = vmul.f32 %v4790, %v4162
        %v4818 = vmul.f32 %v4790, %v4177
        %v4819 = vmul.f32 %v4790, %v4192
        %v4820 = vmul.f32 %v4790, %v4207
        %v4821 = vmul.f32 %v4790, %v4222
        %v4822 = vmul.f32 %v4790, %v4237
        %4824 = vset.pattern.permute.xlu0 0
        %4825 = vperm.xlu0 %4824, %v4791
        %v4826 = vpop.permute.xlu0 %4825
        %4829 = vset.pattern.permute.xlu0 0
        %4830 = vperm.xlu0 %4829, %v4792
        %v4831 = vpop.permute.xlu0 %4830
        %4834 = vset.pattern.permute.xlu0 0
        %4835 = vperm.xlu0 %4834, %v4793
        %v4836 = vpop.permute.xlu0 %4835
        %4839 = vset.pattern.permute.xlu0 0
        %4840 = vperm.xlu0 %4839, %v4794
        %v4841 = vpop.permute.xlu0 %4840
        %4844 = vset.pattern.permute.xlu0 0
        %4845 = vperm.xlu0 %4844, %v4795
        %v4846 = vpop.permute.xlu0 %4845
        %4849 = vset.pattern.permute.xlu0 0
        %4850 = vperm.xlu0 %4849, %v4796
        %v4851 = vpop.permute.xlu0 %4850
        %4854 = vset.pattern.permute.xlu0 0
        %4855 = vperm.xlu0 %4854, %v4797
        %v4856 = vpop.permute.xlu0 %4855
        %4859 = vset.pattern.permute.xlu0 0
        %4860 = vperm.xlu0 %4859, %v4798
        %v4861 = vpop.permute.xlu0 %4860
        %4864 = vset.pattern.permute.xlu0 0
        %4865 = vperm.xlu0 %4864, %v4799
        %v4866 = vpop.permute.xlu0 %4865
        %4869 = vset.pattern.permute.xlu0 0
        %4870 = vperm.xlu0 %4869, %v4800
        %v4871 = vpop.permute.xlu0 %4870
        %4874 = vset.pattern.permute.xlu0 0
        %4875 = vperm.xlu0 %4874, %v4801
        %v4876 = vpop.permute.xlu0 %4875
        %4879 = vset.pattern.permute.xlu0 0
        %4880 = vperm.xlu0 %4879, %v4802
        %v4881 = vpop.permute.xlu0 %4880
        %4884 = vset.pattern.permute.xlu0 0
        %4885 = vperm.xlu0 %4884, %v4803
        %v4886 = vpop.permute.xlu0 %4885
        %4889 = vset.pattern.permute.xlu0 0
        %4890 = vperm.xlu0 %4889, %v4804
        %v4891 = vpop.permute.xlu0 %4890
        %4894 = vset.pattern.permute.xlu0 0
        %4895 = vperm.xlu0 %4894, %v4805
        %v4896 = vpop.permute.xlu0 %4895
        %4899 = vset.pattern.permute.xlu0 0
        %4900 = vperm.xlu0 %4899, %v4806
        %v4901 = vpop.permute.xlu0 %4900
        %4904 = vset.pattern.permute.xlu0 0
        %4905 = vperm.xlu0 %4904, %v4807
        %v4906 = vpop.permute.xlu0 %4905
        %4909 = vset.pattern.permute.xlu0 0
        %4910 = vperm.xlu0 %4909, %v4808
        %v4911 = vpop.permute.xlu0 %4910
        %4914 = vset.pattern.permute.xlu0 0
        %4915 = vperm.xlu0 %4914, %v4809
        %v4916 = vpop.permute.xlu0 %4915
        %4919 = vset.pattern.permute.xlu0 0
        %4920 = vperm.xlu0 %4919, %v4810
        %v4921 = vpop.permute.xlu0 %4920
        %4924 = vset.pattern.permute.xlu0 0
        %4925 = vperm.xlu0 %4924, %v4811
        %v4926 = vpop.permute.xlu0 %4925
        %4929 = vset.pattern.permute.xlu0 0
        %4930 = vperm.xlu0 %4929, %v4812
        %v4931 = vpop.permute.xlu0 %4930
        %4934 = vset.pattern.permute.xlu0 0
        %4935 = vperm.xlu0 %4934, %v4813
        %v4936 = vpop.permute.xlu0 %4935
        %4939 = vset.pattern.permute.xlu0 0
        %4940 = vperm.xlu0 %4939, %v4814
        %v4941 = vpop.permute.xlu0 %4940
        %4944 = vset.pattern.permute.xlu0 0
        %4945 = vperm.xlu0 %4944, %v4815
        %v4946 = vpop.permute.xlu0 %4945
        %4949 = vset.pattern.permute.xlu0 0
        %4950 = vperm.xlu0 %4949, %v4816
        %v4951 = vpop.permute.xlu0 %4950
        %4954 = vset.pattern.permute.xlu0 0
        %4955 = vperm.xlu0 %4954, %v4817
        %v4956 = vpop.permute.xlu0 %4955
        %4959 = vset.pattern.permute.xlu0 0
        %4960 = vperm.xlu0 %4959, %v4818
        %v4961 = vpop.permute.xlu0 %4960
        %4964 = vset.pattern.permute.xlu0 0
        %4965 = vperm.xlu0 %4964, %v4819
        %v4966 = vpop.permute.xlu0 %4965
        %4969 = vset.pattern.permute.xlu0 0
        %4970 = vperm.xlu0 %4969, %v4820
        %v4971 = vpop.permute.xlu0 %4970
        %4974 = vset.pattern.permute.xlu0 0
        %4975 = vperm.xlu0 %4974, %v4821
        %v4976 = vpop.permute.xlu0 %4975
        %4979 = vset.pattern.permute.xlu0 0
        %4980 = vperm.xlu0 %4979, %v4822
        %v4981 = vpop.permute.xlu0 %4980
        %v4983 = vmul.f32 %v4826, 0.0
        %v4984 = vmul.f32 %v4831, 0.0
        %v4985 = vmul.f32 %v4836, %v4757
        %v4986 = vmul.f32 %v4841, %v4663
        %v4987 = vmul.f32 %v4846, %v4758
        %v4988 = vmul.f32 %v4851, %v4666
        %v4989 = vmul.f32 %v4856, %v4759
        %v4990 = vmul.f32 %v4861, %v4669
        %v4991 = vmul.f32 %v4866, %v4760
        %v4992 = vmul.f32 %v4871, %v4672
        %v4993 = vmul.f32 %v4876, %v4761
        %v4994 = vmul.f32 %v4881, %v4675
        %v4995 = vmul.f32 %v4886, %v4762
        %v4996 = vmul.f32 %v4891, %v4678
        %v4997 = vmul.f32 %v4896, %v4763
        %v4998 = vmul.f32 %v4901, %v4681
        %v4999 = vmul.f32 %v4906, %v4764
        %v5000 = vmul.f32 %v4911, %v4684
        %v5001 = vmul.f32 %v4916, %v4765
        %v5002 = vmul.f32 %v4921, %v4687
        %v5003 = vmul.f32 %v4926, %v4766
        %v5004 = vmul.f32 %v4931, %v4690
        %v5005 = vmul.f32 %v4936, %v4767
        %v5006 = vmul.f32 %v4941, %v4693
        %v5007 = vmul.f32 %v4946, %v4768
        %v5008 = vmul.f32 %v4951, %v4696
        %v5009 = vmul.f32 %v4956, %v4769
        %v5010 = vmul.f32 %v4961, %v4699
        %v5011 = vmul.f32 %v4966, %v4770
        %v5012 = vmul.f32 %v4971, %v4702
        %v5013 = vmul.f32 %v4976, %v4771
        %v5014 = vmul.f32 %v4981, %v4705
        %v5015 = vadd.f32 %v4983, 0.0
        %v5016 = vadd.f32 %v4984, 0.0
        %v5017 = vadd.f32 %v4985, 0.0
        %v5018 = vadd.f32 %v4986, 0.0
        %v5019 = vadd.f32 %v4987, 0.0
        %v5020 = vadd.f32 %v4988, 0.0
        %v5021 = vadd.f32 %v4989, 0.0
        %v5022 = vadd.f32 %v4990, 0.0
        %v5023 = vadd.f32 %v4991, 0.0
        %v5024 = vadd.f32 %v4992, 0.0
        %v5025 = vadd.f32 %v4993, 0.0
        %v5026 = vadd.f32 %v4994, 0.0
        %v5027 = vadd.f32 %v4995, 0.0
        %v5028 = vadd.f32 %v4996, 0.0
        %v5029 = vadd.f32 %v4997, 0.0
        %v5030 = vadd.f32 %v4998, 0.0
        %v5031 = vadd.f32 %v4999, 0.0
        %v5032 = vadd.f32 %v5000, 0.0
        %v5033 = vadd.f32 %v5001, 0.0
        %v5034 = vadd.f32 %v5002, 0.0
        %v5035 = vadd.f32 %v5003, 0.0
        %v5036 = vadd.f32 %v5004, 0.0
        %v5037 = vadd.f32 %v5005, 0.0
        %v5038 = vadd.f32 %v5006, 0.0
        %v5039 = vadd.f32 %v5007, 0.0
        %v5040 = vadd.f32 %v5008, 0.0
        %v5041 = vadd.f32 %v5009, 0.0
        %v5042 = vadd.f32 %v5010, 0.0
        %v5043 = vadd.f32 %v5011, 0.0
        %v5044 = vadd.f32 %v5012, 0.0
        %v5045 = vadd.f32 %v5013, 0.0
        %v5046 = vadd.f32 %v5014, 0.0
        %s5047 = sld [smem:[#allocation5 + $0x1]]
        %v5048 = vstv %s5047
        %v5049 = vmul.f32 %v5048, %v3772
        %v5050 = vmul.f32 %v5048, %v3787
        %v5051 = vmul.f32 %v5048, %v3802
        %v5052 = vmul.f32 %v5048, %v3817
        %v5053 = vmul.f32 %v5048, %v3832
        %v5054 = vmul.f32 %v5048, %v3847
        %v5055 = vmul.f32 %v5048, %v3862
        %v5056 = vmul.f32 %v5048, %v3877
        %v5057 = vmul.f32 %v5048, %v3892
        %v5058 = vmul.f32 %v5048, %v3907
        %v5059 = vmul.f32 %v5048, %v3922
        %v5060 = vmul.f32 %v5048, %v3937
        %v5061 = vmul.f32 %v5048, %v3952
        %v5062 = vmul.f32 %v5048, %v3967
        %v5063 = vmul.f32 %v5048, %v3982
        %v5064 = vmul.f32 %v5048, %v3997
        %v5065 = vmul.f32 %v5048, %v4012
        %v5066 = vmul.f32 %v5048, %v4027
        %v5067 = vmul.f32 %v5048, %v4042
        %v5068 = vmul.f32 %v5048, %v4057
        %v5069 = vmul.f32 %v5048, %v4072
        %v5070 = vmul.f32 %v5048, %v4087
        %v5071 = vmul.f32 %v5048, %v4102
        %v5072 = vmul.f32 %v5048, %v4117
        %v5073 = vmul.f32 %v5048, %v4132
        %v5074 = vmul.f32 %v5048, %v4147
        %v5075 = vmul.f32 %v5048, %v4162
        %v5076 = vmul.f32 %v5048, %v4177
        %v5077 = vmul.f32 %v5048, %v4192
        %v5078 = vmul.f32 %v5048, %v4207
        %v5079 = vmul.f32 %v5048, %v4222
        %v5080 = vmul.f32 %v5048, %v4237
        %5082 = vset.pattern.permute.xlu0 1
        %5083 = vperm.xlu0 %5082, %v5049
        %v5084 = vpop.permute.xlu0 %5083
        %5087 = vset.pattern.permute.xlu0 1
        %5088 = vperm.xlu0 %5087, %v5050
        %v5089 = vpop.permute.xlu0 %5088
        %5092 = vset.pattern.permute.xlu0 1
        %5093 = vperm.xlu0 %5092, %v5051
        %v5094 = vpop.permute.xlu0 %5093
        %5097 = vset.pattern.permute.xlu0 1
        %5098 = vperm.xlu0 %5097, %v5052
        %v5099 = vpop.permute.xlu0 %5098
        %5102 = vset.pattern.permute.xlu0 1
        %5103 = vperm.xlu0 %5102, %v5053
        %v5104 = vpop.permute.xlu0 %5103
        %5107 = vset.pattern.permute.xlu0 1
        %5108 = vperm.xlu0 %5107, %v5054
        %v5109 = vpop.permute.xlu0 %5108
        %5112 = vset.pattern.permute.xlu0 1
        %5113 = vperm.xlu0 %5112, %v5055
        %v5114 = vpop.permute.xlu0 %5113
        %5117 = vset.pattern.permute.xlu0 1
        %5118 = vperm.xlu0 %5117, %v5056
        %v5119 = vpop.permute.xlu0 %5118
        %5122 = vset.pattern.permute.xlu0 1
        %5123 = vperm.xlu0 %5122, %v5057
        %v5124 = vpop.permute.xlu0 %5123
        %5127 = vset.pattern.permute.xlu0 1
        %5128 = vperm.xlu0 %5127, %v5058
        %v5129 = vpop.permute.xlu0 %5128
        %5132 = vset.pattern.permute.xlu0 1
        %5133 = vperm.xlu0 %5132, %v5059
        %v5134 = vpop.permute.xlu0 %5133
        %5137 = vset.pattern.permute.xlu0 1
        %5138 = vperm.xlu0 %5137, %v5060
        %v5139 = vpop.permute.xlu0 %5138
        %5142 = vset.pattern.permute.xlu0 1
        %5143 = vperm.xlu0 %5142, %v5061
        %v5144 = vpop.permute.xlu0 %5143
        %5147 = vset.pattern.permute.xlu0 1
        %5148 = vperm.xlu0 %5147, %v5062
        %v5149 = vpop.permute.xlu0 %5148
        %5152 = vset.pattern.permute.xlu0 1
        %5153 = vperm.xlu0 %5152, %v5063
        %v5154 = vpop.permute.xlu0 %5153
        %5157 = vset.pattern.permute.xlu0 1
        %5158 = vperm.xlu0 %5157, %v5064
        %v5159 = vpop.permute.xlu0 %5158
        %5162 = vset.pattern.permute.xlu0 1
        %5163 = vperm.xlu0 %5162, %v5065
        %v5164 = vpop.permute.xlu0 %5163
        %5167 = vset.pattern.permute.xlu0 1
        %5168 = vperm.xlu0 %5167, %v5066
        %v5169 = vpop.permute.xlu0 %5168
        %5172 = vset.pattern.permute.xlu0 1
        %5173 = vperm.xlu0 %5172, %v5067
        %v5174 = vpop.permute.xlu0 %5173
        %5177 = vset.pattern.permute.xlu0 1
        %5178 = vperm.xlu0 %5177, %v5068
        %v5179 = vpop.permute.xlu0 %5178
        %5182 = vset.pattern.permute.xlu0 1
        %5183 = vperm.xlu0 %5182, %v5069
        %v5184 = vpop.permute.xlu0 %5183
        %5187 = vset.pattern.permute.xlu0 1
        %5188 = vperm.xlu0 %5187, %v5070
        %v5189 = vpop.permute.xlu0 %5188
        %5192 = vset.pattern.permute.xlu0 1
        %5193 = vperm.xlu0 %5192, %v5071
        %v5194 = vpop.permute.xlu0 %5193
        %5197 = vset.pattern.permute.xlu0 1
        %5198 = vperm.xlu0 %5197, %v5072
        %v5199 = vpop.permute.xlu0 %5198
        %5202 = vset.pattern.permute.xlu0 1
        %5203 = vperm.xlu0 %5202, %v5073
        %v5204 = vpop.permute.xlu0 %5203
        %5207 = vset.pattern.permute.xlu0 1
        %5208 = vperm.xlu0 %5207, %v5074
        %v5209 = vpop.permute.xlu0 %5208
        %5212 = vset.pattern.permute.xlu0 1
        %5213 = vperm.xlu0 %5212, %v5075
        %v5214 = vpop.permute.xlu0 %5213
        %5217 = vset.pattern.permute.xlu0 1
        %5218 = vperm.xlu0 %5217, %v5076
        %v5219 = vpop.permute.xlu0 %5218
        %5222 = vset.pattern.permute.xlu0 1
        %5223 = vperm.xlu0 %5222, %v5077
        %v5224 = vpop.permute.xlu0 %5223
        %5227 = vset.pattern.permute.xlu0 1
        %5228 = vperm.xlu0 %5227, %v5078
        %v5229 = vpop.permute.xlu0 %5228
        %5232 = vset.pattern.permute.xlu0 1
        %5233 = vperm.xlu0 %5232, %v5079
        %v5234 = vpop.permute.xlu0 %5233
        %5237 = vset.pattern.permute.xlu0 1
        %5238 = vperm.xlu0 %5237, %v5080
        %v5239 = vpop.permute.xlu0 %5238
        %v5271 = vrot.slane %v4757, 1
        %v5272 = vrot.slane %v4663, 1
        %v5273 = vsel %vm612, %v5271, %v5272
        %v5274 = vrot.slane %v4773, 1
        %v5275 = vsel %vm612, %v5272, %v5274
        %v5276 = vrot.slane %v4758, 1
        %v5277 = vrot.slane %v4666, 1
        %v5278 = vsel %vm612, %v5276, %v5277
        %v5279 = vrot.slane %v4774, 1
        %v5280 = vsel %vm612, %v5277, %v5279
        %v5281 = vrot.slane %v4759, 1
        %v5282 = vrot.slane %v4669, 1
        %v5283 = vsel %vm612, %v5281, %v5282
        %v5284 = vrot.slane %v4775, 1
        %v5285 = vsel %vm612, %v5282, %v5284
        %v5286 = vrot.slane %v4760, 1
        %v5287 = vrot.slane %v4672, 1
        %v5288 = vsel %vm612, %v5286, %v5287
        %v5289 = vrot.slane %v4776, 1
        %v5290 = vsel %vm612, %v5287, %v5289
        %v5291 = vrot.slane %v4761, 1
        %v5292 = vrot.slane %v4675, 1
        %v5293 = vsel %vm612, %v5291, %v5292
        %v5294 = vrot.slane %v4777, 1
        %v5295 = vsel %vm612, %v5292, %v5294
        %v5296 = vrot.slane %v4762, 1
        %v5297 = vrot.slane %v4678, 1
        %v5298 = vsel %vm612, %v5296, %v5297
        %v5299 = vrot.slane %v4778, 1
        %v5300 = vsel %vm612, %v5297, %v5299
        %v5301 = vrot.slane %v4763, 1
        %v5302 = vrot.slane %v4681, 1
        %v5303 = vsel %vm612, %v5301, %v5302
        %v5304 = vrot.slane %v4779, 1
        %v5305 = vsel %vm612, %v5302, %v5304
        %v5306 = vrot.slane %v4764, 1
        %v5307 = vrot.slane %v4684, 1
        %v5308 = vsel %vm612, %v5306, %v5307
        %v5309 = vrot.slane %v4780, 1
        %v5310 = vsel %vm612, %v5307, %v5309
        %v5311 = vrot.slane %v4765, 1
        %v5312 = vrot.slane %v4687, 1
        %v5313 = vsel %vm612, %v5311, %v5312
        %v5314 = vrot.slane %v4781, 1
        %v5315 = vsel %vm612, %v5312, %v5314
        %v5316 = vrot.slane %v4766, 1
        %v5317 = vrot.slane %v4690, 1
        %v5318 = vsel %vm612, %v5316, %v5317
        %v5319 = vrot.slane %v4782, 1
        %v5320 = vsel %vm612, %v5317, %v5319
        %v5321 = vrot.slane %v4767, 1
        %v5322 = vrot.slane %v4693, 1
        %v5323 = vsel %vm612, %v5321, %v5322
        %v5324 = vrot.slane %v4783, 1
        %v5325 = vsel %vm612, %v5322, %v5324
        %v5326 = vrot.slane %v4768, 1
        %v5327 = vrot.slane %v4696, 1
        %v5328 = vsel %vm612, %v5326, %v5327
        %v5329 = vrot.slane %v4784, 1
        %v5330 = vsel %vm612, %v5327, %v5329
        %v5331 = vrot.slane %v4769, 1
        %v5332 = vrot.slane %v4699, 1
        %v5333 = vsel %vm612, %v5331, %v5332
        %v5334 = vrot.slane %v4785, 1
        %v5335 = vsel %vm612, %v5332, %v5334
        %v5336 = vrot.slane %v4770, 1
        %v5337 = vrot.slane %v4702, 1
        %v5338 = vsel %vm612, %v5336, %v5337
        %v5339 = vrot.slane %v4786, 1
        %v5340 = vsel %vm612, %v5337, %v5339
        %v5341 = vrot.slane %v4771, 1
        %v5342 = vrot.slane %v4705, 1
        %v5343 = vsel %vm612, %v5341, %v5342
        %v5344 = vrot.slane %v4787, 1
        %v5345 = vsel %vm612, %v5342, %v5344
        %v5377 = vmul.f32 %v5084, %v614
        %v5378 = vmul.f32 %v5089, %v614
        %v5379 = vmul.f32 %v5094, %v5273
        %v5380 = vmul.f32 %v5099, %v5275
        %v5381 = vmul.f32 %v5104, %v5278
        %v5382 = vmul.f32 %v5109, %v5280
        %v5383 = vmul.f32 %v5114, %v5283
        %v5384 = vmul.f32 %v5119, %v5285
        %v5385 = vmul.f32 %v5124, %v5288
        %v5386 = vmul.f32 %v5129, %v5290
        %v5387 = vmul.f32 %v5134, %v5293
        %v5388 = vmul.f32 %v5139, %v5295
        %v5389 = vmul.f32 %v5144, %v5298
        %v5390 = vmul.f32 %v5149, %v5300
        %v5391 = vmul.f32 %v5154, %v5303
        %v5392 = vmul.f32 %v5159, %v5305
        %v5393 = vmul.f32 %v5164, %v5308
        %v5394 = vmul.f32 %v5169, %v5310
        %v5395 = vmul.f32 %v5174, %v5313
        %v5396 = vmul.f32 %v5179, %v5315
        %v5397 = vmul.f32 %v5184, %v5318
        %v5398 = vmul.f32 %v5189, %v5320
        %v5399 = vmul.f32 %v5194, %v5323
        %v5400 = vmul.f32 %v5199, %v5325
        %v5401 = vmul.f32 %v5204, %v5328
        %v5402 = vmul.f32 %v5209, %v5330
        %v5403 = vmul.f32 %v5214, %v5333
        %v5404 = vmul.f32 %v5219, %v5335
        %v5405 = vmul.f32 %v5224, %v5338
        %v5406 = vmul.f32 %v5229, %v5340
        %v5407 = vmul.f32 %v5234, %v5343
        %v5408 = vmul.f32 %v5239, %v5345
        %v5409 = vadd.f32 %v5015, %v5377
        %v5410 = vadd.f32 %v5016, %v5378
        %v5411 = vadd.f32 %v5017, %v5379
        %v5412 = vadd.f32 %v5018, %v5380
        %v5413 = vadd.f32 %v5019, %v5381
        %v5414 = vadd.f32 %v5020, %v5382
        %v5415 = vadd.f32 %v5021, %v5383
        %v5416 = vadd.f32 %v5022, %v5384
        %v5417 = vadd.f32 %v5023, %v5385
        %v5418 = vadd.f32 %v5024, %v5386
        %v5419 = vadd.f32 %v5025, %v5387
        %v5420 = vadd.f32 %v5026, %v5388
        %v5421 = vadd.f32 %v5027, %v5389
        %v5422 = vadd.f32 %v5028, %v5390
        %v5423 = vadd.f32 %v5029, %v5391
        %v5424 = vadd.f32 %v5030, %v5392
        %v5425 = vadd.f32 %v5031, %v5393
        %v5426 = vadd.f32 %v5032, %v5394
        %v5427 = vadd.f32 %v5033, %v5395
        %v5428 = vadd.f32 %v5034, %v5396
        %v5429 = vadd.f32 %v5035, %v5397
        %v5430 = vadd.f32 %v5036, %v5398
        %v5431 = vadd.f32 %v5037, %v5399
        %v5432 = vadd.f32 %v5038, %v5400
        %v5433 = vadd.f32 %v5039, %v5401
        %v5434 = vadd.f32 %v5040, %v5402
        %v5435 = vadd.f32 %v5041, %v5403
        %v5436 = vadd.f32 %v5042, %v5404
        %v5437 = vadd.f32 %v5043, %v5405
        %v5438 = vadd.f32 %v5044, %v5406
        %v5439 = vadd.f32 %v5045, %v5407
        %v5440 = vadd.f32 %v5046, %v5408
        %s5441 = sld [smem:[#allocation5 + $0x2]]
        %v5442 = vstv %s5441
        %v5443 = vmul.f32 %v5442, %v3772
        %v5444 = vmul.f32 %v5442, %v3787
        %v5445 = vmul.f32 %v5442, %v3802
        %v5446 = vmul.f32 %v5442, %v3817
        %v5447 = vmul.f32 %v5442, %v3832
        %v5448 = vmul.f32 %v5442, %v3847
        %v5449 = vmul.f32 %v5442, %v3862
        %v5450 = vmul.f32 %v5442, %v3877
        %v5451 = vmul.f32 %v5442, %v3892
        %v5452 = vmul.f32 %v5442, %v3907
        %v5453 = vmul.f32 %v5442, %v3922
        %v5454 = vmul.f32 %v5442, %v3937
        %v5455 = vmul.f32 %v5442, %v3952
        %v5456 = vmul.f32 %v5442, %v3967
        %v5457 = vmul.f32 %v5442, %v3982
        %v5458 = vmul.f32 %v5442, %v3997
        %v5459 = vmul.f32 %v5442, %v4012
        %v5460 = vmul.f32 %v5442, %v4027
        %v5461 = vmul.f32 %v5442, %v4042
        %v5462 = vmul.f32 %v5442, %v4057
        %v5463 = vmul.f32 %v5442, %v4072
        %v5464 = vmul.f32 %v5442, %v4087
        %v5465 = vmul.f32 %v5442, %v4102
        %v5466 = vmul.f32 %v5442, %v4117
        %v5467 = vmul.f32 %v5442, %v4132
        %v5468 = vmul.f32 %v5442, %v4147
        %v5469 = vmul.f32 %v5442, %v4162
        %v5470 = vmul.f32 %v5442, %v4177
        %v5471 = vmul.f32 %v5442, %v4192
        %v5472 = vmul.f32 %v5442, %v4207
        %v5473 = vmul.f32 %v5442, %v4222
        %v5474 = vmul.f32 %v5442, %v4237
        %5476 = vset.pattern.permute.xlu0 2
        %5477 = vperm.xlu0 %5476, %v5443
        %v5478 = vpop.permute.xlu0 %5477
        %5481 = vset.pattern.permute.xlu0 2
        %5482 = vperm.xlu0 %5481, %v5444
        %v5483 = vpop.permute.xlu0 %5482
        %5486 = vset.pattern.permute.xlu0 2
        %5487 = vperm.xlu0 %5486, %v5445
        %v5488 = vpop.permute.xlu0 %5487
        %5491 = vset.pattern.permute.xlu0 2
        %5492 = vperm.xlu0 %5491, %v5446
        %v5493 = vpop.permute.xlu0 %5492
        %5496 = vset.pattern.permute.xlu0 2
        %5497 = vperm.xlu0 %5496, %v5447
        %v5498 = vpop.permute.xlu0 %5497
        %5501 = vset.pattern.permute.xlu0 2
        %5502 = vperm.xlu0 %5501, %v5448
        %v5503 = vpop.permute.xlu0 %5502
        %5506 = vset.pattern.permute.xlu0 2
        %5507 = vperm.xlu0 %5506, %v5449
        %v5508 = vpop.permute.xlu0 %5507
        %5511 = vset.pattern.permute.xlu0 2
        %5512 = vperm.xlu0 %5511, %v5450
        %v5513 = vpop.permute.xlu0 %5512
        %5516 = vset.pattern.permute.xlu0 2
        %5517 = vperm.xlu0 %5516, %v5451
        %v5518 = vpop.permute.xlu0 %5517
        %5521 = vset.pattern.permute.xlu0 2
        %5522 = vperm.xlu0 %5521, %v5452
        %v5523 = vpop.permute.xlu0 %5522
        %5526 = vset.pattern.permute.xlu0 2
        %5527 = vperm.xlu0 %5526, %v5453
        %v5528 = vpop.permute.xlu0 %5527
        %5531 = vset.pattern.permute.xlu0 2
        %5532 = vperm.xlu0 %5531, %v5454
        %v5533 = vpop.permute.xlu0 %5532
        %5536 = vset.pattern.permute.xlu0 2
        %5537 = vperm.xlu0 %5536, %v5455
        %v5538 = vpop.permute.xlu0 %5537
        %5541 = vset.pattern.permute.xlu0 2
        %5542 = vperm.xlu0 %5541, %v5456
        %v5543 = vpop.permute.xlu0 %5542
        %5546 = vset.pattern.permute.xlu0 2
        %5547 = vperm.xlu0 %5546, %v5457
        %v5548 = vpop.permute.xlu0 %5547
        %5551 = vset.pattern.permute.xlu0 2
        %5552 = vperm.xlu0 %5551, %v5458
        %v5553 = vpop.permute.xlu0 %5552
        %5556 = vset.pattern.permute.xlu0 2
        %5557 = vperm.xlu0 %5556, %v5459
        %v5558 = vpop.permute.xlu0 %5557
        %5561 = vset.pattern.permute.xlu0 2
        %5562 = vperm.xlu0 %5561, %v5460
        %v5563 = vpop.permute.xlu0 %5562
        %5566 = vset.pattern.permute.xlu0 2
        %5567 = vperm.xlu0 %5566, %v5461
        %v5568 = vpop.permute.xlu0 %5567
        %5571 = vset.pattern.permute.xlu0 2
        %5572 = vperm.xlu0 %5571, %v5462
        %v5573 = vpop.permute.xlu0 %5572
        %5576 = vset.pattern.permute.xlu0 2
        %5577 = vperm.xlu0 %5576, %v5463
        %v5578 = vpop.permute.xlu0 %5577
        %5581 = vset.pattern.permute.xlu0 2
        %5582 = vperm.xlu0 %5581, %v5464
        %v5583 = vpop.permute.xlu0 %5582
        %5586 = vset.pattern.permute.xlu0 2
        %5587 = vperm.xlu0 %5586, %v5465
        %v5588 = vpop.permute.xlu0 %5587
        %5591 = vset.pattern.permute.xlu0 2
        %5592 = vperm.xlu0 %5591, %v5466
        %v5593 = vpop.permute.xlu0 %5592
        %5596 = vset.pattern.permute.xlu0 2
        %5597 = vperm.xlu0 %5596, %v5467
        %v5598 = vpop.permute.xlu0 %5597
        %5601 = vset.pattern.permute.xlu0 2
        %5602 = vperm.xlu0 %5601, %v5468
        %v5603 = vpop.permute.xlu0 %5602
        %5606 = vset.pattern.permute.xlu0 2
        %5607 = vperm.xlu0 %5606, %v5469
        %v5608 = vpop.permute.xlu0 %5607
        %5611 = vset.pattern.permute.xlu0 2
        %5612 = vperm.xlu0 %5611, %v5470
        %v5613 = vpop.permute.xlu0 %5612
        %5616 = vset.pattern.permute.xlu0 2
        %5617 = vperm.xlu0 %5616, %v5471
        %v5618 = vpop.permute.xlu0 %5617
        %5621 = vset.pattern.permute.xlu0 2
        %5622 = vperm.xlu0 %5621, %v5472
        %v5623 = vpop.permute.xlu0 %5622
        %5626 = vset.pattern.permute.xlu0 2
        %5627 = vperm.xlu0 %5626, %v5473
        %v5628 = vpop.permute.xlu0 %5627
        %5631 = vset.pattern.permute.xlu0 2
        %5632 = vperm.xlu0 %5631, %v5474
        %v5633 = vpop.permute.xlu0 %5632
        %v5635 = vrot.slane %v4757, 2
        %v5636 = vrot.slane %v4663, 2
        %v5637 = vsel %vm690, %v5635, %v5636
        %v5638 = vrot.slane %v4773, 2
        %v5639 = vsel %vm690, %v5636, %v5638
        %v5640 = vrot.slane %v4758, 2
        %v5641 = vrot.slane %v4666, 2
        %v5642 = vsel %vm690, %v5640, %v5641
        %v5643 = vrot.slane %v4774, 2
        %v5644 = vsel %vm690, %v5641, %v5643
        %v5645 = vrot.slane %v4759, 2
        %v5646 = vrot.slane %v4669, 2
        %v5647 = vsel %vm690, %v5645, %v5646
        %v5648 = vrot.slane %v4775, 2
        %v5649 = vsel %vm690, %v5646, %v5648
        %v5650 = vrot.slane %v4760, 2
        %v5651 = vrot.slane %v4672, 2
        %v5652 = vsel %vm690, %v5650, %v5651
        %v5653 = vrot.slane %v4776, 2
        %v5654 = vsel %vm690, %v5651, %v5653
        %v5655 = vrot.slane %v4761, 2
        %v5656 = vrot.slane %v4675, 2
        %v5657 = vsel %vm690, %v5655, %v5656
        %v5658 = vrot.slane %v4777, 2
        %v5659 = vsel %vm690, %v5656, %v5658
        %v5660 = vrot.slane %v4762, 2
        %v5661 = vrot.slane %v4678, 2
        %v5662 = vsel %vm690, %v5660, %v5661
        %v5663 = vrot.slane %v4778, 2
        %v5664 = vsel %vm690, %v5661, %v5663
        %v5665 = vrot.slane %v4763, 2
        %v5666 = vrot.slane %v4681, 2
        %v5667 = vsel %vm690, %v5665, %v5666
        %v5668 = vrot.slane %v4779, 2
        %v5669 = vsel %vm690, %v5666, %v5668
        %v5670 = vrot.slane %v4764, 2
        %v5671 = vrot.slane %v4684, 2
        %v5672 = vsel %vm690, %v5670, %v5671
        %v5673 = vrot.slane %v4780, 2
        %v5674 = vsel %vm690, %v5671, %v5673
        %v5675 = vrot.slane %v4765, 2
        %v5676 = vrot.slane %v4687, 2
        %v5677 = vsel %vm690, %v5675, %v5676
        %v5678 = vrot.slane %v4781, 2
        %v5679 = vsel %vm690, %v5676, %v5678
        %v5680 = vrot.slane %v4766, 2
        %v5681 = vrot.slane %v4690, 2
        %v5682 = vsel %vm690, %v5680, %v5681
        %v5683 = vrot.slane %v4782, 2
        %v5684 = vsel %vm690, %v5681, %v5683
        %v5685 = vrot.slane %v4767, 2
        %v5686 = vrot.slane %v4693, 2
        %v5687 = vsel %vm690, %v5685, %v5686
        %v5688 = vrot.slane %v4783, 2
        %v5689 = vsel %vm690, %v5686, %v5688
        %v5690 = vrot.slane %v4768, 2
        %v5691 = vrot.slane %v4696, 2
        %v5692 = vsel %vm690, %v5690, %v5691
        %v5693 = vrot.slane %v4784, 2
        %v5694 = vsel %vm690, %v5691, %v5693
        %v5695 = vrot.slane %v4769, 2
        %v5696 = vrot.slane %v4699, 2
        %v5697 = vsel %vm690, %v5695, %v5696
        %v5698 = vrot.slane %v4785, 2
        %v5699 = vsel %vm690, %v5696, %v5698
        %v5700 = vrot.slane %v4770, 2
        %v5701 = vrot.slane %v4702, 2
        %v5702 = vsel %vm690, %v5700, %v5701
        %v5703 = vrot.slane %v4786, 2
        %v5704 = vsel %vm690, %v5701, %v5703
        %v5705 = vrot.slane %v4771, 2
        %v5706 = vrot.slane %v4705, 2
        %v5707 = vsel %vm690, %v5705, %v5706
        %v5708 = vrot.slane %v4787, 2
        %v5709 = vsel %vm690, %v5706, %v5708
        %v5741 = vmul.f32 %v5478, %v692
        %v5742 = vmul.f32 %v5483, %v692
        %v5743 = vmul.f32 %v5488, %v5637
        %v5744 = vmul.f32 %v5493, %v5639
        %v5745 = vmul.f32 %v5498, %v5642
        %v5746 = vmul.f32 %v5503, %v5644
        %v5747 = vmul.f32 %v5508, %v5647
        %v5748 = vmul.f32 %v5513, %v5649
        %v5749 = vmul.f32 %v5518, %v5652
        %v5750 = vmul.f32 %v5523, %v5654
        %v5751 = vmul.f32 %v5528, %v5657
        %v5752 = vmul.f32 %v5533, %v5659
        %v5753 = vmul.f32 %v5538, %v5662
        %v5754 = vmul.f32 %v5543, %v5664
        %v5755 = vmul.f32 %v5548, %v5667
        %v5756 = vmul.f32 %v5553, %v5669
        %v5757 = vmul.f32 %v5558, %v5672
        %v5758 = vmul.f32 %v5563, %v5674
        %v5759 = vmul.f32 %v5568, %v5677
        %v5760 = vmul.f32 %v5573, %v5679
        %v5761 = vmul.f32 %v5578, %v5682
        %v5762 = vmul.f32 %v5583, %v5684
        %v5763 = vmul.f32 %v5588, %v5687
        %v5764 = vmul.f32 %v5593, %v5689
        %v5765 = vmul.f32 %v5598, %v5692
        %v5766 = vmul.f32 %v5603, %v5694
        %v5767 = vmul.f32 %v5608, %v5697
        %v5768 = vmul.f32 %v5613, %v5699
        %v5769 = vmul.f32 %v5618, %v5702
        %v5770 = vmul.f32 %v5623, %v5704
        %v5771 = vmul.f32 %v5628, %v5707
        %v5772 = vmul.f32 %v5633, %v5709
        %v5773 = vadd.f32 %v5409, %v5741
        %v5774 = vadd.f32 %v5410, %v5742
        %v5775 = vadd.f32 %v5411, %v5743
        %v5776 = vadd.f32 %v5412, %v5744
        %v5777 = vadd.f32 %v5413, %v5745
        %v5778 = vadd.f32 %v5414, %v5746
        %v5779 = vadd.f32 %v5415, %v5747
        %v5780 = vadd.f32 %v5416, %v5748
        %v5781 = vadd.f32 %v5417, %v5749
        %v5782 = vadd.f32 %v5418, %v5750
        %v5783 = vadd.f32 %v5419, %v5751
        %v5784 = vadd.f32 %v5420, %v5752
        %v5785 = vadd.f32 %v5421, %v5753
        %v5786 = vadd.f32 %v5422, %v5754
        %v5787 = vadd.f32 %v5423, %v5755
        %v5788 = vadd.f32 %v5424, %v5756
        %v5789 = vadd.f32 %v5425, %v5757
        %v5790 = vadd.f32 %v5426, %v5758
        %v5791 = vadd.f32 %v5427, %v5759
        %v5792 = vadd.f32 %v5428, %v5760
        %v5793 = vadd.f32 %v5429, %v5761
        %v5794 = vadd.f32 %v5430, %v5762
        %v5795 = vadd.f32 %v5431, %v5763
        %v5796 = vadd.f32 %v5432, %v5764
        %v5797 = vadd.f32 %v5433, %v5765
        %v5798 = vadd.f32 %v5434, %v5766
        %v5799 = vadd.f32 %v5435, %v5767
        %v5800 = vadd.f32 %v5436, %v5768
        %v5801 = vadd.f32 %v5437, %v5769
        %v5802 = vadd.f32 %v5438, %v5770
        %v5803 = vadd.f32 %v5439, %v5771
        %v5804 = vadd.f32 %v5440, %v5772
        %s5805 = sld [smem:[#allocation5 + $0x3]]
        %v5806 = vstv %s5805
        %v5807 = vmul.f32 %v5806, %v3772
        %v5808 = vmul.f32 %v5806, %v3787
        %v5809 = vmul.f32 %v5806, %v3802
        %v5810 = vmul.f32 %v5806, %v3817
        %v5811 = vmul.f32 %v5806, %v3832
        %v5812 = vmul.f32 %v5806, %v3847
        %v5813 = vmul.f32 %v5806, %v3862
        %v5814 = vmul.f32 %v5806, %v3877
        %v5815 = vmul.f32 %v5806, %v3892
        %v5816 = vmul.f32 %v5806, %v3907
        %v5817 = vmul.f32 %v5806, %v3922
        %v5818 = vmul.f32 %v5806, %v3937
        %v5819 = vmul.f32 %v5806, %v3952
        %v5820 = vmul.f32 %v5806, %v3967
        %v5821 = vmul.f32 %v5806, %v3982
        %v5822 = vmul.f32 %v5806, %v3997
        %v5823 = vmul.f32 %v5806, %v4012
        %v5824 = vmul.f32 %v5806, %v4027
        %v5825 = vmul.f32 %v5806, %v4042
        %v5826 = vmul.f32 %v5806, %v4057
        %v5827 = vmul.f32 %v5806, %v4072
        %v5828 = vmul.f32 %v5806, %v4087
        %v5829 = vmul.f32 %v5806, %v4102
        %v5830 = vmul.f32 %v5806, %v4117
        %v5831 = vmul.f32 %v5806, %v4132
        %v5832 = vmul.f32 %v5806, %v4147
        %v5833 = vmul.f32 %v5806, %v4162
        %v5834 = vmul.f32 %v5806, %v4177
        %v5835 = vmul.f32 %v5806, %v4192
        %v5836 = vmul.f32 %v5806, %v4207
        %v5837 = vmul.f32 %v5806, %v4222
        %v5838 = vmul.f32 %v5806, %v4237
        %5840 = vset.pattern.permute.xlu0 3
        %5841 = vperm.xlu0 %5840, %v5807
        %v5842 = vpop.permute.xlu0 %5841
        %5845 = vset.pattern.permute.xlu0 3
        %5846 = vperm.xlu0 %5845, %v5808
        %v5847 = vpop.permute.xlu0 %5846
        %5850 = vset.pattern.permute.xlu0 3
        %5851 = vperm.xlu0 %5850, %v5809
        %v5852 = vpop.permute.xlu0 %5851
        %5855 = vset.pattern.permute.xlu0 3
        %5856 = vperm.xlu0 %5855, %v5810
        %v5857 = vpop.permute.xlu0 %5856
        %5860 = vset.pattern.permute.xlu0 3
        %5861 = vperm.xlu0 %5860, %v5811
        %v5862 = vpop.permute.xlu0 %5861
        %5865 = vset.pattern.permute.xlu0 3
        %5866 = vperm.xlu0 %5865, %v5812
        %v5867 = vpop.permute.xlu0 %5866
        %5870 = vset.pattern.permute.xlu0 3
        %5871 = vperm.xlu0 %5870, %v5813
        %v5872 = vpop.permute.xlu0 %5871
        %5875 = vset.pattern.permute.xlu0 3
        %5876 = vperm.xlu0 %5875, %v5814
        %v5877 = vpop.permute.xlu0 %5876
        %5880 = vset.pattern.permute.xlu0 3
        %5881 = vperm.xlu0 %5880, %v5815
        %v5882 = vpop.permute.xlu0 %5881
        %5885 = vset.pattern.permute.xlu0 3
        %5886 = vperm.xlu0 %5885, %v5816
        %v5887 = vpop.permute.xlu0 %5886
        %5890 = vset.pattern.permute.xlu0 3
        %5891 = vperm.xlu0 %5890, %v5817
        %v5892 = vpop.permute.xlu0 %5891
        %5895 = vset.pattern.permute.xlu0 3
        %5896 = vperm.xlu0 %5895, %v5818
        %v5897 = vpop.permute.xlu0 %5896
        %5900 = vset.pattern.permute.xlu0 3
        %5901 = vperm.xlu0 %5900, %v5819
        %v5902 = vpop.permute.xlu0 %5901
        %5905 = vset.pattern.permute.xlu0 3
        %5906 = vperm.xlu0 %5905, %v5820
        %v5907 = vpop.permute.xlu0 %5906
        %5910 = vset.pattern.permute.xlu0 3
        %5911 = vperm.xlu0 %5910, %v5821
        %v5912 = vpop.permute.xlu0 %5911
        %5915 = vset.pattern.permute.xlu0 3
        %5916 = vperm.xlu0 %5915, %v5822
        %v5917 = vpop.permute.xlu0 %5916
        %5920 = vset.pattern.permute.xlu0 3
        %5921 = vperm.xlu0 %5920, %v5823
        %v5922 = vpop.permute.xlu0 %5921
        %5925 = vset.pattern.permute.xlu0 3
        %5926 = vperm.xlu0 %5925, %v5824
        %v5927 = vpop.permute.xlu0 %5926
        %5930 = vset.pattern.permute.xlu0 3
        %5931 = vperm.xlu0 %5930, %v5825
        %v5932 = vpop.permute.xlu0 %5931
        %5935 = vset.pattern.permute.xlu0 3
        %5936 = vperm.xlu0 %5935, %v5826
        %v5937 = vpop.permute.xlu0 %5936
        %5940 = vset.pattern.permute.xlu0 3
        %5941 = vperm.xlu0 %5940, %v5827
        %v5942 = vpop.permute.xlu0 %5941
        %5945 = vset.pattern.permute.xlu0 3
        %5946 = vperm.xlu0 %5945, %v5828
        %v5947 = vpop.permute.xlu0 %5946
        %5950 = vset.pattern.permute.xlu0 3
        %5951 = vperm.xlu0 %5950, %v5829
        %v5952 = vpop.permute.xlu0 %5951
        %5955 = vset.pattern.permute.xlu0 3
        %5956 = vperm.xlu0 %5955, %v5830
        %v5957 = vpop.permute.xlu0 %5956
        %5960 = vset.pattern.permute.xlu0 3
        %5961 = vperm.xlu0 %5960, %v5831
        %v5962 = vpop.permute.xlu0 %5961
        %5965 = vset.pattern.permute.xlu0 3
        %5966 = vperm.xlu0 %5965, %v5832
        %v5967 = vpop.permute.xlu0 %5966
        %5970 = vset.pattern.permute.xlu0 3
        %5971 = vperm.xlu0 %5970, %v5833
        %v5972 = vpop.permute.xlu0 %5971
        %5975 = vset.pattern.permute.xlu0 3
        %5976 = vperm.xlu0 %5975, %v5834
        %v5977 = vpop.permute.xlu0 %5976
        %5980 = vset.pattern.permute.xlu0 3
        %5981 = vperm.xlu0 %5980, %v5835
        %v5982 = vpop.permute.xlu0 %5981
        %5985 = vset.pattern.permute.xlu0 3
        %5986 = vperm.xlu0 %5985, %v5836
        %v5987 = vpop.permute.xlu0 %5986
        %5990 = vset.pattern.permute.xlu0 3
        %5991 = vperm.xlu0 %5990, %v5837
        %v5992 = vpop.permute.xlu0 %5991
        %5995 = vset.pattern.permute.xlu0 3
        %5996 = vperm.xlu0 %5995, %v5838
        %v5997 = vpop.permute.xlu0 %5996
        %v5999 = vmul.f32 %v5842, %v4757
        %v6000 = vmul.f32 %v5847, %v4663
        %v6001 = vmul.f32 %v5852, %v4758
        %v6002 = vmul.f32 %v5857, %v4666
        %v6003 = vmul.f32 %v5862, %v4759
        %v6004 = vmul.f32 %v5867, %v4669
        %v6005 = vmul.f32 %v5872, %v4760
        %v6006 = vmul.f32 %v5877, %v4672
        %v6007 = vmul.f32 %v5882, %v4761
        %v6008 = vmul.f32 %v5887, %v4675
        %v6009 = vmul.f32 %v5892, %v4762
        %v6010 = vmul.f32 %v5897, %v4678
        %v6011 = vmul.f32 %v5902, %v4763
        %v6012 = vmul.f32 %v5907, %v4681
        %v6013 = vmul.f32 %v5912, %v4764
        %v6014 = vmul.f32 %v5917, %v4684
        %v6015 = vmul.f32 %v5922, %v4765
        %v6016 = vmul.f32 %v5927, %v4687
        %v6017 = vmul.f32 %v5932, %v4766
        %v6018 = vmul.f32 %v5937, %v4690
        %v6019 = vmul.f32 %v5942, %v4767
        %v6020 = vmul.f32 %v5947, %v4693
        %v6021 = vmul.f32 %v5952, %v4768
        %v6022 = vmul.f32 %v5957, %v4696
        %v6023 = vmul.f32 %v5962, %v4769
        %v6024 = vmul.f32 %v5967, %v4699
        %v6025 = vmul.f32 %v5972, %v4770
        %v6026 = vmul.f32 %v5977, %v4702
        %v6027 = vmul.f32 %v5982, %v4771
        %v6028 = vmul.f32 %v5987, %v4705
        %v6029 = vmul.f32 %v5992, %v4772
        %v6030 = vmul.f32 %v5997, %v4708
        %v6031 = vadd.f32 %v5773, %v5999
        %v6032 = vadd.f32 %v5774, %v6000
        %v6033 = vadd.f32 %v5775, %v6001
        %v6034 = vadd.f32 %v5776, %v6002
        %v6035 = vadd.f32 %v5777, %v6003
        %v6036 = vadd.f32 %v5778, %v6004
        %v6037 = vadd.f32 %v5779, %v6005
        %v6038 = vadd.f32 %v5780, %v6006
        %v6039 = vadd.f32 %v5781, %v6007
        %v6040 = vadd.f32 %v5782, %v6008
        %v6041 = vadd.f32 %v5783, %v6009
        %v6042 = vadd.f32 %v5784, %v6010
        %v6043 = vadd.f32 %v5785, %v6011
        %v6044 = vadd.f32 %v5786, %v6012
        %v6045 = vadd.f32 %v5787, %v6013
        %v6046 = vadd.f32 %v5788, %v6014
        %v6047 = vadd.f32 %v5789, %v6015
        %v6048 = vadd.f32 %v5790, %v6016
        %v6049 = vadd.f32 %v5791, %v6017
        %v6050 = vadd.f32 %v5792, %v6018
        %v6051 = vadd.f32 %v5793, %v6019
        %v6052 = vadd.f32 %v5794, %v6020
        %v6053 = vadd.f32 %v5795, %v6021
        %v6054 = vadd.f32 %v5796, %v6022
        %v6055 = vadd.f32 %v5797, %v6023
        %v6056 = vadd.f32 %v5798, %v6024
        %v6057 = vadd.f32 %v5799, %v6025
        %v6058 = vadd.f32 %v5800, %v6026
        %v6059 = vadd.f32 %v5801, %v6027
        %v6060 = vadd.f32 %v5802, %v6028
        %v6061 = vadd.f32 %v5803, %v6029
        %v6062 = vadd.f32 %v5804, %v6030
        %s6063 = sld [smem:[#allocation5 + $0x4]]
        %v6064 = vstv %s6063
        %v6065 = vmul.f32 %v6064, %v3772
        %v6066 = vmul.f32 %v6064, %v3787
        %v6067 = vmul.f32 %v6064, %v3802
        %v6068 = vmul.f32 %v6064, %v3817
        %v6069 = vmul.f32 %v6064, %v3832
        %v6070 = vmul.f32 %v6064, %v3847
        %v6071 = vmul.f32 %v6064, %v3862
        %v6072 = vmul.f32 %v6064, %v3877
        %v6073 = vmul.f32 %v6064, %v3892
        %v6074 = vmul.f32 %v6064, %v3907
        %v6075 = vmul.f32 %v6064, %v3922
        %v6076 = vmul.f32 %v6064, %v3937
        %v6077 = vmul.f32 %v6064, %v3952
        %v6078 = vmul.f32 %v6064, %v3967
        %v6079 = vmul.f32 %v6064, %v3982
        %v6080 = vmul.f32 %v6064, %v3997
        %v6081 = vmul.f32 %v6064, %v4012
        %v6082 = vmul.f32 %v6064, %v4027
        %v6083 = vmul.f32 %v6064, %v4042
        %v6084 = vmul.f32 %v6064, %v4057
        %v6085 = vmul.f32 %v6064, %v4072
        %v6086 = vmul.f32 %v6064, %v4087
        %v6087 = vmul.f32 %v6064, %v4102
        %v6088 = vmul.f32 %v6064, %v4117
        %v6089 = vmul.f32 %v6064, %v4132
        %v6090 = vmul.f32 %v6064, %v4147
        %v6091 = vmul.f32 %v6064, %v4162
        %v6092 = vmul.f32 %v6064, %v4177
        %v6093 = vmul.f32 %v6064, %v4192
        %v6094 = vmul.f32 %v6064, %v4207
        %v6095 = vmul.f32 %v6064, %v4222
        %v6096 = vmul.f32 %v6064, %v4237
        %6098 = vset.pattern.permute.xlu0 4
        %6099 = vperm.xlu0 %6098, %v6065
        %v6100 = vpop.permute.xlu0 %6099
        %6103 = vset.pattern.permute.xlu0 4
        %6104 = vperm.xlu0 %6103, %v6066
        %v6105 = vpop.permute.xlu0 %6104
        %6108 = vset.pattern.permute.xlu0 4
        %6109 = vperm.xlu0 %6108, %v6067
        %v6110 = vpop.permute.xlu0 %6109
        %6113 = vset.pattern.permute.xlu0 4
        %6114 = vperm.xlu0 %6113, %v6068
        %v6115 = vpop.permute.xlu0 %6114
        %6118 = vset.pattern.permute.xlu0 4
        %6119 = vperm.xlu0 %6118, %v6069
        %v6120 = vpop.permute.xlu0 %6119
        %6123 = vset.pattern.permute.xlu0 4
        %6124 = vperm.xlu0 %6123, %v6070
        %v6125 = vpop.permute.xlu0 %6124
        %6128 = vset.pattern.permute.xlu0 4
        %6129 = vperm.xlu0 %6128, %v6071
        %v6130 = vpop.permute.xlu0 %6129
        %6133 = vset.pattern.permute.xlu0 4
        %6134 = vperm.xlu0 %6133, %v6072
        %v6135 = vpop.permute.xlu0 %6134
        %6138 = vset.pattern.permute.xlu0 4
        %6139 = vperm.xlu0 %6138, %v6073
        %v6140 = vpop.permute.xlu0 %6139
        %6143 = vset.pattern.permute.xlu0 4
        %6144 = vperm.xlu0 %6143, %v6074
        %v6145 = vpop.permute.xlu0 %6144
        %6148 = vset.pattern.permute.xlu0 4
        %6149 = vperm.xlu0 %6148, %v6075
        %v6150 = vpop.permute.xlu0 %6149
        %6153 = vset.pattern.permute.xlu0 4
        %6154 = vperm.xlu0 %6153, %v6076
        %v6155 = vpop.permute.xlu0 %6154
        %6158 = vset.pattern.permute.xlu0 4
        %6159 = vperm.xlu0 %6158, %v6077
        %v6160 = vpop.permute.xlu0 %6159
        %6163 = vset.pattern.permute.xlu0 4
        %6164 = vperm.xlu0 %6163, %v6078
        %v6165 = vpop.permute.xlu0 %6164
        %6168 = vset.pattern.permute.xlu0 4
        %6169 = vperm.xlu0 %6168, %v6079
        %v6170 = vpop.permute.xlu0 %6169
        %6173 = vset.pattern.permute.xlu0 4
        %6174 = vperm.xlu0 %6173, %v6080
        %v6175 = vpop.permute.xlu0 %6174
        %6178 = vset.pattern.permute.xlu0 4
        %6179 = vperm.xlu0 %6178, %v6081
        %v6180 = vpop.permute.xlu0 %6179
        %6183 = vset.pattern.permute.xlu0 4
        %6184 = vperm.xlu0 %6183, %v6082
        %v6185 = vpop.permute.xlu0 %6184
        %6188 = vset.pattern.permute.xlu0 4
        %6189 = vperm.xlu0 %6188, %v6083
        %v6190 = vpop.permute.xlu0 %6189
        %6193 = vset.pattern.permute.xlu0 4
        %6194 = vperm.xlu0 %6193, %v6084
        %v6195 = vpop.permute.xlu0 %6194
        %6198 = vset.pattern.permute.xlu0 4
        %6199 = vperm.xlu0 %6198, %v6085
        %v6200 = vpop.permute.xlu0 %6199
        %6203 = vset.pattern.permute.xlu0 4
        %6204 = vperm.xlu0 %6203, %v6086
        %v6205 = vpop.permute.xlu0 %6204
        %6208 = vset.pattern.permute.xlu0 4
        %6209 = vperm.xlu0 %6208, %v6087
        %v6210 = vpop.permute.xlu0 %6209
        %6213 = vset.pattern.permute.xlu0 4
        %6214 = vperm.xlu0 %6213, %v6088
        %v6215 = vpop.permute.xlu0 %6214
        %6218 = vset.pattern.permute.xlu0 4
        %6219 = vperm.xlu0 %6218, %v6089
        %v6220 = vpop.permute.xlu0 %6219
        %6223 = vset.pattern.permute.xlu0 4
        %6224 = vperm.xlu0 %6223, %v6090
        %v6225 = vpop.permute.xlu0 %6224
        %6228 = vset.pattern.permute.xlu0 4
        %6229 = vperm.xlu0 %6228, %v6091
        %v6230 = vpop.permute.xlu0 %6229
        %6233 = vset.pattern.permute.xlu0 4
        %6234 = vperm.xlu0 %6233, %v6092
        %v6235 = vpop.permute.xlu0 %6234
        %6238 = vset.pattern.permute.xlu0 4
        %6239 = vperm.xlu0 %6238, %v6093
        %v6240 = vpop.permute.xlu0 %6239
        %6243 = vset.pattern.permute.xlu0 4
        %6244 = vperm.xlu0 %6243, %v6094
        %v6245 = vpop.permute.xlu0 %6244
        %6248 = vset.pattern.permute.xlu0 4
        %6249 = vperm.xlu0 %6248, %v6095
        %v6250 = vpop.permute.xlu0 %6249
        %6253 = vset.pattern.permute.xlu0 4
        %6254 = vperm.xlu0 %6253, %v6096
        %v6255 = vpop.permute.xlu0 %6254
        %v6259 = vrot.slane %v4772, 1
        %v6260 = vrot.slane %v4708, 1
        %v6261 = vsel %vm612, %v6259, %v6260
        %v6262 = vrot.slane %v4788, 1
        %v6263 = vsel %vm612, %v6260, %v6262
        %v6266 = vmul.f32 %v6100, %v5273
        %v6267 = vmul.f32 %v6105, %v5275
        %v6268 = vmul.f32 %v6110, %v5278
        %v6269 = vmul.f32 %v6115, %v5280
        %v6270 = vmul.f32 %v6120, %v5283
        %v6271 = vmul.f32 %v6125, %v5285
        %v6272 = vmul.f32 %v6130, %v5288
        %v6273 = vmul.f32 %v6135, %v5290
        %v6274 = vmul.f32 %v6140, %v5293
        %v6275 = vmul.f32 %v6145, %v5295
        %v6276 = vmul.f32 %v6150, %v5298
        %v6277 = vmul.f32 %v6155, %v5300
        %v6278 = vmul.f32 %v6160, %v5303
        %v6279 = vmul.f32 %v6165, %v5305
        %v6280 = vmul.f32 %v6170, %v5308
        %v6281 = vmul.f32 %v6175, %v5310
        %v6282 = vmul.f32 %v6180, %v5313
        %v6283 = vmul.f32 %v6185, %v5315
        %v6284 = vmul.f32 %v6190, %v5318
        %v6285 = vmul.f32 %v6195, %v5320
        %v6286 = vmul.f32 %v6200, %v5323
        %v6287 = vmul.f32 %v6205, %v5325
        %v6288 = vmul.f32 %v6210, %v5328
        %v6289 = vmul.f32 %v6215, %v5330
        %v6290 = vmul.f32 %v6220, %v5333
        %v6291 = vmul.f32 %v6225, %v5335
        %v6292 = vmul.f32 %v6230, %v5338
        %v6293 = vmul.f32 %v6235, %v5340
        %v6294 = vmul.f32 %v6240, %v5343
        %v6295 = vmul.f32 %v6245, %v5345
        %v6296 = vmul.f32 %v6250, %v6261
        %v6297 = vmul.f32 %v6255, %v6263
        %v6298 = vadd.f32 %v6031, %v6266
        %v6299 = vadd.f32 %v6032, %v6267
        %v6300 = vadd.f32 %v6033, %v6268
        %v6301 = vadd.f32 %v6034, %v6269
        %v6302 = vadd.f32 %v6035, %v6270
        %v6303 = vadd.f32 %v6036, %v6271
        %v6304 = vadd.f32 %v6037, %v6272
        %v6305 = vadd.f32 %v6038, %v6273
        %v6306 = vadd.f32 %v6039, %v6274
        %v6307 = vadd.f32 %v6040, %v6275
        %v6308 = vadd.f32 %v6041, %v6276
        %v6309 = vadd.f32 %v6042, %v6277
        %v6310 = vadd.f32 %v6043, %v6278
        %v6311 = vadd.f32 %v6044, %v6279
        %v6312 = vadd.f32 %v6045, %v6280
        %v6313 = vadd.f32 %v6046, %v6281
        %v6314 = vadd.f32 %v6047, %v6282
        %v6315 = vadd.f32 %v6048, %v6283
        %v6316 = vadd.f32 %v6049, %v6284
        %v6317 = vadd.f32 %v6050, %v6285
        %v6318 = vadd.f32 %v6051, %v6286
        %v6319 = vadd.f32 %v6052, %v6287
        %v6320 = vadd.f32 %v6053, %v6288
        %v6321 = vadd.f32 %v6054, %v6289
        %v6322 = vadd.f32 %v6055, %v6290
        %v6323 = vadd.f32 %v6056, %v6291
        %v6324 = vadd.f32 %v6057, %v6292
        %v6325 = vadd.f32 %v6058, %v6293
        %v6326 = vadd.f32 %v6059, %v6294
        %v6327 = vadd.f32 %v6060, %v6295
        %v6328 = vadd.f32 %v6061, %v6296
        %v6329 = vadd.f32 %v6062, %v6297
        %s6330 = sld [smem:[#allocation5 + $0x5]]
        %v6331 = vstv %s6330
        %v6332 = vmul.f32 %v6331, %v3772
        %v6333 = vmul.f32 %v6331, %v3787
        %v6334 = vmul.f32 %v6331, %v3802
        %v6335 = vmul.f32 %v6331, %v3817
        %v6336 = vmul.f32 %v6331, %v3832
        %v6337 = vmul.f32 %v6331, %v3847
        %v6338 = vmul.f32 %v6331, %v3862
        %v6339 = vmul.f32 %v6331, %v3877
        %v6340 = vmul.f32 %v6331, %v3892
        %v6341 = vmul.f32 %v6331, %v3907
        %v6342 = vmul.f32 %v6331, %v3922
        %v6343 = vmul.f32 %v6331, %v3937
        %v6344 = vmul.f32 %v6331, %v3952
        %v6345 = vmul.f32 %v6331, %v3967
        %v6346 = vmul.f32 %v6331, %v3982
        %v6347 = vmul.f32 %v6331, %v3997
        %v6348 = vmul.f32 %v6331, %v4012
        %v6349 = vmul.f32 %v6331, %v4027
        %v6350 = vmul.f32 %v6331, %v4042
        %v6351 = vmul.f32 %v6331, %v4057
        %v6352 = vmul.f32 %v6331, %v4072
        %v6353 = vmul.f32 %v6331, %v4087
        %v6354 = vmul.f32 %v6331, %v4102
        %v6355 = vmul.f32 %v6331, %v4117
        %v6356 = vmul.f32 %v6331, %v4132
        %v6357 = vmul.f32 %v6331, %v4147
        %v6358 = vmul.f32 %v6331, %v4162
        %v6359 = vmul.f32 %v6331, %v4177
        %v6360 = vmul.f32 %v6331, %v4192
        %v6361 = vmul.f32 %v6331, %v4207
        %v6362 = vmul.f32 %v6331, %v4222
        %v6363 = vmul.f32 %v6331, %v4237
        %6365 = vset.pattern.permute.xlu0 5
        %6366 = vperm.xlu0 %6365, %v6332
        %v6367 = vpop.permute.xlu0 %6366
        %6370 = vset.pattern.permute.xlu0 5
        %6371 = vperm.xlu0 %6370, %v6333
        %v6372 = vpop.permute.xlu0 %6371
        %6375 = vset.pattern.permute.xlu0 5
        %6376 = vperm.xlu0 %6375, %v6334
        %v6377 = vpop.permute.xlu0 %6376
        %6380 = vset.pattern.permute.xlu0 5
        %6381 = vperm.xlu0 %6380, %v6335
        %v6382 = vpop.permute.xlu0 %6381
        %6385 = vset.pattern.permute.xlu0 5
        %6386 = vperm.xlu0 %6385, %v6336
        %v6387 = vpop.permute.xlu0 %6386
        %6390 = vset.pattern.permute.xlu0 5
        %6391 = vperm.xlu0 %6390, %v6337
        %v6392 = vpop.permute.xlu0 %6391
        %6395 = vset.pattern.permute.xlu0 5
        %6396 = vperm.xlu0 %6395, %v6338
        %v6397 = vpop.permute.xlu0 %6396
        %6400 = vset.pattern.permute.xlu0 5
        %6401 = vperm.xlu0 %6400, %v6339
        %v6402 = vpop.permute.xlu0 %6401
        %6405 = vset.pattern.permute.xlu0 5
        %6406 = vperm.xlu0 %6405, %v6340
        %v6407 = vpop.permute.xlu0 %6406
        %6410 = vset.pattern.permute.xlu0 5
        %6411 = vperm.xlu0 %6410, %v6341
        %v6412 = vpop.permute.xlu0 %6411
        %6415 = vset.pattern.permute.xlu0 5
        %6416 = vperm.xlu0 %6415, %v6342
        %v6417 = vpop.permute.xlu0 %6416
        %6420 = vset.pattern.permute.xlu0 5
        %6421 = vperm.xlu0 %6420, %v6343
        %v6422 = vpop.permute.xlu0 %6421
        %6425 = vset.pattern.permute.xlu0 5
        %6426 = vperm.xlu0 %6425, %v6344
        %v6427 = vpop.permute.xlu0 %6426
        %6430 = vset.pattern.permute.xlu0 5
        %6431 = vperm.xlu0 %6430, %v6345
        %v6432 = vpop.permute.xlu0 %6431
        %6435 = vset.pattern.permute.xlu0 5
        %6436 = vperm.xlu0 %6435, %v6346
        %v6437 = vpop.permute.xlu0 %6436
        %6440 = vset.pattern.permute.xlu0 5
        %6441 = vperm.xlu0 %6440, %v6347
        %v6442 = vpop.permute.xlu0 %6441
        %6445 = vset.pattern.permute.xlu0 5
        %6446 = vperm.xlu0 %6445, %v6348
        %v6447 = vpop.permute.xlu0 %6446
        %6450 = vset.pattern.permute.xlu0 5
        %6451 = vperm.xlu0 %6450, %v6349
        %v6452 = vpop.permute.xlu0 %6451
        %6455 = vset.pattern.permute.xlu0 5
        %6456 = vperm.xlu0 %6455, %v6350
        %v6457 = vpop.permute.xlu0 %6456
        %6460 = vset.pattern.permute.xlu0 5
        %6461 = vperm.xlu0 %6460, %v6351
        %v6462 = vpop.permute.xlu0 %6461
        %6465 = vset.pattern.permute.xlu0 5
        %6466 = vperm.xlu0 %6465, %v6352
        %v6467 = vpop.permute.xlu0 %6466
        %6470 = vset.pattern.permute.xlu0 5
        %6471 = vperm.xlu0 %6470, %v6353
        %v6472 = vpop.permute.xlu0 %6471
        %6475 = vset.pattern.permute.xlu0 5
        %6476 = vperm.xlu0 %6475, %v6354
        %v6477 = vpop.permute.xlu0 %6476
        %6480 = vset.pattern.permute.xlu0 5
        %6481 = vperm.xlu0 %6480, %v6355
        %v6482 = vpop.permute.xlu0 %6481
        %6485 = vset.pattern.permute.xlu0 5
        %6486 = vperm.xlu0 %6485, %v6356
        %v6487 = vpop.permute.xlu0 %6486
        %6490 = vset.pattern.permute.xlu0 5
        %6491 = vperm.xlu0 %6490, %v6357
        %v6492 = vpop.permute.xlu0 %6491
        %6495 = vset.pattern.permute.xlu0 5
        %6496 = vperm.xlu0 %6495, %v6358
        %v6497 = vpop.permute.xlu0 %6496
        %6500 = vset.pattern.permute.xlu0 5
        %6501 = vperm.xlu0 %6500, %v6359
        %v6502 = vpop.permute.xlu0 %6501
        %6505 = vset.pattern.permute.xlu0 5
        %6506 = vperm.xlu0 %6505, %v6360
        %v6507 = vpop.permute.xlu0 %6506
        %6510 = vset.pattern.permute.xlu0 5
        %6511 = vperm.xlu0 %6510, %v6361
        %v6512 = vpop.permute.xlu0 %6511
        %6515 = vset.pattern.permute.xlu0 5
        %6516 = vperm.xlu0 %6515, %v6362
        %v6517 = vpop.permute.xlu0 %6516
        %6520 = vset.pattern.permute.xlu0 5
        %6521 = vperm.xlu0 %6520, %v6363
        %v6522 = vpop.permute.xlu0 %6521
        %v6524 = vrot.slane %v4772, 2
        %v6525 = vrot.slane %v4708, 2
        %v6526 = vsel %vm690, %v6524, %v6525
        %v6527 = vrot.slane %v4788, 2
        %v6528 = vsel %vm690, %v6525, %v6527
        %v6531 = vmul.f32 %v6367, %v5637
        %v6532 = vmul.f32 %v6372, %v5639
        %v6533 = vmul.f32 %v6377, %v5642
        %v6534 = vmul.f32 %v6382, %v5644
        %v6535 = vmul.f32 %v6387, %v5647
        %v6536 = vmul.f32 %v6392, %v5649
        %v6537 = vmul.f32 %v6397, %v5652
        %v6538 = vmul.f32 %v6402, %v5654
        %v6539 = vmul.f32 %v6407, %v5657
        %v6540 = vmul.f32 %v6412, %v5659
        %v6541 = vmul.f32 %v6417, %v5662
        %v6542 = vmul.f32 %v6422, %v5664
        %v6543 = vmul.f32 %v6427, %v5667
        %v6544 = vmul.f32 %v6432, %v5669
        %v6545 = vmul.f32 %v6437, %v5672
        %v6546 = vmul.f32 %v6442, %v5674
        %v6547 = vmul.f32 %v6447, %v5677
        %v6548 = vmul.f32 %v6452, %v5679
        %v6549 = vmul.f32 %v6457, %v5682
        %v6550 = vmul.f32 %v6462, %v5684
        %v6551 = vmul.f32 %v6467, %v5687
        %v6552 = vmul.f32 %v6472, %v5689
        %v6553 = vmul.f32 %v6477, %v5692
        %v6554 = vmul.f32 %v6482, %v5694
        %v6555 = vmul.f32 %v6487, %v5697
        %v6556 = vmul.f32 %v6492, %v5699
        %v6557 = vmul.f32 %v6497, %v5702
        %v6558 = vmul.f32 %v6502, %v5704
        %v6559 = vmul.f32 %v6507, %v5707
        %v6560 = vmul.f32 %v6512, %v5709
        %v6561 = vmul.f32 %v6517, %v6526
        %v6562 = vmul.f32 %v6522, %v6528
        %v6563 = vadd.f32 %v6298, %v6531
        %v6564 = vadd.f32 %v6299, %v6532
        %v6565 = vadd.f32 %v6300, %v6533
        %v6566 = vadd.f32 %v6301, %v6534
        %v6567 = vadd.f32 %v6302, %v6535
        %v6568 = vadd.f32 %v6303, %v6536
        %v6569 = vadd.f32 %v6304, %v6537
        %v6570 = vadd.f32 %v6305, %v6538
        %v6571 = vadd.f32 %v6306, %v6539
        %v6572 = vadd.f32 %v6307, %v6540
        %v6573 = vadd.f32 %v6308, %v6541
        %v6574 = vadd.f32 %v6309, %v6542
        %v6575 = vadd.f32 %v6310, %v6543
        %v6576 = vadd.f32 %v6311, %v6544
        %v6577 = vadd.f32 %v6312, %v6545
        %v6578 = vadd.f32 %v6313, %v6546
        %v6579 = vadd.f32 %v6314, %v6547
        %v6580 = vadd.f32 %v6315, %v6548
        %v6581 = vadd.f32 %v6316, %v6549
        %v6582 = vadd.f32 %v6317, %v6550
        %v6583 = vadd.f32 %v6318, %v6551
        %v6584 = vadd.f32 %v6319, %v6552
        %v6585 = vadd.f32 %v6320, %v6553
        %v6586 = vadd.f32 %v6321, %v6554
        %v6587 = vadd.f32 %v6322, %v6555
        %v6588 = vadd.f32 %v6323, %v6556
        %v6589 = vadd.f32 %v6324, %v6557
        %v6590 = vadd.f32 %v6325, %v6558
        %v6591 = vadd.f32 %v6326, %v6559
        %v6592 = vadd.f32 %v6327, %v6560
        %v6593 = vadd.f32 %v6328, %v6561
        %v6594 = vadd.f32 %v6329, %v6562
        %s6595 = sld [smem:[#allocation5 + $0x6]]
        %v6596 = vstv %s6595
        %v6597 = vmul.f32 %v6596, %v3772
        %v6598 = vmul.f32 %v6596, %v3787
        %v6599 = vmul.f32 %v6596, %v3802
        %v6600 = vmul.f32 %v6596, %v3817
        %v6601 = vmul.f32 %v6596, %v3832
        %v6602 = vmul.f32 %v6596, %v3847
        %v6603 = vmul.f32 %v6596, %v3862
        %v6604 = vmul.f32 %v6596, %v3877
        %v6605 = vmul.f32 %v6596, %v3892
        %v6606 = vmul.f32 %v6596, %v3907
        %v6607 = vmul.f32 %v6596, %v3922
        %v6608 = vmul.f32 %v6596, %v3937
        %v6609 = vmul.f32 %v6596, %v3952
        %v6610 = vmul.f32 %v6596, %v3967
        %v6611 = vmul.f32 %v6596, %v3982
        %v6612 = vmul.f32 %v6596, %v3997
        %v6613 = vmul.f32 %v6596, %v4012
        %v6614 = vmul.f32 %v6596, %v4027
        %v6615 = vmul.f32 %v6596, %v4042
        %v6616 = vmul.f32 %v6596, %v4057
        %v6617 = vmul.f32 %v6596, %v4072
        %v6618 = vmul.f32 %v6596, %v4087
        %v6619 = vmul.f32 %v6596, %v4102
        %v6620 = vmul.f32 %v6596, %v4117
        %v6621 = vmul.f32 %v6596, %v4132
        %v6622 = vmul.f32 %v6596, %v4147
        %v6623 = vmul.f32 %v6596, %v4162
        %v6624 = vmul.f32 %v6596, %v4177
        %v6625 = vmul.f32 %v6596, %v4192
        %v6626 = vmul.f32 %v6596, %v4207
        %v6627 = vmul.f32 %v6596, %v4222
        %v6628 = vmul.f32 %v6596, %v4237
        %6630 = vset.pattern.permute.xlu0 6
        %6631 = vperm.xlu0 %6630, %v6597
        %v6632 = vpop.permute.xlu0 %6631
        %6635 = vset.pattern.permute.xlu0 6
        %6636 = vperm.xlu0 %6635, %v6598
        %v6637 = vpop.permute.xlu0 %6636
        %6640 = vset.pattern.permute.xlu0 6
        %6641 = vperm.xlu0 %6640, %v6599
        %v6642 = vpop.permute.xlu0 %6641
        %6645 = vset.pattern.permute.xlu0 6
        %6646 = vperm.xlu0 %6645, %v6600
        %v6647 = vpop.permute.xlu0 %6646
        %6650 = vset.pattern.permute.xlu0 6
        %6651 = vperm.xlu0 %6650, %v6601
        %v6652 = vpop.permute.xlu0 %6651
        %6655 = vset.pattern.permute.xlu0 6
        %6656 = vperm.xlu0 %6655, %v6602
        %v6657 = vpop.permute.xlu0 %6656
        %6660 = vset.pattern.permute.xlu0 6
        %6661 = vperm.xlu0 %6660, %v6603
        %v6662 = vpop.permute.xlu0 %6661
        %6665 = vset.pattern.permute.xlu0 6
        %6666 = vperm.xlu0 %6665, %v6604
        %v6667 = vpop.permute.xlu0 %6666
        %6670 = vset.pattern.permute.xlu0 6
        %6671 = vperm.xlu0 %6670, %v6605
        %v6672 = vpop.permute.xlu0 %6671
        %6675 = vset.pattern.permute.xlu0 6
        %6676 = vperm.xlu0 %6675, %v6606
        %v6677 = vpop.permute.xlu0 %6676
        %6680 = vset.pattern.permute.xlu0 6
        %6681 = vperm.xlu0 %6680, %v6607
        %v6682 = vpop.permute.xlu0 %6681
        %6685 = vset.pattern.permute.xlu0 6
        %6686 = vperm.xlu0 %6685, %v6608
        %v6687 = vpop.permute.xlu0 %6686
        %6690 = vset.pattern.permute.xlu0 6
        %6691 = vperm.xlu0 %6690, %v6609
        %v6692 = vpop.permute.xlu0 %6691
        %6695 = vset.pattern.permute.xlu0 6
        %6696 = vperm.xlu0 %6695, %v6610
        %v6697 = vpop.permute.xlu0 %6696
        %6700 = vset.pattern.permute.xlu0 6
        %6701 = vperm.xlu0 %6700, %v6611
        %v6702 = vpop.permute.xlu0 %6701
        %6705 = vset.pattern.permute.xlu0 6
        %6706 = vperm.xlu0 %6705, %v6612
        %v6707 = vpop.permute.xlu0 %6706
        %6710 = vset.pattern.permute.xlu0 6
        %6711 = vperm.xlu0 %6710, %v6613
        %v6712 = vpop.permute.xlu0 %6711
        %6715 = vset.pattern.permute.xlu0 6
        %6716 = vperm.xlu0 %6715, %v6614
        %v6717 = vpop.permute.xlu0 %6716
        %6720 = vset.pattern.permute.xlu0 6
        %6721 = vperm.xlu0 %6720, %v6615
        %v6722 = vpop.permute.xlu0 %6721
        %6725 = vset.pattern.permute.xlu0 6
        %6726 = vperm.xlu0 %6725, %v6616
        %v6727 = vpop.permute.xlu0 %6726
        %6730 = vset.pattern.permute.xlu0 6
        %6731 = vperm.xlu0 %6730, %v6617
        %v6732 = vpop.permute.xlu0 %6731
        %6735 = vset.pattern.permute.xlu0 6
        %6736 = vperm.xlu0 %6735, %v6618
        %v6737 = vpop.permute.xlu0 %6736
        %6740 = vset.pattern.permute.xlu0 6
        %6741 = vperm.xlu0 %6740, %v6619
        %v6742 = vpop.permute.xlu0 %6741
        %6745 = vset.pattern.permute.xlu0 6
        %6746 = vperm.xlu0 %6745, %v6620
        %v6747 = vpop.permute.xlu0 %6746
        %6750 = vset.pattern.permute.xlu0 6
        %6751 = vperm.xlu0 %6750, %v6621
        %v6752 = vpop.permute.xlu0 %6751
        %6755 = vset.pattern.permute.xlu0 6
        %6756 = vperm.xlu0 %6755, %v6622
        %v6757 = vpop.permute.xlu0 %6756
        %6760 = vset.pattern.permute.xlu0 6
        %6761 = vperm.xlu0 %6760, %v6623
        %v6762 = vpop.permute.xlu0 %6761
        %6765 = vset.pattern.permute.xlu0 6
        %6766 = vperm.xlu0 %6765, %v6624
        %v6767 = vpop.permute.xlu0 %6766
        %6770 = vset.pattern.permute.xlu0 6
        %6771 = vperm.xlu0 %6770, %v6625
        %v6772 = vpop.permute.xlu0 %6771
        %6775 = vset.pattern.permute.xlu0 6
        %6776 = vperm.xlu0 %6775, %v6626
        %v6777 = vpop.permute.xlu0 %6776
        %6780 = vset.pattern.permute.xlu0 6
        %6781 = vperm.xlu0 %6780, %v6627
        %v6782 = vpop.permute.xlu0 %6781
        %6785 = vset.pattern.permute.xlu0 6
        %6786 = vperm.xlu0 %6785, %v6628
        %v6787 = vpop.permute.xlu0 %6786
        %v6789 = vmul.f32 %v6632, %v4758
        %v6790 = vmul.f32 %v6637, %v4666
        %v6791 = vmul.f32 %v6642, %v4759
        %v6792 = vmul.f32 %v6647, %v4669
        %v6793 = vmul.f32 %v6652, %v4760
        %v6794 = vmul.f32 %v6657, %v4672
        %v6795 = vmul.f32 %v6662, %v4761
        %v6796 = vmul.f32 %v6667, %v4675
        %v6797 = vmul.f32 %v6672, %v4762
        %v6798 = vmul.f32 %v6677, %v4678
        %v6799 = vmul.f32 %v6682, %v4763
        %v6800 = vmul.f32 %v6687, %v4681
        %v6801 = vmul.f32 %v6692, %v4764
        %v6802 = vmul.f32 %v6697, %v4684
        %v6803 = vmul.f32 %v6702, %v4765
        %v6804 = vmul.f32 %v6707, %v4687
        %v6805 = vmul.f32 %v6712, %v4766
        %v6806 = vmul.f32 %v6717, %v4690
        %v6807 = vmul.f32 %v6722, %v4767
        %v6808 = vmul.f32 %v6727, %v4693
        %v6809 = vmul.f32 %v6732, %v4768
        %v6810 = vmul.f32 %v6737, %v4696
        %v6811 = vmul.f32 %v6742, %v4769
        %v6812 = vmul.f32 %v6747, %v4699
        %v6813 = vmul.f32 %v6752, %v4770
        %v6814 = vmul.f32 %v6757, %v4702
        %v6815 = vmul.f32 %v6762, %v4771
        %v6816 = vmul.f32 %v6767, %v4705
        %v6817 = vmul.f32 %v6772, %v4772
        %v6818 = vmul.f32 %v6777, %v4708
        %v6819 = vmul.f32 %v6782, 0.0
        %v6820 = vmul.f32 %v6787, 0.0
        %v6821 = vadd.f32 %v6563, %v6789
        %v6822 = vadd.f32 %v6564, %v6790
        %v6823 = vadd.f32 %v6565, %v6791
        %v6824 = vadd.f32 %v6566, %v6792
        %v6825 = vadd.f32 %v6567, %v6793
        %v6826 = vadd.f32 %v6568, %v6794
        %v6827 = vadd.f32 %v6569, %v6795
        %v6828 = vadd.f32 %v6570, %v6796
        %v6829 = vadd.f32 %v6571, %v6797
        %v6830 = vadd.f32 %v6572, %v6798
        %v6831 = vadd.f32 %v6573, %v6799
        %v6832 = vadd.f32 %v6574, %v6800
        %v6833 = vadd.f32 %v6575, %v6801
        %v6834 = vadd.f32 %v6576, %v6802
        %v6835 = vadd.f32 %v6577, %v6803
        %v6836 = vadd.f32 %v6578, %v6804
        %v6837 = vadd.f32 %v6579, %v6805
        %v6838 = vadd.f32 %v6580, %v6806
        %v6839 = vadd.f32 %v6581, %v6807
        %v6840 = vadd.f32 %v6582, %v6808
        %v6841 = vadd.f32 %v6583, %v6809
        %v6842 = vadd.f32 %v6584, %v6810
        %v6843 = vadd.f32 %v6585, %v6811
        %v6844 = vadd.f32 %v6586, %v6812
        %v6845 = vadd.f32 %v6587, %v6813
        %v6846 = vadd.f32 %v6588, %v6814
        %v6847 = vadd.f32 %v6589, %v6815
        %v6848 = vadd.f32 %v6590, %v6816
        %v6849 = vadd.f32 %v6591, %v6817
        %v6850 = vadd.f32 %v6592, %v6818
        %v6851 = vadd.f32 %v6593, %v6819
        %v6852 = vadd.f32 %v6594, %v6820
        %s6853 = sld [smem:[#allocation5 + $0x7]]
        %v6854 = vstv %s6853
        %v6855 = vmul.f32 %v6854, %v3772
        %v6856 = vmul.f32 %v6854, %v3787
        %v6857 = vmul.f32 %v6854, %v3802
        %v6858 = vmul.f32 %v6854, %v3817
        %v6859 = vmul.f32 %v6854, %v3832
        %v6860 = vmul.f32 %v6854, %v3847
        %v6861 = vmul.f32 %v6854, %v3862
        %v6862 = vmul.f32 %v6854, %v3877
        %v6863 = vmul.f32 %v6854, %v3892
        %v6864 = vmul.f32 %v6854, %v3907
        %v6865 = vmul.f32 %v6854, %v3922
        %v6866 = vmul.f32 %v6854, %v3937
        %v6867 = vmul.f32 %v6854, %v3952
        %v6868 = vmul.f32 %v6854, %v3967
        %v6869 = vmul.f32 %v6854, %v3982
        %v6870 = vmul.f32 %v6854, %v3997
        %v6871 = vmul.f32 %v6854, %v4012
        %v6872 = vmul.f32 %v6854, %v4027
        %v6873 = vmul.f32 %v6854, %v4042
        %v6874 = vmul.f32 %v6854, %v4057
        %v6875 = vmul.f32 %v6854, %v4072
        %v6876 = vmul.f32 %v6854, %v4087
        %v6877 = vmul.f32 %v6854, %v4102
        %v6878 = vmul.f32 %v6854, %v4117
        %v6879 = vmul.f32 %v6854, %v4132
        %v6880 = vmul.f32 %v6854, %v4147
        %v6881 = vmul.f32 %v6854, %v4162
        %v6882 = vmul.f32 %v6854, %v4177
        %v6883 = vmul.f32 %v6854, %v4192
        %v6884 = vmul.f32 %v6854, %v4207
        %v6885 = vmul.f32 %v6854, %v4222
        %v6886 = vmul.f32 %v6854, %v4237
        %6888 = vset.pattern.permute.xlu0 7
        %6889 = vperm.xlu0 %6888, %v6855
        %v6890 = vpop.permute.xlu0 %6889
        %6893 = vset.pattern.permute.xlu0 7
        %6894 = vperm.xlu0 %6893, %v6856
        %v6895 = vpop.permute.xlu0 %6894
        %6898 = vset.pattern.permute.xlu0 7
        %6899 = vperm.xlu0 %6898, %v6857
        %v6900 = vpop.permute.xlu0 %6899
        %6903 = vset.pattern.permute.xlu0 7
        %6904 = vperm.xlu0 %6903, %v6858
        %v6905 = vpop.permute.xlu0 %6904
        %6908 = vset.pattern.permute.xlu0 7
        %6909 = vperm.xlu0 %6908, %v6859
        %v6910 = vpop.permute.xlu0 %6909
        %6913 = vset.pattern.permute.xlu0 7
        %6914 = vperm.xlu0 %6913, %v6860
        %v6915 = vpop.permute.xlu0 %6914
        %6918 = vset.pattern.permute.xlu0 7
        %6919 = vperm.xlu0 %6918, %v6861
        %v6920 = vpop.permute.xlu0 %6919
        %6923 = vset.pattern.permute.xlu0 7
        %6924 = vperm.xlu0 %6923, %v6862
        %v6925 = vpop.permute.xlu0 %6924
        %6928 = vset.pattern.permute.xlu0 7
        %6929 = vperm.xlu0 %6928, %v6863
        %v6930 = vpop.permute.xlu0 %6929
        %6933 = vset.pattern.permute.xlu0 7
        %6934 = vperm.xlu0 %6933, %v6864
        %v6935 = vpop.permute.xlu0 %6934
        %6938 = vset.pattern.permute.xlu0 7
        %6939 = vperm.xlu0 %6938, %v6865
        %v6940 = vpop.permute.xlu0 %6939
        %6943 = vset.pattern.permute.xlu0 7
        %6944 = vperm.xlu0 %6943, %v6866
        %v6945 = vpop.permute.xlu0 %6944
        %6948 = vset.pattern.permute.xlu0 7
        %6949 = vperm.xlu0 %6948, %v6867
        %v6950 = vpop.permute.xlu0 %6949
        %6953 = vset.pattern.permute.xlu0 7
        %6954 = vperm.xlu0 %6953, %v6868
        %v6955 = vpop.permute.xlu0 %6954
        %6958 = vset.pattern.permute.xlu0 7
        %6959 = vperm.xlu0 %6958, %v6869
        %v6960 = vpop.permute.xlu0 %6959
        %6963 = vset.pattern.permute.xlu0 7
        %6964 = vperm.xlu0 %6963, %v6870
        %v6965 = vpop.permute.xlu0 %6964
        %6968 = vset.pattern.permute.xlu0 7
        %6969 = vperm.xlu0 %6968, %v6871
        %v6970 = vpop.permute.xlu0 %6969
        %6973 = vset.pattern.permute.xlu0 7
        %6974 = vperm.xlu0 %6973, %v6872
        %v6975 = vpop.permute.xlu0 %6974
        %6978 = vset.pattern.permute.xlu0 7
        %6979 = vperm.xlu0 %6978, %v6873
        %v6980 = vpop.permute.xlu0 %6979
        %6983 = vset.pattern.permute.xlu0 7
        %6984 = vperm.xlu0 %6983, %v6874
        %v6985 = vpop.permute.xlu0 %6984
        %6988 = vset.pattern.permute.xlu0 7
        %6989 = vperm.xlu0 %6988, %v6875
        %v6990 = vpop.permute.xlu0 %6989
        %6993 = vset.pattern.permute.xlu0 7
        %6994 = vperm.xlu0 %6993, %v6876
        %v6995 = vpop.permute.xlu0 %6994
        %6998 = vset.pattern.permute.xlu0 7
        %6999 = vperm.xlu0 %6998, %v6877
        %v7000 = vpop.permute.xlu0 %6999
        %7003 = vset.pattern.permute.xlu0 7
        %7004 = vperm.xlu0 %7003, %v6878
        %v7005 = vpop.permute.xlu0 %7004
        %7008 = vset.pattern.permute.xlu0 7
        %7009 = vperm.xlu0 %7008, %v6879
        %v7010 = vpop.permute.xlu0 %7009
        %7013 = vset.pattern.permute.xlu0 7
        %7014 = vperm.xlu0 %7013, %v6880
        %v7015 = vpop.permute.xlu0 %7014
        %7018 = vset.pattern.permute.xlu0 7
        %7019 = vperm.xlu0 %7018, %v6881
        %v7020 = vpop.permute.xlu0 %7019
        %7023 = vset.pattern.permute.xlu0 7
        %7024 = vperm.xlu0 %7023, %v6882
        %v7025 = vpop.permute.xlu0 %7024
        %7028 = vset.pattern.permute.xlu0 7
        %7029 = vperm.xlu0 %7028, %v6883
        %v7030 = vpop.permute.xlu0 %7029
        %7033 = vset.pattern.permute.xlu0 7
        %7034 = vperm.xlu0 %7033, %v6884
        %v7035 = vpop.permute.xlu0 %7034
        %7038 = vset.pattern.permute.xlu0 7
        %7039 = vperm.xlu0 %7038, %v6885
        %v7040 = vpop.permute.xlu0 %7039
        %7043 = vset.pattern.permute.xlu0 7
        %7044 = vperm.xlu0 %7043, %v6886
        %v7045 = vpop.permute.xlu0 %7044
        %v7047 = vmul.f32 %v6890, %v5278
        %v7048 = vmul.f32 %v6895, %v5280
        %v7049 = vmul.f32 %v6900, %v5283
        %v7050 = vmul.f32 %v6905, %v5285
        %v7051 = vmul.f32 %v6910, %v5288
        %v7052 = vmul.f32 %v6915, %v5290
        %v7053 = vmul.f32 %v6920, %v5293
        %v7054 = vmul.f32 %v6925, %v5295
        %v7055 = vmul.f32 %v6930, %v5298
        %v7056 = vmul.f32 %v6935, %v5300
        %v7057 = vmul.f32 %v6940, %v5303
        %v7058 = vmul.f32 %v6945, %v5305
        %v7059 = vmul.f32 %v6950, %v5308
        %v7060 = vmul.f32 %v6955, %v5310
        %v7061 = vmul.f32 %v6960, %v5313
        %v7062 = vmul.f32 %v6965, %v5315
        %v7063 = vmul.f32 %v6970, %v5318
        %v7064 = vmul.f32 %v6975, %v5320
        %v7065 = vmul.f32 %v6980, %v5323
        %v7066 = vmul.f32 %v6985, %v5325
        %v7067 = vmul.f32 %v6990, %v5328
        %v7068 = vmul.f32 %v6995, %v5330
        %v7069 = vmul.f32 %v7000, %v5333
        %v7070 = vmul.f32 %v7005, %v5335
        %v7071 = vmul.f32 %v7010, %v5338
        %v7072 = vmul.f32 %v7015, %v5340
        %v7073 = vmul.f32 %v7020, %v5343
        %v7074 = vmul.f32 %v7025, %v5345
        %v7075 = vmul.f32 %v7030, %v6261
        %v7076 = vmul.f32 %v7035, %v6263
        %v7077 = vmul.f32 %v7040, %v614
        %v7078 = vmul.f32 %v7045, %v614
        %v7079 = vadd.f32 %v6821, %v7047
        %v7080 = vadd.f32 %v6822, %v7048
        %v7081 = vadd.f32 %v6823, %v7049
        %v7082 = vadd.f32 %v6824, %v7050
        %v7083 = vadd.f32 %v6825, %v7051
        %v7084 = vadd.f32 %v6826, %v7052
        %v7085 = vadd.f32 %v6827, %v7053
        %v7086 = vadd.f32 %v6828, %v7054
        %v7087 = vadd.f32 %v6829, %v7055
        %v7088 = vadd.f32 %v6830, %v7056
        %v7089 = vadd.f32 %v6831, %v7057
        %v7090 = vadd.f32 %v6832, %v7058
        %v7091 = vadd.f32 %v6833, %v7059
        %v7092 = vadd.f32 %v6834, %v7060
        %v7093 = vadd.f32 %v6835, %v7061
        %v7094 = vadd.f32 %v6836, %v7062
        %v7095 = vadd.f32 %v6837, %v7063
        %v7096 = vadd.f32 %v6838, %v7064
        %v7097 = vadd.f32 %v6839, %v7065
        %v7098 = vadd.f32 %v6840, %v7066
        %v7099 = vadd.f32 %v6841, %v7067
        %v7100 = vadd.f32 %v6842, %v7068
        %v7101 = vadd.f32 %v6843, %v7069
        %v7102 = vadd.f32 %v6844, %v7070
        %v7103 = vadd.f32 %v6845, %v7071
        %v7104 = vadd.f32 %v6846, %v7072
        %v7105 = vadd.f32 %v6847, %v7073
        %v7106 = vadd.f32 %v6848, %v7074
        %v7107 = vadd.f32 %v6849, %v7075
        %v7108 = vadd.f32 %v6850, %v7076
        %v7109 = vadd.f32 %v6851, %v7077
        %v7110 = vadd.f32 %v6852, %v7078
        %s7111 = sld [smem:[#allocation5 + $0x8]]
        %v7112 = vstv %s7111
        %v7113 = vmul.f32 %v7112, %v3772
        %v7114 = vmul.f32 %v7112, %v3787
        %v7115 = vmul.f32 %v7112, %v3802
        %v7116 = vmul.f32 %v7112, %v3817
        %v7117 = vmul.f32 %v7112, %v3832
        %v7118 = vmul.f32 %v7112, %v3847
        %v7119 = vmul.f32 %v7112, %v3862
        %v7120 = vmul.f32 %v7112, %v3877
        %v7121 = vmul.f32 %v7112, %v3892
        %v7122 = vmul.f32 %v7112, %v3907
        %v7123 = vmul.f32 %v7112, %v3922
        %v7124 = vmul.f32 %v7112, %v3937
        %v7125 = vmul.f32 %v7112, %v3952
        %v7126 = vmul.f32 %v7112, %v3967
        %v7127 = vmul.f32 %v7112, %v3982
        %v7128 = vmul.f32 %v7112, %v3997
        %v7129 = vmul.f32 %v7112, %v4012
        %v7130 = vmul.f32 %v7112, %v4027
        %v7131 = vmul.f32 %v7112, %v4042
        %v7132 = vmul.f32 %v7112, %v4057
        %v7133 = vmul.f32 %v7112, %v4072
        %v7134 = vmul.f32 %v7112, %v4087
        %v7135 = vmul.f32 %v7112, %v4102
        %v7136 = vmul.f32 %v7112, %v4117
        %v7137 = vmul.f32 %v7112, %v4132
        %v7138 = vmul.f32 %v7112, %v4147
        %v7139 = vmul.f32 %v7112, %v4162
        %v7140 = vmul.f32 %v7112, %v4177
        %v7141 = vmul.f32 %v7112, %v4192
        %v7142 = vmul.f32 %v7112, %v4207
        %v7143 = vmul.f32 %v7112, %v4222
        %v7144 = vmul.f32 %v7112, %v4237
        %7146 = vset.pattern.permute.xlu0 8
        %7147 = vperm.xlu0 %7146, %v7113
        %v7148 = vpop.permute.xlu0 %7147
        %7151 = vset.pattern.permute.xlu0 8
        %7152 = vperm.xlu0 %7151, %v7114
        %v7153 = vpop.permute.xlu0 %7152
        %7156 = vset.pattern.permute.xlu0 8
        %7157 = vperm.xlu0 %7156, %v7115
        %v7158 = vpop.permute.xlu0 %7157
        %7161 = vset.pattern.permute.xlu0 8
        %7162 = vperm.xlu0 %7161, %v7116
        %v7163 = vpop.permute.xlu0 %7162
        %7166 = vset.pattern.permute.xlu0 8
        %7167 = vperm.xlu0 %7166, %v7117
        %v7168 = vpop.permute.xlu0 %7167
        %7171 = vset.pattern.permute.xlu0 8
        %7172 = vperm.xlu0 %7171, %v7118
        %v7173 = vpop.permute.xlu0 %7172
        %7176 = vset.pattern.permute.xlu0 8
        %7177 = vperm.xlu0 %7176, %v7119
        %v7178 = vpop.permute.xlu0 %7177
        %7181 = vset.pattern.permute.xlu0 8
        %7182 = vperm.xlu0 %7181, %v7120
        %v7183 = vpop.permute.xlu0 %7182
        %7186 = vset.pattern.permute.xlu0 8
        %7187 = vperm.xlu0 %7186, %v7121
        %v7188 = vpop.permute.xlu0 %7187
        %7191 = vset.pattern.permute.xlu0 8
        %7192 = vperm.xlu0 %7191, %v7122
        %v7193 = vpop.permute.xlu0 %7192
        %7196 = vset.pattern.permute.xlu0 8
        %7197 = vperm.xlu0 %7196, %v7123
        %v7198 = vpop.permute.xlu0 %7197
        %7201 = vset.pattern.permute.xlu0 8
        %7202 = vperm.xlu0 %7201, %v7124
        %v7203 = vpop.permute.xlu0 %7202
        %7206 = vset.pattern.permute.xlu0 8
        %7207 = vperm.xlu0 %7206, %v7125
        %v7208 = vpop.permute.xlu0 %7207
        %7211 = vset.pattern.permute.xlu0 8
        %7212 = vperm.xlu0 %7211, %v7126
        %v7213 = vpop.permute.xlu0 %7212
        %7216 = vset.pattern.permute.xlu0 8
        %7217 = vperm.xlu0 %7216, %v7127
        %v7218 = vpop.permute.xlu0 %7217
        %7221 = vset.pattern.permute.xlu0 8
        %7222 = vperm.xlu0 %7221, %v7128
        %v7223 = vpop.permute.xlu0 %7222
        %7226 = vset.pattern.permute.xlu0 8
        %7227 = vperm.xlu0 %7226, %v7129
        %v7228 = vpop.permute.xlu0 %7227
        %7231 = vset.pattern.permute.xlu0 8
        %7232 = vperm.xlu0 %7231, %v7130
        %v7233 = vpop.permute.xlu0 %7232
        %7236 = vset.pattern.permute.xlu0 8
        %7237 = vperm.xlu0 %7236, %v7131
        %v7238 = vpop.permute.xlu0 %7237
        %7241 = vset.pattern.permute.xlu0 8
        %7242 = vperm.xlu0 %7241, %v7132
        %v7243 = vpop.permute.xlu0 %7242
        %7246 = vset.pattern.permute.xlu0 8
        %7247 = vperm.xlu0 %7246, %v7133
        %v7248 = vpop.permute.xlu0 %7247
        %7251 = vset.pattern.permute.xlu0 8
        %7252 = vperm.xlu0 %7251, %v7134
        %v7253 = vpop.permute.xlu0 %7252
        %7256 = vset.pattern.permute.xlu0 8
        %7257 = vperm.xlu0 %7256, %v7135
        %v7258 = vpop.permute.xlu0 %7257
        %7261 = vset.pattern.permute.xlu0 8
        %7262 = vperm.xlu0 %7261, %v7136
        %v7263 = vpop.permute.xlu0 %7262
        %7266 = vset.pattern.permute.xlu0 8
        %7267 = vperm.xlu0 %7266, %v7137
        %v7268 = vpop.permute.xlu0 %7267
        %7271 = vset.pattern.permute.xlu0 8
        %7272 = vperm.xlu0 %7271, %v7138
        %v7273 = vpop.permute.xlu0 %7272
        %7276 = vset.pattern.permute.xlu0 8
        %7277 = vperm.xlu0 %7276, %v7139
        %v7278 = vpop.permute.xlu0 %7277
        %7281 = vset.pattern.permute.xlu0 8
        %7282 = vperm.xlu0 %7281, %v7140
        %v7283 = vpop.permute.xlu0 %7282
        %7286 = vset.pattern.permute.xlu0 8
        %7287 = vperm.xlu0 %7286, %v7141
        %v7288 = vpop.permute.xlu0 %7287
        %7291 = vset.pattern.permute.xlu0 8
        %7292 = vperm.xlu0 %7291, %v7142
        %v7293 = vpop.permute.xlu0 %7292
        %7296 = vset.pattern.permute.xlu0 8
        %7297 = vperm.xlu0 %7296, %v7143
        %v7298 = vpop.permute.xlu0 %7297
        %7301 = vset.pattern.permute.xlu0 8
        %7302 = vperm.xlu0 %7301, %v7144
        %v7303 = vpop.permute.xlu0 %7302
        %v7305 = vmul.f32 %v7148, %v5642
        %v7306 = vmul.f32 %v7153, %v5644
        %v7307 = vmul.f32 %v7158, %v5647
        %v7308 = vmul.f32 %v7163, %v5649
        %v7309 = vmul.f32 %v7168, %v5652
        %v7310 = vmul.f32 %v7173, %v5654
        %v7311 = vmul.f32 %v7178, %v5657
        %v7312 = vmul.f32 %v7183, %v5659
        %v7313 = vmul.f32 %v7188, %v5662
        %v7314 = vmul.f32 %v7193, %v5664
        %v7315 = vmul.f32 %v7198, %v5667
        %v7316 = vmul.f32 %v7203, %v5669
        %v7317 = vmul.f32 %v7208, %v5672
        %v7318 = vmul.f32 %v7213, %v5674
        %v7319 = vmul.f32 %v7218, %v5677
        %v7320 = vmul.f32 %v7223, %v5679
        %v7321 = vmul.f32 %v7228, %v5682
        %v7322 = vmul.f32 %v7233, %v5684
        %v7323 = vmul.f32 %v7238, %v5687
        %v7324 = vmul.f32 %v7243, %v5689
        %v7325 = vmul.f32 %v7248, %v5692
        %v7326 = vmul.f32 %v7253, %v5694
        %v7327 = vmul.f32 %v7258, %v5697
        %v7328 = vmul.f32 %v7263, %v5699
        %v7329 = vmul.f32 %v7268, %v5702
        %v7330 = vmul.f32 %v7273, %v5704
        %v7331 = vmul.f32 %v7278, %v5707
        %v7332 = vmul.f32 %v7283, %v5709
        %v7333 = vmul.f32 %v7288, %v6526
        %v7334 = vmul.f32 %v7293, %v6528
        %v7335 = vmul.f32 %v7298, %v692
        %v7336 = vmul.f32 %v7303, %v692
        %v7337 = vadd.f32 %v7079, %v7305
        %v7338 = vadd.f32 %v7080, %v7306
        %v7339 = vadd.f32 %v7081, %v7307
        %v7340 = vadd.f32 %v7082, %v7308
        %v7341 = vadd.f32 %v7083, %v7309
        %v7342 = vadd.f32 %v7084, %v7310
        %v7343 = vadd.f32 %v7085, %v7311
        %v7344 = vadd.f32 %v7086, %v7312
        %v7345 = vadd.f32 %v7087, %v7313
        %v7346 = vadd.f32 %v7088, %v7314
        %v7347 = vadd.f32 %v7089, %v7315
        %v7348 = vadd.f32 %v7090, %v7316
        %v7349 = vadd.f32 %v7091, %v7317
        %v7350 = vadd.f32 %v7092, %v7318
        %v7351 = vadd.f32 %v7093, %v7319
        %v7352 = vadd.f32 %v7094, %v7320
        %v7353 = vadd.f32 %v7095, %v7321
        %v7354 = vadd.f32 %v7096, %v7322
        %v7355 = vadd.f32 %v7097, %v7323
        %v7356 = vadd.f32 %v7098, %v7324
        %v7357 = vadd.f32 %v7099, %v7325
        %v7358 = vadd.f32 %v7100, %v7326
        %v7359 = vadd.f32 %v7101, %v7327
        %v7360 = vadd.f32 %v7102, %v7328
        %v7361 = vadd.f32 %v7103, %v7329
        %v7362 = vadd.f32 %v7104, %v7330
        %v7363 = vadd.f32 %v7105, %v7331
        %v7364 = vadd.f32 %v7106, %v7332
        %v7365 = vadd.f32 %v7107, %v7333
        %v7366 = vadd.f32 %v7108, %v7334
        %v7367 = vadd.f32 %v7109, %v7335
        %v7368 = vadd.f32 %v7110, %v7336
        %v7369 = vld [vmem:[%s6] sm:$0x1]
        %v7371 = vperm.slane %v7369, 0
        %v7373 = vmul.f32 %v7337, %v7371
        %v7374 = vmul.f32 %v7338, %v7371
        %v7375 = vmul.f32 %v7339, %v7371
        %v7376 = vmul.f32 %v7340, %v7371
        %v7377 = vmul.f32 %v7341, %v7371
        %v7378 = vmul.f32 %v7342, %v7371
        %v7379 = vmul.f32 %v7343, %v7371
        %v7380 = vmul.f32 %v7344, %v7371
        %v7381 = vmul.f32 %v7345, %v7371
        %v7382 = vmul.f32 %v7346, %v7371
        %v7383 = vmul.f32 %v7347, %v7371
        %v7384 = vmul.f32 %v7348, %v7371
        %v7385 = vmul.f32 %v7349, %v7371
        %v7386 = vmul.f32 %v7350, %v7371
        %v7387 = vmul.f32 %v7351, %v7371
        %v7388 = vmul.f32 %v7352, %v7371
        %v7389 = vmul.f32 %v7353, %v7371
        %v7390 = vmul.f32 %v7354, %v7371
        %v7391 = vmul.f32 %v7355, %v7371
        %v7392 = vmul.f32 %v7356, %v7371
        %v7393 = vmul.f32 %v7357, %v7371
        %v7394 = vmul.f32 %v7358, %v7371
        %v7395 = vmul.f32 %v7359, %v7371
        %v7396 = vmul.f32 %v7360, %v7371
        %v7397 = vmul.f32 %v7361, %v7371
        %v7398 = vmul.f32 %v7362, %v7371
        %v7399 = vmul.f32 %v7363, %v7371
        %v7400 = vmul.f32 %v7364, %v7371
        %v7401 = vmul.f32 %v7365, %v7371
        %v7402 = vmul.f32 %v7366, %v7371
        %v7403 = vmul.f32 %v7367, %v7371
        %v7404 = vmul.f32 %v7368, %v7371
        %v7405 = vld [vmem:[%s7] sm:$0x1]
        %v7407 = vperm.slane %v7405, 0
        %v7409 = vadd.f32 %v7373, %v7407
        %v7410 = vadd.f32 %v7374, %v7407
        %v7411 = vadd.f32 %v7375, %v7407
        %v7412 = vadd.f32 %v7376, %v7407
        %v7413 = vadd.f32 %v7377, %v7407
        %v7414 = vadd.f32 %v7378, %v7407
        %v7415 = vadd.f32 %v7379, %v7407
        %v7416 = vadd.f32 %v7380, %v7407
        %v7417 = vadd.f32 %v7381, %v7407
        %v7418 = vadd.f32 %v7382, %v7407
        %v7419 = vadd.f32 %v7383, %v7407
        %v7420 = vadd.f32 %v7384, %v7407
        %v7421 = vadd.f32 %v7385, %v7407
        %v7422 = vadd.f32 %v7386, %v7407
        %v7423 = vadd.f32 %v7387, %v7407
        %v7424 = vadd.f32 %v7388, %v7407
        %v7425 = vadd.f32 %v7389, %v7407
        %v7426 = vadd.f32 %v7390, %v7407
        %v7427 = vadd.f32 %v7391, %v7407
        %v7428 = vadd.f32 %v7392, %v7407
        %v7429 = vadd.f32 %v7393, %v7407
        %v7430 = vadd.f32 %v7394, %v7407
        %v7431 = vadd.f32 %v7395, %v7407
        %v7432 = vadd.f32 %v7396, %v7407
        %v7433 = vadd.f32 %v7397, %v7407
        %v7434 = vadd.f32 %v7398, %v7407
        %v7435 = vadd.f32 %v7399, %v7407
        %v7436 = vadd.f32 %v7400, %v7407
        %v7437 = vadd.f32 %v7401, %v7407
        %v7438 = vadd.f32 %v7402, %v7407
        %v7439 = vadd.f32 %v7403, %v7407
        %v7440 = vadd.f32 %v7404, %v7407
        %v7441 = vmax.f32 %v7409, 0.0
        %v7442 = vmax.f32 %v7410, 0.0
        %v7443 = vmax.f32 %v7411, 0.0
        %v7444 = vmax.f32 %v7412, 0.0
        %v7445 = vmax.f32 %v7413, 0.0
        %v7446 = vmax.f32 %v7414, 0.0
        %v7447 = vmax.f32 %v7415, 0.0
        %v7448 = vmax.f32 %v7416, 0.0
        %v7449 = vmax.f32 %v7417, 0.0
        %v7450 = vmax.f32 %v7418, 0.0
        %v7451 = vmax.f32 %v7419, 0.0
        %v7452 = vmax.f32 %v7420, 0.0
        %v7453 = vmax.f32 %v7421, 0.0
        %v7454 = vmax.f32 %v7422, 0.0
        %v7455 = vmax.f32 %v7423, 0.0
        %v7456 = vmax.f32 %v7424, 0.0
        %v7457 = vmax.f32 %v7425, 0.0
        %v7458 = vmax.f32 %v7426, 0.0
        %v7459 = vmax.f32 %v7427, 0.0
        %v7460 = vmax.f32 %v7428, 0.0
        %v7461 = vmax.f32 %v7429, 0.0
        %v7462 = vmax.f32 %v7430, 0.0
        %v7463 = vmax.f32 %v7431, 0.0
        %v7464 = vmax.f32 %v7432, 0.0
        %v7465 = vmax.f32 %v7433, 0.0
        %v7466 = vmax.f32 %v7434, 0.0
        %v7467 = vmax.f32 %v7435, 0.0
        %v7468 = vmax.f32 %v7436, 0.0
        %v7469 = vmax.f32 %v7437, 0.0
        %v7470 = vmax.f32 %v7438, 0.0
        %v7471 = vmax.f32 %v7439, 0.0
        %v7472 = vmax.f32 %v7440, 0.0
        %7473 = vst.msk [vmem:[%s388] sm:$0xff] %vm3243, %v7441
        %7474 = vst.msk [vmem:[%s388 + $0x8] sm:$0xff] %vm3243, %v7442
        %7475 = vst.msk [vmem:[%s388 + $0x10] sm:$0xff] %vm3243, %v7443
        %7476 = vst.msk [vmem:[%s388 + $0x18] sm:$0xff] %vm3243, %v7444
        %7477 = vst.msk [vmem:[%s388 + $0x20] sm:$0xff] %vm3243, %v7445
        %7478 = vst.msk [vmem:[%s388 + $0x28] sm:$0xff] %vm3243, %v7446
        %7479 = vst.msk [vmem:[%s388 + $0x30] sm:$0xff] %vm3243, %v7447
        %7480 = vst.msk [vmem:[%s388 + $0x38] sm:$0xff] %vm3243, %v7448
        %7481 = vst.msk [vmem:[%s388 + $0x40] sm:$0xff] %vm3243, %v7449
        %7482 = vst.msk [vmem:[%s388 + $0x48] sm:$0xff] %vm3243, %v7450
        %7483 = vst.msk [vmem:[%s388 + $0x50] sm:$0xff] %vm3243, %v7451
        %7484 = vst.msk [vmem:[%s388 + $0x58] sm:$0xff] %vm3243, %v7452
        %7485 = vst.msk [vmem:[%s388 + $0x60] sm:$0xff] %vm3243, %v7453
        %7486 = vst.msk [vmem:[%s388 + $0x68] sm:$0xff] %vm3243, %v7454
        %7487 = vst.msk [vmem:[%s388 + $0x70] sm:$0xff] %vm3243, %v7455
        %7488 = vst.msk [vmem:[%s388 + $0x78] sm:$0xff] %vm3243, %v7456
        %7489 = vst.msk [vmem:[%s388 + $0x80] sm:$0xff] %vm3243, %v7457
        %7490 = vst.msk [vmem:[%s388 + $0x88] sm:$0xff] %vm3243, %v7458
        %7491 = vst.msk [vmem:[%s388 + $0x90] sm:$0xff] %vm3243, %v7459
        %7492 = vst.msk [vmem:[%s388 + $0x98] sm:$0xff] %vm3243, %v7460
        %7493 = vst.msk [vmem:[%s388 + $0xa0] sm:$0xff] %vm3243, %v7461
        %7494 = vst.msk [vmem:[%s388 + $0xa8] sm:$0xff] %vm3243, %v7462
        %7495 = vst.msk [vmem:[%s388 + $0xb0] sm:$0xff] %vm3243, %v7463
        %7496 = vst.msk [vmem:[%s388 + $0xb8] sm:$0xff] %vm3243, %v7464
        %7497 = vst.msk [vmem:[%s388 + $0xc0] sm:$0xff] %vm3243, %v7465
        %7498 = vst.msk [vmem:[%s388 + $0xc8] sm:$0xff] %vm3243, %v7466
        %7499 = vst.msk [vmem:[%s388 + $0xd0] sm:$0xff] %vm3243, %v7467
        %7500 = vst.msk [vmem:[%s388 + $0xd8] sm:$0xff] %vm3243, %v7468
        %7501 = vst.msk [vmem:[%s388 + $0xe0] sm:$0xff] %vm3243, %v7469
        %7502 = vst.msk [vmem:[%s388 + $0xe8] sm:$0xff] %vm3243, %v7470
        %7503 = vst.msk [vmem:[%s388 + $0xf0] sm:$0xff] %vm3243, %v7471
        %7504 = vst.msk [vmem:[%s388 + $0xf8] sm:$0xff] %vm3243, %v7472
        %p7505 = scmp.lt.s32.totalorder %s24, 1
        %s7506 = scalar_select %p7505, %s24, 1
        %s7507 = smul.addr %s7506, 32
        %s7508 = smul.addr %s7507, 8
        %s7509 = scalar_lea.vmem %s9, %s7508
        // Predicated region
        $region65: #{local_up_forward.1} parent=55 // pred_check
          %p7510 = pneg %p241
        $region66: #{local_up_forward.1} parent=55 // pred_check_branch
          %7512 = sbr.rel (%p7510) target = $region68
        $region67: #{local_up_forward.1} parent=55 // pred_region
          _
        $region68: #{local_up_forward.1} parent=55 // pred_fallthru
          _
      $region56: #{local_up_forward.1} parent=5 // pred_fallthru
        _
      %p7513 = scmp.le.s32.totalorder 2, %s19
      // Predicated region
      $region69: #{local_up_forward.1} parent=5 // pred_check
        %p7514 = pneg %p7513
      $region70: #{local_up_forward.1} parent=5 // pred_check_branch
        %7516 = sbr.rel (%p7514) target = $region72
      $region71: #{local_up_forward.1} parent=5 // pred_region
        %s7517 = ssub.s32 %s19, 2
        // Predicated region
        $region73: #{local_up_forward.1} parent=71 // pred_check
          %p7518 = pneg %p247
        $region74: #{local_up_forward.1} parent=71 // pred_check_branch
          %7520 = sbr.rel (%p7518) target = $region76
        $region75: #{local_up_forward.1} parent=71 // pred_region
          %p7521 = scmp.lt.s32.totalorder %s25, 1
          %s7522 = scalar_select %p7521, %s25, 1
          %s7523 = smul.addr %s7522, 32
          %s7524 = smul.addr %s7523, 8
          %s7525 = scalar_lea.vmem %s9, %s7524
        $region76: #{local_up_forward.1} parent=71 // pred_fallthru
          _
      $region72: #{local_up_forward.1} parent=5 // pred_fallthru
        _
    $region6: #{local_up_forward.1} parent=1 // loop_footer
      %s23 = sadd.s32 1, %s19
    $region7: #{local_up_forward.1} parent=1 // loop_footer_branch
      %18 = sbr.rel target = $region3
    $region8: #{local_up_forward.1} parent=1 // loop_exit
      _
    %7526 = vsyncpa [#allocation3], 1
    %s7527 = scalar_lea.sflag [#allocation3], 1
    %7528 = vsyncpa %s7527, 1
    %7529 = vsyncpa [#allocation4], 1
    %s7530 = scalar_lea.sflag [#allocation4], 1
    %7531 = vsyncpa %s7530, 1

</llo_original>
